<compile_context>
chip_gen: v6e
topology: v6e:2x2x1
jax: 0.10.0
libtpu: 0.0.40
codegen_flags: <defaults>
</compile_context>

<pallas_src>
import math
from functools import partial

import numpy as np
import jax
import jax.numpy as jnp
from jax import lax
from jax.experimental import pallas as pl
from jax.experimental.pallas import tpu as pltpu


def _round_up(x, m):
    return ((x + m - 1) // m) * m


def _pad_to(a, shape):
    pads = [(0, s - d) for d, s in zip(a.shape, shape)]
    return jnp.pad(a, pads)


def _vmem_capacity_bytes():
    try:
        return int(pltpu.get_tpu_info().vmem_capacity_bytes)
    except Exception:
        return 64 * 1024 * 1024          # conservative: v7x per-TC capacity


def _pick_edge_tile(E, Np, L, Cp, vmem_cap):
    """Largest edge tile such that the resident node-state blocks plus the
    double-buffered (te, Np) bf16 Bw/S streams fit the generation's VMEM."""
    budget = int(vmem_cap * 0.8)
    nc_f32 = L * Np * Cp * 4
    resident = (
        2 * nc_f32                        # Z input block (double-buffered)
        + 2 * nc_f32                      # Z_new output block (double-buffered)
        + nc_f32                          # d_acc scratch (f32)
        + nc_f32 // 2                     # dz scratch (bf16)
        + 4 * Np * Cp * 4                 # f and X blocks (double-buffered)
        + Np * 2 * Cp * 2                 # [Z|f] staging scratch (bf16)
        + 2 * L * 2 * Cp * Cp * 2         # Kf pack   (bf16, double-buffered)
        + 2 * L * 2 * Cp * Cp * 2         # [K, K^T]  (bf16, double-buffered)
    )
    avail = budget - resident - (4 << 20)  # headroom for Mosaic internal scratch
    per_edge_row = 2 * 2 * Np * 2          # Bw + S, 2 buffers each, bf16
    te = avail // per_edge_row if avail > 0 else 16
    te = int(min(te, _round_up(E, 16), 8192))
    te = max(16, (te // 16) * 16)          # bf16 sublane packing
    return te


# ----------------------------------------------------------------------------
# Fused kernel: getNoNlinRHS (all layers) + triDiagSolve
# grid = (n_edge_tiles,)  ("arbitrary": edge accumulation is sequential)
# ----------------------------------------------------------------------------
def _rhs_tridiag_kernel(z_ref, f_ref, x_ref, kf_ref, kkt_ref, bw_ref, s_ref,
                        zout_ref, dz_s, d_acc, zf_s):
    e = pl.program_id(0)
    last_e = pl.num_programs(0) - 1
    L, _, Cp = z_ref.shape

    # ---- node stage (layer-only work), hoisted to the first edge step ------
    @pl.when(e == 0)
    def _():
        d_acc[...] = jnp.zeros_like(d_acc)
        zf_s[:, Cp:] = f_ref[...].astype(jnp.bfloat16)       # f half, once
        for i in range(L):
            zf_s[:, :Cp] = z_ref[i].astype(jnp.bfloat16)
            # silu(cat([Z, f], -1) @ Kf) as ONE full-width 2*Cp contraction
            h = jax.nn.silu(jnp.dot(zf_s[...], kf_ref[i],
                                    preferred_element_type=jnp.float32))
            dz = jnp.dot(h.astype(jnp.bfloat16), kkt_ref[i, 0],
                         preferred_element_type=jnp.float32)
            dz_s[i] = dz.astype(jnp.bfloat16)                 # cached per layer

    # ---- edge stage: nodeGrad + silu + edgeDiv for one (te, Np) edge tile ---
    for i in range(L):
        g = jax.nn.silu(jnp.dot(bw_ref[...], dz_s[i],
                                preferred_element_type=jnp.float32))
        # edgeDiv scatter-add over source node == S^T @ G (contract edges)
        d_acc[i] += lax.dot_general(
            s_ref[...], g.astype(jnp.bfloat16), (((0,), (0,)), ((), ())),
            preferred_element_type=jnp.float32)

    # ---- epilogue: Y = -D @ K^T (+X on last layer) + fused triDiagSolve -----
    @pl.when(e == last_e)
    def _():
        # forward sweep written straight into the output block
        for i in range(L):
            y = -jnp.dot(d_acc[i].astype(jnp.bfloat16), kkt_ref[i, 1],
                         preferred_element_type=jnp.float32)
            if i == L - 1:
                y = y + x_ref[...]
            if i == 0:
                zout_ref[0] = math.sqrt(0.5) * y
            else:
                a = math.sqrt((i + 1) / (i + 2))
                b = math.sqrt(i / (i + 1))
                zout_ref[i] = a * (b * zout_ref[i - 1] + y)
        # backward sweep in place (read before overwrite along the layer axis)
        a = math.sqrt(L / (L + 1))
        zout_ref[L - 1] = a * zout_ref[L - 1]
        for i in reversed(range(L - 1)):
            a = math.sqrt((i + 1) / (i + 2))
            zout_ref[i] = a * (a * zout_ref[i + 1] + zout_ref[i])


def _rhs_tridiag_call(Z, f, X, Kf, KKt, Bw, S, te, vmem_limit):
    L, Np, Cp = Z.shape
    Ep = Bw.shape[0]
    return pl.pallas_call(
        _rhs_tridiag_kernel,
        out_shape=jax.ShapeDtypeStruct((L, Np, Cp), Z.dtype),
        grid=(Ep // te,),
        in_specs=[
            pl.BlockSpec((L, Np, Cp), lambda e: (0, 0, 0)),        # Z (resident)
            pl.BlockSpec((Np, Cp), lambda e: (0, 0)),              # f
            pl.BlockSpec((Np, Cp), lambda e: (0, 0)),              # X
            pl.BlockSpec((L, 2 * Cp, Cp), lambda e: (0, 0, 0)),    # Kf pack
            pl.BlockSpec((L, 2, Cp, Cp), lambda e: (0, 0, 0, 0)),  # [K, K^T]
            pl.BlockSpec((te, Np), lambda e: (e, 0)),              # Bw tile
            pl.BlockSpec((te, Np), lambda e: (e, 0)),              # S  tile
        ],
        out_specs=pl.BlockSpec((L, Np, Cp), lambda e: (0, 0, 0)),
        scratch_shapes=[
            pltpu.VMEM((L, Np, Cp), jnp.bfloat16),   # cached dZ per layer
            pltpu.VMEM((L, Np, Cp), jnp.float32),    # edgeDiv accumulator
            pltpu.VMEM((Np, 2 * Cp), jnp.bfloat16),  # [Z | f] staging buffer
        ],
        input_output_aliases={0: 0},
        compiler_params=pltpu.CompilerParams(
            dimension_semantics=("arbitrary",),
            vmem_limit_bytes=vmem_limit),
    )(Z, f, X, Kf, KKt, Bw, S)


# ----------------------------------------------------------------------------
# Forward wrapper (layout plumbing: padding, weight packing, fixpoint loop)
# ----------------------------------------------------------------------------
@partial(jax.jit, static_argnums=(6,))
def graph_least_action_net_forward(X, f, edge_index, edge_weight,
                                   K, K_features, nfixPointIter):
    L, C, _ = K.shape
    N = X.shape[0]
    E = edge_index.shape[1]

    Cp = _round_up(max(C, 128), 128)      # lane-dense channel dim
    Np = _round_up(N, 16)                 # bf16 sublane-aligned node dim

    X_p = _pad_to(X.astype(jnp.float32), (Np, Cp))
    f_p = _pad_to(f.astype(jnp.float32), (Np, Cp))

    # Weight packs (bf16): Kf rows aligned with the [Z | f] staging layout,
    # and [K, K^T] pre-transposed so the epilogue needs no in-kernel transpose.
    Kfz = _pad_to(K_features[:, :C, :].astype(jnp.float32), (L, Cp, Cp))
    Kff = _pad_to(K_features[:, C:, :].astype(jnp.float32), (L, Cp, Cp))
    Kf_p = jnp.concatenate([Kfz, Kff], axis=1).astype(jnp.bfloat16)  # (L,2Cp,Cp)
    K_p = _pad_to(K.astype(jnp.float32), (L, Cp, Cp))
    KKt = jnp.stack([K_p, jnp.swapaxes(K_p, 1, 2)],
                    axis=1).astype(jnp.bfloat16)                     # (L,2,Cp,Cp)

    # Incidence algebra fused with edge weights: Bw = w * (S - T)
    src = edge_index[0]
    dst = edge_index[1]
    S = jax.nn.one_hot(src, Np, dtype=jnp.float32)                   # (E, Np)
    T = jax.nn.one_hot(dst, Np, dtype=jnp.float32)
    Bw = edge_weight.astype(jnp.float32)[:, None] * (S - T)

    vmem_cap = _vmem_capacity_bytes()
    te = _pick_edge_tile(E, Np, L, Cp, vmem_cap)
    Ep = _round_up(E, te)
    S_b = _pad_to(S, (Ep, Np)).astype(jnp.bfloat16)                  # exact 0/1
    Bw_b = _pad_to(Bw, (Ep, Np)).astype(jnp.bfloat16)
    vmem_limit = min(int(vmem_cap * 0.9), 100 * 1024 * 1024)

    Z = jnp.zeros((L, Np, Cp), jnp.float32)
    for _ in range(nfixPointIter):
        Z = _rhs_tridiag_call(Z, f_p, X_p, Kf_p, KKt, Bw_b, S_b, te, vmem_limit)

    Zc = Z[:, :N, :C]
    return Zc[-1], Zc


# ----------------------------------------------------------------------------
# Pure-JAX reference (PyTorch gather/scatter semantics, mirroring the bf16
# operand rounding that the kernel applies at every MXU matmul input)
# ----------------------------------------------------------------------------
def _reference_forward(X, f, edge_index, edge_weight, K, K_features,
                       nfixPointIter):
    L, C, _ = K.shape
    N = X.shape[0]
    src = edge_index[0]
    dst = edge_index[1]

    def bf(a):
        return a.astype(jnp.bfloat16).astype(jnp.float32)

    w_b = bf(edge_weight.astype(jnp.float32))
    K_b = bf(K.astype(jnp.float32))
    Kf_b = bf(K_features.astype(jnp.float32))

    def layer(Zi, Ki, Kfi):
        Zc = bf(jnp.concatenate([Zi, f.astype(jnp.float32)], axis=-1))
        H = jax.nn.silu(Zc @ Kfi)
        dZ = bf(bf(H) @ Ki)
        G = bf(jax.nn.silu(w_b[:, None] * (dZ[src] - dZ[dst])))
        D = jnp.zeros((N, C), jnp.float32).at[src].add(G)
        return bf(D) @ Ki.T

    Z = jnp.zeros((L, N, C), jnp.float32)
    for _ in range(nfixPointIter):
        Y = jnp.stack([-layer(Z[i], K_b[i], Kf_b[i]) for i in range(L)])
        Y = Y.at[L - 1].add(X.astype(jnp.float32))
        Ylist = [None] * L
        Ylist[0] = math.sqrt(0.5) * Y[0]
        for i in range(1, L):
            a = math.sqrt((i + 1) / (i + 2))
            b = math.sqrt(i / (i + 1))
            Ylist[i] = a * (b * Ylist[i - 1] + Y[i])
        W = [None] * L
        a = math.sqrt(L / (L + 1))
        W[L - 1] = a * Ylist[L - 1]
        for i in reversed(range(L - 1)):
            a = math.sqrt((i + 1) / (i + 2))
            W[i] = a * (a * W[i + 1] + Ylist[i])
        Z = jnp.stack(W)
    return Z[-1], Z


# ----------------------------------------------------------------------------
if __name__ == "__main__":
    nlayers, nchannels, nfixPointIter, imsize = 4, 4, 2, 16  # imsize unused
    nnodes = 16

    key = jax.random.PRNGKey(0)
    kK, kKf, kX, kf, kw = jax.random.split(key, 5)

    def xavier_uniform(k, shape):
        recept = int(np.prod(shape[2:])) if len(shape) > 2 else 1
        fan_in = shape[1] * recept
        fan_out = shape[0] * recept
        bound = math.sqrt(6.0 / (fan_in + fan_out))
        return jax.random.uniform(k, shape, jnp.float32, -bound, bound)

    K = xavier_uniform(kK, (nlayers, nchannels, nchannels))
    K_features = xavier_uniform(kKf, (nlayers, 2 * nchannels, nchannels))

    X = jax.random.normal(kX, (nnodes, nchannels), jnp.float32)
    f = jax.random.normal(kf, (nnodes, nchannels), jnp.float32)

    # deterministic bidirectional ring graph: 2*nnodes edges
    idx = np.arange(nnodes)
    src = np.concatenate([idx, (idx + 1) % nnodes])
    dst = np.concatenate([(idx + 1) % nnodes, idx])
    edge_index = jnp.asarray(np.stack([src, dst]), dtype=jnp.int32)
    edge_weight = jax.random.uniform(kw, (2 * nnodes,), jnp.float32, 0.5, 1.5)

    out_last, out_Z = graph_least_action_net_forward(
        X, f, edge_index, edge_weight, K, K_features, nfixPointIter)
    out_last, out_Z = jax.block_until_ready((out_last, out_Z))

    ref_last, ref_Z = _reference_forward(
        X, f, edge_index, edge_weight, K, K_features, nfixPointIter)

    # Tolerance covers bf16 MXU operands with f32 accumulation.
    assert np.allclose(np.asarray(out_Z), np.asarray(ref_Z),
                       rtol=2e-2, atol=2e-2)
    assert np.allclose(np.asarray(out_last), np.asarray(ref_last),
                       rtol=2e-2, atol=2e-2)
    print("KERNEL_OK")
</pallas_src>

<mosaic_0001>
module attributes {stable_mosaic.version = 11 : i64} {
  func.func @_rhs_tridiag_kernel(%arg0: i32, %arg1: memref<4x16x128xf32, #tpu.memory_space<vmem>>, %arg2: memref<16x128xf32, #tpu.memory_space<vmem>>, %arg3: memref<16x128xf32, #tpu.memory_space<vmem>>, %arg4: memref<4x256x128xbf16, #tpu.memory_space<vmem>>, %arg5: memref<4x2x128x128xbf16, #tpu.memory_space<vmem>>, %arg6: memref<32x16xbf16, #tpu.memory_space<vmem>>, %arg7: memref<32x16xbf16, #tpu.memory_space<vmem>>, %arg8: memref<4x16x128xf32, #tpu.memory_space<vmem>>, %arg9: memref<4x16x128xbf16, #tpu.memory_space<vmem>>, %arg10: memref<4x16x128xf32, #tpu.memory_space<vmem>>, %arg11: memref<16x256xbf16, #tpu.memory_space<vmem>>) attributes {dimension_semantics = [#tpu.dimension_semantics<arbitrary>], iteration_bounds = array<i64: 1>, scalar_prefetch = 0 : i64, scratch_operands = 3 : i64, tpu.core_type = #tpu.core_type<tc>, window_params = [{pipeline_mode = #tpu.pipeline_mode<synchronous>, transform_indices = @transform_0, window_bounds = array<i64: 4, 16, 128>}, {pipeline_mode = #tpu.pipeline_mode<synchronous>, transform_indices = @transform_1, window_bounds = array<i64: 16, 128>}, {pipeline_mode = #tpu.pipeline_mode<synchronous>, transform_indices = @transform_2, window_bounds = array<i64: 16, 128>}, {pipeline_mode = #tpu.pipeline_mode<synchronous>, transform_indices = @transform_3, window_bounds = array<i64: 4, 256, 128>}, {pipeline_mode = #tpu.pipeline_mode<synchronous>, transform_indices = @transform_4, window_bounds = array<i64: 4, 2, 128, 128>}, {transform_indices = @transform_5, window_bounds = array<i64: 32, 16>}, {transform_indices = @transform_6, window_bounds = array<i64: 32, 16>}, {pipeline_mode = #tpu.pipeline_mode<synchronous>, transform_indices = @transform_7, window_bounds = array<i64: 4, 16, 128>}]} {
    %c0_i32 = arith.constant 0 : i32
    %0 = arith.cmpi eq, %arg0, %c0_i32 : i32
    %1 = arith.extui %0 : i1 to i32
    %c0_i32_0 = arith.constant 0 : i32
    %2 = arith.cmpi ne, %1, %c0_i32_0 : i32
    scf.if %2 {
      %cst_62 = arith.constant 0.000000e+00 : f32
      %82 = vector.broadcast %cst_62 : f32 to vector<4x16x128xf32>
      %c0_63 = arith.constant 0 : index
      %c0_64 = arith.constant 0 : index
      %c0_65 = arith.constant 0 : index
      %83 = vector.load %arg10[%c0_63, %c0_64, %c0_65] : memref<4x16x128xf32, #tpu.memory_space<vmem>>, vector<4x16x128xf32>
      tpu.vector_store %arg10[%c0_63, %c0_64, %c0_65], %82 {strides = array<i32>} : memref<4x16x128xf32, #tpu.memory_space<vmem>>, vector<4x16x128xf32>,
      %c0_66 = arith.constant 0 : index
      %c0_67 = arith.constant 0 : index
      %84 = vector.load %arg2[%c0_66, %c0_67] : memref<16x128xf32, #tpu.memory_space<vmem>>, vector<16x128xf32>
      %85 = arith.truncf %84 : vector<16x128xf32> to vector<16x128xbf16>
      %c0_68 = arith.constant 0 : index
      %c128 = arith.constant 128 : index
      %86 = vector.load %arg11[%c0_68, %c128] : memref<16x256xbf16, #tpu.memory_space<vmem>>, vector<16x128xbf16>
      tpu.vector_store %arg11[%c0_68, %c128], %85 {strides = array<i32>} : memref<16x256xbf16, #tpu.memory_space<vmem>>, vector<16x128xbf16>,
      %c0_69 = arith.constant 0 : index
      %c0_70 = arith.constant 0 : index
      %c0_71 = arith.constant 0 : index
      %87 = vector.load %arg1[%c0_69, %c0_70, %c0_71] : memref<4x16x128xf32, #tpu.memory_space<vmem>>, vector<1x16x128xf32>
      %88 = vector.shape_cast %87 : vector<1x16x128xf32> to vector<16x128xf32>
      %89 = arith.truncf %88 : vector<16x128xf32> to vector<16x128xbf16>
      %c0_72 = arith.constant 0 : index
      %c0_73 = arith.constant 0 : index
      %90 = vector.load %arg11[%c0_72, %c0_73] : memref<16x256xbf16, #tpu.memory_space<vmem>>, vector<16x128xbf16>
      tpu.vector_store %arg11[%c0_72, %c0_73], %89 {strides = array<i32>} : memref<16x256xbf16, #tpu.memory_space<vmem>>, vector<16x128xbf16>,
      %c0_74 = arith.constant 0 : index
      %c0_75 = arith.constant 0 : index
      %91 = vector.load %arg11[%c0_74, %c0_75] : memref<16x256xbf16, #tpu.memory_space<vmem>>, vector<16x256xbf16>
      %c0_76 = arith.constant 0 : index
      %c0_77 = arith.constant 0 : index
      %c0_78 = arith.constant 0 : index
      %92 = vector.load %arg4[%c0_76, %c0_77, %c0_78] : memref<4x256x128xbf16, #tpu.memory_space<vmem>>, vector<1x256x128xbf16>
      %93 = vector.shape_cast %92 : vector<1x256x128xbf16> to vector<256x128xbf16>
      %cst_79 = arith.constant dense<0.000000e+00> : vector<16x128xf32>
      %94 = tpu.matmul %91, %93, %cst_79 {dimension_numbers = #tpu.dot_dimension_numbers<[1], [0], [0], [1], [0, 0, 1, 1], [], []>} : vector<16x256xbf16>, vector<256x128xbf16>, vector<16x128xf32> -> vector<16x128xf32>
      %95 = arith.negf %94 : vector<16x128xf32>
      %96 = math.exp %95 : vector<16x128xf32>
      %cst_80 = arith.constant 1.000000e+00 : f32
      %97 = vector.broadcast %cst_80 : f32 to vector<16x128xf32>
      %98 = arith.addf %97, %96 : vector<16x128xf32>
      %99 = arith.divf %97, %98 : vector<16x128xf32>
      %100 = arith.mulf %94, %99 : vector<16x128xf32>
      %101 = arith.truncf %100 : vector<16x128xf32> to vector<16x128xbf16>
      %c0_81 = arith.constant 0 : index
      %c0_82 = arith.constant 0 : index
      %c0_83 = arith.constant 0 : index
      %c0_84 = arith.constant 0 : index
      %102 = vector.load %arg5[%c0_81, %c0_82, %c0_83, %c0_84] : memref<4x2x128x128xbf16, #tpu.memory_space<vmem>>, vector<1x1x128x128xbf16>
      %103 = vector.shape_cast %102 : vector<1x1x128x128xbf16> to vector<128x128xbf16>
      %cst_85 = arith.constant dense<0.000000e+00> : vector<16x128xf32>
      %104 = tpu.matmul %101, %103, %cst_85 {dimension_numbers = #tpu.dot_dimension_numbers<[1], [0], [0], [1], [0, 0, 1, 1], [], []>} : vector<16x128xbf16>, vector<128x128xbf16>, vector<16x128xf32> -> vector<16x128xf32>
      %105 = arith.truncf %104 : vector<16x128xf32> to vector<16x128xbf16>
      %c0_86 = arith.constant 0 : index
      %c0_87 = arith.constant 0 : index
      %c0_88 = arith.constant 0 : index
      %106 = vector.load %arg9[%c0_86, %c0_87, %c0_88] : memref<4x16x128xbf16, #tpu.memory_space<vmem>>, vector<1x16x128xbf16>
      %107 = vector.shape_cast %106 : vector<1x16x128xbf16> to vector<16x128xbf16>
      %108 = vector.shape_cast %105 : vector<16x128xbf16> to vector<1x16x128xbf16>
      tpu.vector_store %arg9[%c0_86, %c0_87, %c0_88], %108 {strides = array<i32>} : memref<4x16x128xbf16, #tpu.memory_space<vmem>>, vector<1x16x128xbf16>,
      %c1_89 = arith.constant 1 : index
      %c0_90 = arith.constant 0 : index
      %c0_91 = arith.constant 0 : index
      %109 = vector.load %arg1[%c1_89, %c0_90, %c0_91] : memref<4x16x128xf32, #tpu.memory_space<vmem>>, vector<1x16x128xf32>
      %110 = vector.shape_cast %109 : vector<1x16x128xf32> to vector<16x128xf32>
      %111 = arith.truncf %110 : vector<16x128xf32> to vector<16x128xbf16>
      %c0_92 = arith.constant 0 : index
      %c0_93 = arith.constant 0 : index
      %112 = vector.load %arg11[%c0_92, %c0_93] : memref<16x256xbf16, #tpu.memory_space<vmem>>, vector<16x128xbf16>
      tpu.vector_store %arg11[%c0_92, %c0_93], %111 {strides = array<i32>} : memref<16x256xbf16, #tpu.memory_space<vmem>>, vector<16x128xbf16>,
      %c0_94 = arith.constant 0 : index
      %c0_95 = arith.constant 0 : index
      %113 = vector.load %arg11[%c0_94, %c0_95] : memref<16x256xbf16, #tpu.memory_space<vmem>>, vector<16x256xbf16>
      %c1_96 = arith.constant 1 : index
      %c0_97 = arith.constant 0 : index
      %c0_98 = arith.constant 0 : index
      %114 = vector.load %arg4[%c1_96, %c0_97, %c0_98] : memref<4x256x128xbf16, #tpu.memory_space<vmem>>, vector<1x256x128xbf16>
      %115 = vector.shape_cast %114 : vector<1x256x128xbf16> to vector<256x128xbf16>
      %cst_99 = arith.constant dense<0.000000e+00> : vector<16x128xf32>
      %116 = tpu.matmul %113, %115, %cst_99 {dimension_numbers = #tpu.dot_dimension_numbers<[1], [0], [0], [1], [0, 0, 1, 1], [], []>} : vector<16x256xbf16>, vector<256x128xbf16>, vector<16x128xf32> -> vector<16x128xf32>
      %117 = arith.negf %116 : vector<16x128xf32>
      %118 = math.exp %117 : vector<16x128xf32>
      %cst_100 = arith.constant 1.000000e+00 : f32
      %119 = vector.broadcast %cst_100 : f32 to vector<16x128xf32>
      %120 = arith.addf %119, %118 : vector<16x128xf32>
      %121 = arith.divf %119, %120 : vector<16x128xf32>
      %122 = arith.mulf %116, %121 : vector<16x128xf32>
      %123 = arith.truncf %122 : vector<16x128xf32> to vector<16x128xbf16>
      %c1_101 = arith.constant 1 : index
      %c0_102 = arith.constant 0 : index
      %c0_103 = arith.constant 0 : index
      %c0_104 = arith.constant 0 : index
      %124 = vector.load %arg5[%c1_101, %c0_102, %c0_103, %c0_104] : memref<4x2x128x128xbf16, #tpu.memory_space<vmem>>, vector<1x1x128x128xbf16>
      %125 = vector.shape_cast %124 : vector<1x1x128x128xbf16> to vector<128x128xbf16>
      %cst_105 = arith.constant dense<0.000000e+00> : vector<16x128xf32>
      %126 = tpu.matmul %123, %125, %cst_105 {dimension_numbers = #tpu.dot_dimension_numbers<[1], [0], [0], [1], [0, 0, 1, 1], [], []>} : vector<16x128xbf16>, vector<128x128xbf16>, vector<16x128xf32> -> vector<16x128xf32>
      %127 = arith.truncf %126 : vector<16x128xf32> to vector<16x128xbf16>
      %c1_106 = arith.constant 1 : index
      %c0_107 = arith.constant 0 : index
      %c0_108 = arith.constant 0 : index
      %128 = vector.load %arg9[%c1_106, %c0_107, %c0_108] : memref<4x16x128xbf16, #tpu.memory_space<vmem>>, vector<1x16x128xbf16>
      %129 = vector.shape_cast %128 : vector<1x16x128xbf16> to vector<16x128xbf16>
      %130 = vector.shape_cast %127 : vector<16x128xbf16> to vector<1x16x128xbf16>
      tpu.vector_store %arg9[%c1_106, %c0_107, %c0_108], %130 {strides = array<i32>} : memref<4x16x128xbf16, #tpu.memory_space<vmem>>, vector<1x16x128xbf16>,
      %c2_109 = arith.constant 2 : index
      %c0_110 = arith.constant 0 : index
      %c0_111 = arith.constant 0 : index
      %131 = vector.load %arg1[%c2_109, %c0_110, %c0_111] : memref<4x16x128xf32, #tpu.memory_space<vmem>>, vector<1x16x128xf32>
      %132 = vector.shape_cast %131 : vector<1x16x128xf32> to vector<16x128xf32>
      %133 = arith.truncf %132 : vector<16x128xf32> to vector<16x128xbf16>
      %c0_112 = arith.constant 0 : index
      %c0_113 = arith.constant 0 : index
      %134 = vector.load %arg11[%c0_112, %c0_113] : memref<16x256xbf16, #tpu.memory_space<vmem>>, vector<16x128xbf16>
      tpu.vector_store %arg11[%c0_112, %c0_113], %133 {strides = array<i32>} : memref<16x256xbf16, #tpu.memory_space<vmem>>, vector<16x128xbf16>,
      %c0_114 = arith.constant 0 : index
      %c0_115 = arith.constant 0 : index
      %135 = vector.load %arg11[%c0_114, %c0_115] : memref<16x256xbf16, #tpu.memory_space<vmem>>, vector<16x256xbf16>
      %c2_116 = arith.constant 2 : index
      %c0_117 = arith.constant 0 : index
      %c0_118 = arith.constant 0 : index
      %136 = vector.load %arg4[%c2_116, %c0_117, %c0_118] : memref<4x256x128xbf16, #tpu.memory_space<vmem>>, vector<1x256x128xbf16>
      %137 = vector.shape_cast %136 : vector<1x256x128xbf16> to vector<256x128xbf16>
      %cst_119 = arith.constant dense<0.000000e+00> : vector<16x128xf32>
      %138 = tpu.matmul %135, %137, %cst_119 {dimension_numbers = #tpu.dot_dimension_numbers<[1], [0], [0], [1], [0, 0, 1, 1], [], []>} : vector<16x256xbf16>, vector<256x128xbf16>, vector<16x128xf32> -> vector<16x128xf32>
      %139 = arith.negf %138 : vector<16x128xf32>
      %140 = math.exp %139 : vector<16x128xf32>
      %cst_120 = arith.constant 1.000000e+00 : f32
      %141 = vector.broadcast %cst_120 : f32 to vector<16x128xf32>
      %142 = arith.addf %141, %140 : vector<16x128xf32>
      %143 = arith.divf %141, %142 : vector<16x128xf32>
      %144 = arith.mulf %138, %143 : vector<16x128xf32>
      %145 = arith.truncf %144 : vector<16x128xf32> to vector<16x128xbf16>
      %c2_121 = arith.constant 2 : index
      %c0_122 = arith.constant 0 : index
      %c0_123 = arith.constant 0 : index
      %c0_124 = arith.constant 0 : index
      %146 = vector.load %arg5[%c2_121, %c0_122, %c0_123, %c0_124] : memref<4x2x128x128xbf16, #tpu.memory_space<vmem>>, vector<1x1x128x128xbf16>
      %147 = vector.shape_cast %146 : vector<1x1x128x128xbf16> to vector<128x128xbf16>
      %cst_125 = arith.constant dense<0.000000e+00> : vector<16x128xf32>
      %148 = tpu.matmul %145, %147, %cst_125 {dimension_numbers = #tpu.dot_dimension_numbers<[1], [0], [0], [1], [0, 0, 1, 1], [], []>} : vector<16x128xbf16>, vector<128x128xbf16>, vector<16x128xf32> -> vector<16x128xf32>
      %149 = arith.truncf %148 : vector<16x128xf32> to vector<16x128xbf16>
      %c2_126 = arith.constant 2 : index
      %c0_127 = arith.constant 0 : index
      %c0_128 = arith.constant 0 : index
      %150 = vector.load %arg9[%c2_126, %c0_127, %c0_128] : memref<4x16x128xbf16, #tpu.memory_space<vmem>>, vector<1x16x128xbf16>
      %151 = vector.shape_cast %150 : vector<1x16x128xbf16> to vector<16x128xbf16>
      %152 = vector.shape_cast %149 : vector<16x128xbf16> to vector<1x16x128xbf16>
      tpu.vector_store %arg9[%c2_126, %c0_127, %c0_128], %152 {strides = array<i32>} : memref<4x16x128xbf16, #tpu.memory_space<vmem>>, vector<1x16x128xbf16>,
      %c3_129 = arith.constant 3 : index
      %c0_130 = arith.constant 0 : index
      %c0_131 = arith.constant 0 : index
      %153 = vector.load %arg1[%c3_129, %c0_130, %c0_131] : memref<4x16x128xf32, #tpu.memory_space<vmem>>, vector<1x16x128xf32>
      %154 = vector.shape_cast %153 : vector<1x16x128xf32> to vector<16x128xf32>
      %155 = arith.truncf %154 : vector<16x128xf32> to vector<16x128xbf16>
      %c0_132 = arith.constant 0 : index
      %c0_133 = arith.constant 0 : index
      %156 = vector.load %arg11[%c0_132, %c0_133] : memref<16x256xbf16, #tpu.memory_space<vmem>>, vector<16x128xbf16>
      tpu.vector_store %arg11[%c0_132, %c0_133], %155 {strides = array<i32>} : memref<16x256xbf16, #tpu.memory_space<vmem>>, vector<16x128xbf16>,
      %c0_134 = arith.constant 0 : index
      %c0_135 = arith.constant 0 : index
      %157 = vector.load %arg11[%c0_134, %c0_135] : memref<16x256xbf16, #tpu.memory_space<vmem>>, vector<16x256xbf16>
      %c3_136 = arith.constant 3 : index
      %c0_137 = arith.constant 0 : index
      %c0_138 = arith.constant 0 : index
      %158 = vector.load %arg4[%c3_136, %c0_137, %c0_138] : memref<4x256x128xbf16, #tpu.memory_space<vmem>>, vector<1x256x128xbf16>
      %159 = vector.shape_cast %158 : vector<1x256x128xbf16> to vector<256x128xbf16>
      %cst_139 = arith.constant dense<0.000000e+00> : vector<16x128xf32>
      %160 = tpu.matmul %157, %159, %cst_139 {dimension_numbers = #tpu.dot_dimension_numbers<[1], [0], [0], [1], [0, 0, 1, 1], [], []>} : vector<16x256xbf16>, vector<256x128xbf16>, vector<16x128xf32> -> vector<16x128xf32>
      %161 = arith.negf %160 : vector<16x128xf32>
      %162 = math.exp %161 : vector<16x128xf32>
      %cst_140 = arith.constant 1.000000e+00 : f32
      %163 = vector.broadcast %cst_140 : f32 to vector<16x128xf32>
      %164 = arith.addf %163, %162 : vector<16x128xf32>
      %165 = arith.divf %163, %164 : vector<16x128xf32>
      %166 = arith.mulf %160, %165 : vector<16x128xf32>
      %167 = arith.truncf %166 : vector<16x128xf32> to vector<16x128xbf16>
      %c3_141 = arith.constant 3 : index
      %c0_142 = arith.constant 0 : index
      %c0_143 = arith.constant 0 : index
      %c0_144 = arith.constant 0 : index
      %168 = vector.load %arg5[%c3_141, %c0_142, %c0_143, %c0_144] : memref<4x2x128x128xbf16, #tpu.memory_space<vmem>>, vector<1x1x128x128xbf16>
      %169 = vector.shape_cast %168 : vector<1x1x128x128xbf16> to vector<128x128xbf16>
      %cst_145 = arith.constant dense<0.000000e+00> : vector<16x128xf32>
      %170 = tpu.matmul %167, %169, %cst_145 {dimension_numbers = #tpu.dot_dimension_numbers<[1], [0], [0], [1], [0, 0, 1, 1], [], []>} : vector<16x128xbf16>, vector<128x128xbf16>, vector<16x128xf32> -> vector<16x128xf32>
      %171 = arith.truncf %170 : vector<16x128xf32> to vector<16x128xbf16>
      %c3_146 = arith.constant 3 : index
      %c0_147 = arith.constant 0 : index
      %c0_148 = arith.constant 0 : index
      %172 = vector.load %arg9[%c3_146, %c0_147, %c0_148] : memref<4x16x128xbf16, #tpu.memory_space<vmem>>, vector<1x16x128xbf16>
      %173 = vector.shape_cast %172 : vector<1x16x128xbf16> to vector<16x128xbf16>
      %174 = vector.shape_cast %171 : vector<16x128xbf16> to vector<1x16x128xbf16>
      tpu.vector_store %arg9[%c3_146, %c0_147, %c0_148], %174 {strides = array<i32>} : memref<4x16x128xbf16, #tpu.memory_space<vmem>>, vector<1x16x128xbf16>,
    } else {
    }
    %c0 = arith.constant 0 : index
    %c0_1 = arith.constant 0 : index
    %3 = vector.load %arg6[%c0, %c0_1] : memref<32x16xbf16, #tpu.memory_space<vmem>>, vector<32x16xbf16>
    %c0_2 = arith.constant 0 : index
    %c0_3 = arith.constant 0 : index
    %c0_4 = arith.constant 0 : index
    %4 = vector.load %arg9[%c0_2, %c0_3, %c0_4] : memref<4x16x128xbf16, #tpu.memory_space<vmem>>, vector<1x16x128xbf16>
    %5 = vector.shape_cast %4 : vector<1x16x128xbf16> to vector<16x128xbf16>
    %cst = arith.constant dense<0.000000e+00> : vector<32x128xf32>
    %6 = tpu.matmul %3, %5, %cst {dimension_numbers = #tpu.dot_dimension_numbers<[1], [0], [0], [1], [0, 0, 1, 1], [], []>} : vector<32x16xbf16>, vector<16x128xbf16>, vector<32x128xf32> -> vector<32x128xf32>
    %7 = arith.negf %6 : vector<32x128xf32>
    %8 = math.exp %7 : vector<32x128xf32>
    %cst_5 = arith.constant 1.000000e+00 : f32
    %9 = vector.broadcast %cst_5 : f32 to vector<32x128xf32>
    %10 = arith.addf %9, %8 : vector<32x128xf32>
    %11 = arith.divf %9, %10 : vector<32x128xf32>
    %12 = arith.mulf %6, %11 : vector<32x128xf32>
    %c0_6 = arith.constant 0 : index
    %c0_7 = arith.constant 0 : index
    %c0_8 = arith.constant 0 : index
    %13 = vector.load %arg10[%c0_6, %c0_7, %c0_8] : memref<4x16x128xf32, #tpu.memory_space<vmem>>, vector<1x16x128xf32>
    %14 = vector.shape_cast %13 : vector<1x16x128xf32> to vector<16x128xf32>
    %c0_9 = arith.constant 0 : index
    %c0_10 = arith.constant 0 : index
    %15 = vector.load %arg7[%c0_9, %c0_10] : memref<32x16xbf16, #tpu.memory_space<vmem>>, vector<32x16xbf16>
    %16 = arith.truncf %12 : vector<32x128xf32> to vector<32x128xbf16>
    %cst_11 = arith.constant dense<0.000000e+00> : vector<16x128xf32>
    %17 = tpu.matmul %15, %16, %cst_11 {dimension_numbers = #tpu.dot_dimension_numbers<[0], [0], [1], [1], [0, 1, 1, 1], [], []>} : vector<32x16xbf16>, vector<32x128xbf16>, vector<16x128xf32> -> vector<16x128xf32>
    %18 = arith.addf %14, %17 : vector<16x128xf32>
    %c0_12 = arith.constant 0 : index
    %c0_13 = arith.constant 0 : index
    %c0_14 = arith.constant 0 : index
    %19 = vector.load %arg10[%c0_12, %c0_13, %c0_14] : memref<4x16x128xf32, #tpu.memory_space<vmem>>, vector<1x16x128xf32>
    %20 = vector.shape_cast %19 : vector<1x16x128xf32> to vector<16x128xf32>
    %21 = vector.shape_cast %18 : vector<16x128xf32> to vector<1x16x128xf32>
    tpu.vector_store %arg10[%c0_12, %c0_13, %c0_14], %21 {strides = array<i32>} : memref<4x16x128xf32, #tpu.memory_space<vmem>>, vector<1x16x128xf32>,
    %c0_15 = arith.constant 0 : index
    %c0_16 = arith.constant 0 : index
    %22 = vector.load %arg6[%c0_15, %c0_16] : memref<32x16xbf16, #tpu.memory_space<vmem>>, vector<32x16xbf16>
    %c1 = arith.constant 1 : index
    %c0_17 = arith.constant 0 : index
    %c0_18 = arith.constant 0 : index
    %23 = vector.load %arg9[%c1, %c0_17, %c0_18] : memref<4x16x128xbf16, #tpu.memory_space<vmem>>, vector<1x16x128xbf16>
    %24 = vector.shape_cast %23 : vector<1x16x128xbf16> to vector<16x128xbf16>
    %cst_19 = arith.constant dense<0.000000e+00> : vector<32x128xf32>
    %25 = tpu.matmul %22, %24, %cst_19 {dimension_numbers = #tpu.dot_dimension_numbers<[1], [0], [0], [1], [0, 0, 1, 1], [], []>} : vector<32x16xbf16>, vector<16x128xbf16>, vector<32x128xf32> -> vector<32x128xf32>
    %26 = arith.negf %25 : vector<32x128xf32>
    %27 = math.exp %26 : vector<32x128xf32>
    %cst_20 = arith.constant 1.000000e+00 : f32
    %28 = vector.broadcast %cst_20 : f32 to vector<32x128xf32>
    %29 = arith.addf %28, %27 : vector<32x128xf32>
    %30 = arith.divf %28, %29 : vector<32x128xf32>
    %31 = arith.mulf %25, %30 : vector<32x128xf32>
    %c1_21 = arith.constant 1 : index
    %c0_22 = arith.constant 0 : index
    %c0_23 = arith.constant 0 : index
    %32 = vector.load %arg10[%c1_21, %c0_22, %c0_23] : memref<4x16x128xf32, #tpu.memory_space<vmem>>, vector<1x16x128xf32>
    %33 = vector.shape_cast %32 : vector<1x16x128xf32> to vector<16x128xf32>
    %c0_24 = arith.constant 0 : index
    %c0_25 = arith.constant 0 : index
    %34 = vector.load %arg7[%c0_24, %c0_25] : memref<32x16xbf16, #tpu.memory_space<vmem>>, vector<32x16xbf16>
    %35 = arith.truncf %31 : vector<32x128xf32> to vector<32x128xbf16>
    %cst_26 = arith.constant dense<0.000000e+00> : vector<16x128xf32>
    %36 = tpu.matmul %34, %35, %cst_26 {dimension_numbers = #tpu.dot_dimension_numbers<[0], [0], [1], [1], [0, 1, 1, 1], [], []>} : vector<32x16xbf16>, vector<32x128xbf16>, vector<16x128xf32> -> vector<16x128xf32>
    %37 = arith.addf %33, %36 : vector<16x128xf32>
    %c1_27 = arith.constant 1 : index
    %c0_28 = arith.constant 0 : index
    %c0_29 = arith.constant 0 : index
    %38 = vector.load %arg10[%c1_27, %c0_28, %c0_29] : memref<4x16x128xf32, #tpu.memory_space<vmem>>, vector<1x16x128xf32>
    %39 = vector.shape_cast %38 : vector<1x16x128xf32> to vector<16x128xf32>
    %40 = vector.shape_cast %37 : vector<16x128xf32> to vector<1x16x128xf32>
    tpu.vector_store %arg10[%c1_27, %c0_28, %c0_29], %40 {strides = array<i32>} : memref<4x16x128xf32, #tpu.memory_space<vmem>>, vector<1x16x128xf32>,
    %c0_30 = arith.constant 0 : index
    %c0_31 = arith.constant 0 : index
    %41 = vector.load %arg6[%c0_30, %c0_31] : memref<32x16xbf16, #tpu.memory_space<vmem>>, vector<32x16xbf16>
    %c2 = arith.constant 2 : index
    %c0_32 = arith.constant 0 : index
    %c0_33 = arith.constant 0 : index
    %42 = vector.load %arg9[%c2, %c0_32, %c0_33] : memref<4x16x128xbf16, #tpu.memory_space<vmem>>, vector<1x16x128xbf16>
    %43 = vector.shape_cast %42 : vector<1x16x128xbf16> to vector<16x128xbf16>
    %cst_34 = arith.constant dense<0.000000e+00> : vector<32x128xf32>
    %44 = tpu.matmul %41, %43, %cst_34 {dimension_numbers = #tpu.dot_dimension_numbers<[1], [0], [0], [1], [0, 0, 1, 1], [], []>} : vector<32x16xbf16>, vector<16x128xbf16>, vector<32x128xf32> -> vector<32x128xf32>
    %45 = arith.negf %44 : vector<32x128xf32>
    %46 = math.exp %45 : vector<32x128xf32>
    %cst_35 = arith.constant 1.000000e+00 : f32
    %47 = vector.broadcast %cst_35 : f32 to vector<32x128xf32>
    %48 = arith.addf %47, %46 : vector<32x128xf32>
    %49 = arith.divf %47, %48 : vector<32x128xf32>
    %50 = arith.mulf %44, %49 : vector<32x128xf32>
    %c2_36 = arith.constant 2 : index
    %c0_37 = arith.constant 0 : index
    %c0_38 = arith.constant 0 : index
    %51 = vector.load %arg10[%c2_36, %c0_37, %c0_38] : memref<4x16x128xf32, #tpu.memory_space<vmem>>, vector<1x16x128xf32>
    %52 = vector.shape_cast %51 : vector<1x16x128xf32> to vector<16x128xf32>
    %c0_39 = arith.constant 0 : index
    %c0_40 = arith.constant 0 : index
    %53 = vector.load %arg7[%c0_39, %c0_40] : memref<32x16xbf16, #tpu.memory_space<vmem>>, vector<32x16xbf16>
    %54 = arith.truncf %50 : vector<32x128xf32> to vector<32x128xbf16>
    %cst_41 = arith.constant dense<0.000000e+00> : vector<16x128xf32>
    %55 = tpu.matmul %53, %54, %cst_41 {dimension_numbers = #tpu.dot_dimension_numbers<[0], [0], [1], [1], [0, 1, 1, 1], [], []>} : vector<32x16xbf16>, vector<32x128xbf16>, vector<16x128xf32> -> vector<16x128xf32>
    %56 = arith.addf %52, %55 : vector<16x128xf32>
    %c2_42 = arith.constant 2 : index
    %c0_43 = arith.constant 0 : index
    %c0_44 = arith.constant 0 : index
    %57 = vector.load %arg10[%c2_42, %c0_43, %c0_44] : memref<4x16x128xf32, #tpu.memory_space<vmem>>, vector<1x16x128xf32>
    %58 = vector.shape_cast %57 : vector<1x16x128xf32> to vector<16x128xf32>
    %59 = vector.shape_cast %56 : vector<16x128xf32> to vector<1x16x128xf32>
    tpu.vector_store %arg10[%c2_42, %c0_43, %c0_44], %59 {strides = array<i32>} : memref<4x16x128xf32, #tpu.memory_space<vmem>>, vector<1x16x128xf32>,
    %c0_45 = arith.constant 0 : index
    %c0_46 = arith.constant 0 : index
    %60 = vector.load %arg6[%c0_45, %c0_46] : memref<32x16xbf16, #tpu.memory_space<vmem>>, vector<32x16xbf16>
    %c3 = arith.constant 3 : index
    %c0_47 = arith.constant 0 : index
    %c0_48 = arith.constant 0 : index
    %61 = vector.load %arg9[%c3, %c0_47, %c0_48] : memref<4x16x128xbf16, #tpu.memory_space<vmem>>, vector<1x16x128xbf16>
    %62 = vector.shape_cast %61 : vector<1x16x128xbf16> to vector<16x128xbf16>
    %cst_49 = arith.constant dense<0.000000e+00> : vector<32x128xf32>
    %63 = tpu.matmul %60, %62, %cst_49 {dimension_numbers = #tpu.dot_dimension_numbers<[1], [0], [0], [1], [0, 0, 1, 1], [], []>} : vector<32x16xbf16>, vector<16x128xbf16>, vector<32x128xf32> -> vector<32x128xf32>
    %64 = arith.negf %63 : vector<32x128xf32>
    %65 = math.exp %64 : vector<32x128xf32>
    %cst_50 = arith.constant 1.000000e+00 : f32
    %66 = vector.broadcast %cst_50 : f32 to vector<32x128xf32>
    %67 = arith.addf %66, %65 : vector<32x128xf32>
    %68 = arith.divf %66, %67 : vector<32x128xf32>
    %69 = arith.mulf %63, %68 : vector<32x128xf32>
    %c3_51 = arith.constant 3 : index
    %c0_52 = arith.constant 0 : index
    %c0_53 = arith.constant 0 : index
    %70 = vector.load %arg10[%c3_51, %c0_52, %c0_53] : memref<4x16x128xf32, #tpu.memory_space<vmem>>, vector<1x16x128xf32>
    %71 = vector.shape_cast %70 : vector<1x16x128xf32> to vector<16x128xf32>
    %c0_54 = arith.constant 0 : index
    %c0_55 = arith.constant 0 : index
    %72 = vector.load %arg7[%c0_54, %c0_55] : memref<32x16xbf16, #tpu.memory_space<vmem>>, vector<32x16xbf16>
    %73 = arith.truncf %69 : vector<32x128xf32> to vector<32x128xbf16>
    %cst_56 = arith.constant dense<0.000000e+00> : vector<16x128xf32>
    %74 = tpu.matmul %72, %73, %cst_56 {dimension_numbers = #tpu.dot_dimension_numbers<[0], [0], [1], [1], [0, 1, 1, 1], [], []>} : vector<32x16xbf16>, vector<32x128xbf16>, vector<16x128xf32> -> vector<16x128xf32>
    %75 = arith.addf %71, %74 : vector<16x128xf32>
    %c3_57 = arith.constant 3 : index
    %c0_58 = arith.constant 0 : index
    %c0_59 = arith.constant 0 : index
    %76 = vector.load %arg10[%c3_57, %c0_58, %c0_59] : memref<4x16x128xf32, #tpu.memory_space<vmem>>, vector<1x16x128xf32>
    %77 = vector.shape_cast %76 : vector<1x16x128xf32> to vector<16x128xf32>
    %78 = vector.shape_cast %75 : vector<16x128xf32> to vector<1x16x128xf32>
    tpu.vector_store %arg10[%c3_57, %c0_58, %c0_59], %78 {strides = array<i32>} : memref<4x16x128xf32, #tpu.memory_space<vmem>>, vector<1x16x128xf32>,
    %c0_i32_60 = arith.constant 0 : i32
    %79 = arith.cmpi eq, %arg0, %c0_i32_60 : i32
    %80 = arith.extui %79 : i1 to i32
    %c0_i32_61 = arith.constant 0 : i32
    %81 = arith.cmpi ne, %80, %c0_i32_61 : i32
    scf.if %81 {
      %c0_62 = arith.constant 0 : index
      %c0_63 = arith.constant 0 : index
      %c0_64 = arith.constant 0 : index
      %82 = vector.load %arg10[%c0_62, %c0_63, %c0_64] : memref<4x16x128xf32, #tpu.memory_space<vmem>>, vector<1x16x128xf32>
      %83 = vector.shape_cast %82 : vector<1x16x128xf32> to vector<16x128xf32>
      %84 = arith.truncf %83 : vector<16x128xf32> to vector<16x128xbf16>
      %c0_65 = arith.constant 0 : index
      %c1_66 = arith.constant 1 : index
      %c0_67 = arith.constant 0 : index
      %c0_68 = arith.constant 0 : index
      %85 = vector.load %arg5[%c0_65, %c1_66, %c0_67, %c0_68] : memref<4x2x128x128xbf16, #tpu.memory_space<vmem>>, vector<1x1x128x128xbf16>
      %86 = vector.shape_cast %85 : vector<1x1x128x128xbf16> to vector<128x128xbf16>
      %cst_69 = arith.constant dense<0.000000e+00> : vector<16x128xf32>
      %87 = tpu.matmul %84, %86, %cst_69 {dimension_numbers = #tpu.dot_dimension_numbers<[1], [0], [0], [1], [0, 0, 1, 1], [], []>} : vector<16x128xbf16>, vector<128x128xbf16>, vector<16x128xf32> -> vector<16x128xf32>
      %cst_70 = arith.constant 0.000000e+00 : f32
      %88 = vector.broadcast %cst_70 : f32 to vector<16x128xf32>
      %89 = arith.subf %88, %87 : vector<16x128xf32>
      %cst_71 = arith.constant 0.707106769 : f32
      %90 = vector.broadcast %cst_71 : f32 to vector<16x128xf32>
      %91 = arith.mulf %90, %89 : vector<16x128xf32>
      %c0_72 = arith.constant 0 : index
      %c0_73 = arith.constant 0 : index
      %c0_74 = arith.constant 0 : index
      %92 = vector.load %arg8[%c0_72, %c0_73, %c0_74] : memref<4x16x128xf32, #tpu.memory_space<vmem>>, vector<1x16x128xf32>
      %93 = vector.shape_cast %92 : vector<1x16x128xf32> to vector<16x128xf32>
      %94 = vector.shape_cast %91 : vector<16x128xf32> to vector<1x16x128xf32>
      tpu.vector_store %arg8[%c0_72, %c0_73, %c0_74], %94 {strides = array<i32>} : memref<4x16x128xf32, #tpu.memory_space<vmem>>, vector<1x16x128xf32>,
      %c1_75 = arith.constant 1 : index
      %c0_76 = arith.constant 0 : index
      %c0_77 = arith.constant 0 : index
      %95 = vector.load %arg10[%c1_75, %c0_76, %c0_77] : memref<4x16x128xf32, #tpu.memory_space<vmem>>, vector<1x16x128xf32>
      %96 = vector.shape_cast %95 : vector<1x16x128xf32> to vector<16x128xf32>
      %97 = arith.truncf %96 : vector<16x128xf32> to vector<16x128xbf16>
      %c1_78 = arith.constant 1 : index
      %c1_79 = arith.constant 1 : index
      %c0_80 = arith.constant 0 : index
      %c0_81 = arith.constant 0 : index
      %98 = vector.load %arg5[%c1_78, %c1_79, %c0_80, %c0_81] : memref<4x2x128x128xbf16, #tpu.memory_space<vmem>>, vector<1x1x128x128xbf16>
      %99 = vector.shape_cast %98 : vector<1x1x128x128xbf16> to vector<128x128xbf16>
      %cst_82 = arith.constant dense<0.000000e+00> : vector<16x128xf32>
      %100 = tpu.matmul %97, %99, %cst_82 {dimension_numbers = #tpu.dot_dimension_numbers<[1], [0], [0], [1], [0, 0, 1, 1], [], []>} : vector<16x128xbf16>, vector<128x128xbf16>, vector<16x128xf32> -> vector<16x128xf32>
      %cst_83 = arith.constant 0.000000e+00 : f32
      %101 = vector.broadcast %cst_83 : f32 to vector<16x128xf32>
      %102 = arith.subf %101, %100 : vector<16x128xf32>
      %c0_84 = arith.constant 0 : index
      %c0_85 = arith.constant 0 : index
      %c0_86 = arith.constant 0 : index
      %103 = vector.load %arg8[%c0_84, %c0_85, %c0_86] : memref<4x16x128xf32, #tpu.memory_space<vmem>>, vector<1x16x128xf32>
      %104 = vector.shape_cast %103 : vector<1x16x128xf32> to vector<16x128xf32>
      %cst_87 = arith.constant 0.707106769 : f32
      %105 = vector.broadcast %cst_87 : f32 to vector<16x128xf32>
      %106 = arith.mulf %105, %104 : vector<16x128xf32>
      %107 = arith.addf %106, %102 : vector<16x128xf32>
      %cst_88 = arith.constant 0.816496611 : f32
      %108 = vector.broadcast %cst_88 : f32 to vector<16x128xf32>
      %109 = arith.mulf %108, %107 : vector<16x128xf32>
      %c1_89 = arith.constant 1 : index
      %c0_90 = arith.constant 0 : index
      %c0_91 = arith.constant 0 : index
      %110 = vector.load %arg8[%c1_89, %c0_90, %c0_91] : memref<4x16x128xf32, #tpu.memory_space<vmem>>, vector<1x16x128xf32>
      %111 = vector.shape_cast %110 : vector<1x16x128xf32> to vector<16x128xf32>
      %112 = vector.shape_cast %109 : vector<16x128xf32> to vector<1x16x128xf32>
      tpu.vector_store %arg8[%c1_89, %c0_90, %c0_91], %112 {strides = array<i32>} : memref<4x16x128xf32, #tpu.memory_space<vmem>>, vector<1x16x128xf32>,
      %c2_92 = arith.constant 2 : index
      %c0_93 = arith.constant 0 : index
      %c0_94 = arith.constant 0 : index
      %113 = vector.load %arg10[%c2_92, %c0_93, %c0_94] : memref<4x16x128xf32, #tpu.memory_space<vmem>>, vector<1x16x128xf32>
      %114 = vector.shape_cast %113 : vector<1x16x128xf32> to vector<16x128xf32>
      %115 = arith.truncf %114 : vector<16x128xf32> to vector<16x128xbf16>
      %c2_95 = arith.constant 2 : index
      %c1_96 = arith.constant 1 : index
      %c0_97 = arith.constant 0 : index
      %c0_98 = arith.constant 0 : index
      %116 = vector.load %arg5[%c2_95, %c1_96, %c0_97, %c0_98] : memref<4x2x128x128xbf16, #tpu.memory_space<vmem>>, vector<1x1x128x128xbf16>
      %117 = vector.shape_cast %116 : vector<1x1x128x128xbf16> to vector<128x128xbf16>
      %cst_99 = arith.constant dense<0.000000e+00> : vector<16x128xf32>
      %118 = tpu.matmul %115, %117, %cst_99 {dimension_numbers = #tpu.dot_dimension_numbers<[1], [0], [0], [1], [0, 0, 1, 1], [], []>} : vector<16x128xbf16>, vector<128x128xbf16>, vector<16x128xf32> -> vector<16x128xf32>
      %cst_100 = arith.constant 0.000000e+00 : f32
      %119 = vector.broadcast %cst_100 : f32 to vector<16x128xf32>
      %120 = arith.subf %119, %118 : vector<16x128xf32>
      %c1_101 = arith.constant 1 : index
      %c0_102 = arith.constant 0 : index
      %c0_103 = arith.constant 0 : index
      %121 = vector.load %arg8[%c1_101, %c0_102, %c0_103] : memref<4x16x128xf32, #tpu.memory_space<vmem>>, vector<1x16x128xf32>
      %122 = vector.shape_cast %121 : vector<1x16x128xf32> to vector<16x128xf32>
      %cst_104 = arith.constant 0.816496611 : f32
      %123 = vector.broadcast %cst_104 : f32 to vector<16x128xf32>
      %124 = arith.mulf %123, %122 : vector<16x128xf32>
      %125 = arith.addf %124, %120 : vector<16x128xf32>
      %cst_105 = arith.constant 0.866025388 : f32
      %126 = vector.broadcast %cst_105 : f32 to vector<16x128xf32>
      %127 = arith.mulf %126, %125 : vector<16x128xf32>
      %c2_106 = arith.constant 2 : index
      %c0_107 = arith.constant 0 : index
      %c0_108 = arith.constant 0 : index
      %128 = vector.load %arg8[%c2_106, %c0_107, %c0_108] : memref<4x16x128xf32, #tpu.memory_space<vmem>>, vector<1x16x128xf32>
      %129 = vector.shape_cast %128 : vector<1x16x128xf32> to vector<16x128xf32>
      %130 = vector.shape_cast %127 : vector<16x128xf32> to vector<1x16x128xf32>
      tpu.vector_store %arg8[%c2_106, %c0_107, %c0_108], %130 {strides = array<i32>} : memref<4x16x128xf32, #tpu.memory_space<vmem>>, vector<1x16x128xf32>,
      %c3_109 = arith.constant 3 : index
      %c0_110 = arith.constant 0 : index
      %c0_111 = arith.constant 0 : index
      %131 = vector.load %arg10[%c3_109, %c0_110, %c0_111] : memref<4x16x128xf32, #tpu.memory_space<vmem>>, vector<1x16x128xf32>
      %132 = vector.shape_cast %131 : vector<1x16x128xf32> to vector<16x128xf32>
      %133 = arith.truncf %132 : vector<16x128xf32> to vector<16x128xbf16>
      %c3_112 = arith.constant 3 : index
      %c1_113 = arith.constant 1 : index
      %c0_114 = arith.constant 0 : index
      %c0_115 = arith.constant 0 : index
      %134 = vector.load %arg5[%c3_112, %c1_113, %c0_114, %c0_115] : memref<4x2x128x128xbf16, #tpu.memory_space<vmem>>, vector<1x1x128x128xbf16>
      %135 = vector.shape_cast %134 : vector<1x1x128x128xbf16> to vector<128x128xbf16>
      %cst_116 = arith.constant dense<0.000000e+00> : vector<16x128xf32>
      %136 = tpu.matmul %133, %135, %cst_116 {dimension_numbers = #tpu.dot_dimension_numbers<[1], [0], [0], [1], [0, 0, 1, 1], [], []>} : vector<16x128xbf16>, vector<128x128xbf16>, vector<16x128xf32> -> vector<16x128xf32>
      %cst_117 = arith.constant 0.000000e+00 : f32
      %137 = vector.broadcast %cst_117 : f32 to vector<16x128xf32>
      %138 = arith.subf %137, %136 : vector<16x128xf32>
      %c0_118 = arith.constant 0 : index
      %c0_119 = arith.constant 0 : index
      %139 = vector.load %arg3[%c0_118, %c0_119] : memref<16x128xf32, #tpu.memory_space<vmem>>, vector<16x128xf32>
      %140 = arith.addf %138, %139 : vector<16x128xf32>
      %c2_120 = arith.constant 2 : index
      %c0_121 = arith.constant 0 : index
      %c0_122 = arith.constant 0 : index
      %141 = vector.load %arg8[%c2_120, %c0_121, %c0_122] : memref<4x16x128xf32, #tpu.memory_space<vmem>>, vector<1x16x128xf32>
      %142 = vector.shape_cast %141 : vector<1x16x128xf32> to vector<16x128xf32>
      %cst_123 = arith.constant 0.866025388 : f32
      %143 = vector.broadcast %cst_123 : f32 to vector<16x128xf32>
      %144 = arith.mulf %143, %142 : vector<16x128xf32>
      %145 = arith.addf %144, %140 : vector<16x128xf32>
      %cst_124 = arith.constant 0.89442718 : f32
      %146 = vector.broadcast %cst_124 : f32 to vector<16x128xf32>
      %147 = arith.mulf %146, %145 : vector<16x128xf32>
      %c3_125 = arith.constant 3 : index
      %c0_126 = arith.constant 0 : index
      %c0_127 = arith.constant 0 : index
      %148 = vector.load %arg8[%c3_125, %c0_126, %c0_127] : memref<4x16x128xf32, #tpu.memory_space<vmem>>, vector<1x16x128xf32>
      %149 = vector.shape_cast %148 : vector<1x16x128xf32> to vector<16x128xf32>
      %150 = vector.shape_cast %147 : vector<16x128xf32> to vector<1x16x128xf32>
      tpu.vector_store %arg8[%c3_125, %c0_126, %c0_127], %150 {strides = array<i32>} : memref<4x16x128xf32, #tpu.memory_space<vmem>>, vector<1x16x128xf32>,
      %c3_128 = arith.constant 3 : index
      %c0_129 = arith.constant 0 : index
      %c0_130 = arith.constant 0 : index
      %151 = vector.load %arg8[%c3_128, %c0_129, %c0_130] : memref<4x16x128xf32, #tpu.memory_space<vmem>>, vector<1x16x128xf32>
      %152 = vector.shape_cast %151 : vector<1x16x128xf32> to vector<16x128xf32>
      %cst_131 = arith.constant 0.89442718 : f32
      %153 = vector.broadcast %cst_131 : f32 to vector<16x128xf32>
      %154 = arith.mulf %153, %152 : vector<16x128xf32>
      %c3_132 = arith.constant 3 : index
      %c0_133 = arith.constant 0 : index
      %c0_134 = arith.constant 0 : index
      %155 = vector.load %arg8[%c3_132, %c0_133, %c0_134] : memref<4x16x128xf32, #tpu.memory_space<vmem>>, vector<1x16x128xf32>
      %156 = vector.shape_cast %155 : vector<1x16x128xf32> to vector<16x128xf32>
      %157 = vector.shape_cast %154 : vector<16x128xf32> to vector<1x16x128xf32>
      tpu.vector_store %arg8[%c3_132, %c0_133, %c0_134], %157 {strides = array<i32>} : memref<4x16x128xf32, #tpu.memory_space<vmem>>, vector<1x16x128xf32>,
      %c3_135 = arith.constant 3 : index
      %c0_136 = arith.constant 0 : index
      %c0_137 = arith.constant 0 : index
      %158 = vector.load %arg8[%c3_135, %c0_136, %c0_137] : memref<4x16x128xf32, #tpu.memory_space<vmem>>, vector<1x16x128xf32>
      %159 = vector.shape_cast %158 : vector<1x16x128xf32> to vector<16x128xf32>
      %cst_138 = arith.constant 0.866025388 : f32
      %160 = vector.broadcast %cst_138 : f32 to vector<16x128xf32>
      %161 = arith.mulf %160, %159 : vector<16x128xf32>
      %c2_139 = arith.constant 2 : index
      %c0_140 = arith.constant 0 : index
      %c0_141 = arith.constant 0 : index
      %162 = vector.load %arg8[%c2_139, %c0_140, %c0_141] : memref<4x16x128xf32, #tpu.memory_space<vmem>>, vector<1x16x128xf32>
      %163 = vector.shape_cast %162 : vector<1x16x128xf32> to vector<16x128xf32>
      %164 = arith.addf %161, %163 : vector<16x128xf32>
      %cst_142 = arith.constant 0.866025388 : f32
      %165 = vector.broadcast %cst_142 : f32 to vector<16x128xf32>
      %166 = arith.mulf %165, %164 : vector<16x128xf32>
      %c2_143 = arith.constant 2 : index
      %c0_144 = arith.constant 0 : index
      %c0_145 = arith.constant 0 : index
      %167 = vector.load %arg8[%c2_143, %c0_144, %c0_145] : memref<4x16x128xf32, #tpu.memory_space<vmem>>, vector<1x16x128xf32>
      %168 = vector.shape_cast %167 : vector<1x16x128xf32> to vector<16x128xf32>
      %169 = vector.shape_cast %166 : vector<16x128xf32> to vector<1x16x128xf32>
      tpu.vector_store %arg8[%c2_143, %c0_144, %c0_145], %169 {strides = array<i32>} : memref<4x16x128xf32, #tpu.memory_space<vmem>>, vector<1x16x128xf32>,
      %c2_146 = arith.constant 2 : index
      %c0_147 = arith.constant 0 : index
      %c0_148 = arith.constant 0 : index
      %170 = vector.load %arg8[%c2_146, %c0_147, %c0_148] : memref<4x16x128xf32, #tpu.memory_space<vmem>>, vector<1x16x128xf32>
      %171 = vector.shape_cast %170 : vector<1x16x128xf32> to vector<16x128xf32>
      %cst_149 = arith.constant 0.816496611 : f32
      %172 = vector.broadcast %cst_149 : f32 to vector<16x128xf32>
      %173 = arith.mulf %172, %171 : vector<16x128xf32>
      %c1_150 = arith.constant 1 : index
      %c0_151 = arith.constant 0 : index
      %c0_152 = arith.constant 0 : index
      %174 = vector.load %arg8[%c1_150, %c0_151, %c0_152] : memref<4x16x128xf32, #tpu.memory_space<vmem>>, vector<1x16x128xf32>
      %175 = vector.shape_cast %174 : vector<1x16x128xf32> to vector<16x128xf32>
      %176 = arith.addf %173, %175 : vector<16x128xf32>
      %cst_153 = arith.constant 0.816496611 : f32
      %177 = vector.broadcast %cst_153 : f32 to vector<16x128xf32>
      %178 = arith.mulf %177, %176 : vector<16x128xf32>
      %c1_154 = arith.constant 1 : index
      %c0_155 = arith.constant 0 : index
      %c0_156 = arith.constant 0 : index
      %179 = vector.load %arg8[%c1_154, %c0_155, %c0_156] : memref<4x16x128xf32, #tpu.memory_space<vmem>>, vector<1x16x128xf32>
      %180 = vector.shape_cast %179 : vector<1x16x128xf32> to vector<16x128xf32>
      %181 = vector.shape_cast %178 : vector<16x128xf32> to vector<1x16x128xf32>
      tpu.vector_store %arg8[%c1_154, %c0_155, %c0_156], %181 {strides = array<i32>} : memref<4x16x128xf32, #tpu.memory_space<vmem>>, vector<1x16x128xf32>,
      %c1_157 = arith.constant 1 : index
      %c0_158 = arith.constant 0 : index
      %c0_159 = arith.constant 0 : index
      %182 = vector.load %arg8[%c1_157, %c0_158, %c0_159] : memref<4x16x128xf32, #tpu.memory_space<vmem>>, vector<1x16x128xf32>
      %183 = vector.shape_cast %182 : vector<1x16x128xf32> to vector<16x128xf32>
      %cst_160 = arith.constant 0.707106769 : f32
      %184 = vector.broadcast %cst_160 : f32 to vector<16x128xf32>
      %185 = arith.mulf %184, %183 : vector<16x128xf32>
      %c0_161 = arith.constant 0 : index
      %c0_162 = arith.constant 0 : index
      %c0_163 = arith.constant 0 : index
      %186 = vector.load %arg8[%c0_161, %c0_162, %c0_163] : memref<4x16x128xf32, #tpu.memory_space<vmem>>, vector<1x16x128xf32>
      %187 = vector.shape_cast %186 : vector<1x16x128xf32> to vector<16x128xf32>
      %188 = arith.addf %185, %187 : vector<16x128xf32>
      %cst_164 = arith.constant 0.707106769 : f32
      %189 = vector.broadcast %cst_164 : f32 to vector<16x128xf32>
      %190 = arith.mulf %189, %188 : vector<16x128xf32>
      %c0_165 = arith.constant 0 : index
      %c0_166 = arith.constant 0 : index
      %c0_167 = arith.constant 0 : index
      %191 = vector.load %arg8[%c0_165, %c0_166, %c0_167] : memref<4x16x128xf32, #tpu.memory_space<vmem>>, vector<1x16x128xf32>
      %192 = vector.shape_cast %191 : vector<1x16x128xf32> to vector<16x128xf32>
      %193 = vector.shape_cast %190 : vector<16x128xf32> to vector<1x16x128xf32>
      tpu.vector_store %arg8[%c0_165, %c0_166, %c0_167], %193 {strides = array<i32>} : memref<4x16x128xf32, #tpu.memory_space<vmem>>, vector<1x16x128xf32>,
    } else {
    }
    return
  }
  func.func @transform_0(%arg0: i32) -> (i32, i32, i32) {
    %c0_i32 = arith.constant 0 : i32
    %c0_i32_0 = arith.constant 0 : i32
    %c0_i32_1 = arith.constant 0 : i32
    %c0_i32_2 = arith.constant 0 : i32
    return %c0_i32, %c0_i32_0, %c0_i32_1 : i32, i32, i32
  }
  func.func @transform_1(%arg0: i32) -> (i32, i32) {
    %c0_i32 = arith.constant 0 : i32
    %c0_i32_0 = arith.constant 0 : i32
    %c0_i32_1 = arith.constant 0 : i32
    return %c0_i32, %c0_i32_0 : i32, i32
  }
  func.func @transform_2(%arg0: i32) -> (i32, i32) {
    %c0_i32 = arith.constant 0 : i32
    %c0_i32_0 = arith.constant 0 : i32
    %c0_i32_1 = arith.constant 0 : i32
    return %c0_i32, %c0_i32_0 : i32, i32
  }
  func.func @transform_3(%arg0: i32) -> (i32, i32, i32) {
    %c0_i32 = arith.constant 0 : i32
    %c0_i32_0 = arith.constant 0 : i32
    %c0_i32_1 = arith.constant 0 : i32
    %c0_i32_2 = arith.constant 0 : i32
    return %c0_i32, %c0_i32_0, %c0_i32_1 : i32, i32, i32
  }
  func.func @transform_4(%arg0: i32) -> (i32, i32, i32, i32) {
    %c0_i32 = arith.constant 0 : i32
    %c0_i32_0 = arith.constant 0 : i32
    %c0_i32_1 = arith.constant 0 : i32
    %c0_i32_2 = arith.constant 0 : i32
    %c0_i32_3 = arith.constant 0 : i32
    return %c0_i32, %c0_i32_0, %c0_i32_1, %c0_i32_2 : i32, i32, i32, i32
  }
  func.func @transform_5(%arg0: i32) -> (i32, i32) {
    %c0_i32 = arith.constant 0 : i32
    %c0_i32_0 = arith.constant 0 : i32
    return %arg0, %c0_i32 : i32, i32
  }
  func.func @transform_6(%arg0: i32) -> (i32, i32) {
    %c0_i32 = arith.constant 0 : i32
    %c0_i32_0 = arith.constant 0 : i32
    return %arg0, %c0_i32 : i32, i32
  }
  func.func @transform_7(%arg0: i32) -> (i32, i32, i32) {
    %c0_i32 = arith.constant 0 : i32
    %c0_i32_0 = arith.constant 0 : i32
    %c0_i32_1 = arith.constant 0 : i32
    %c0_i32_2 = arith.constant 0 : i32
    return %c0_i32, %c0_i32_0, %c0_i32_1 : i32, i32, i32
  }
}

</mosaic_0001>

<llo_original>
// kernel: graph_least_action_net_forward.2
$region0: #{graph_least_action_net_forward.2}
  #allocation0 [shape = 'u32[]', space=smem, size = 0x4, offset = 0x4, fixed_abs, tag = 'smem constant byte address 0x4 - core index']
  #allocation1 [shape = 'u32[144,128]{1,0:T(1,128)}', space=vmem, size = 0x12000, scoped, tag = 'internal scratch']
  #allocation2 [shape = 'bf16[4,16,128]{2,1,0:T(8,128)(2,1)}', space=vmem, size = 0x4000, scoped, tag = 'scratch operand']
  #allocation3 [shape = 'f32[4,16,128]{2,1,0:T(8,128)}', space=vmem, size = 0x8000, scoped, tag = 'scratch operand']
  #allocation4 [shape = 'bf16[16,256]{1,0:T(8,128)(2,1)}', space=vmem, size = 0x2000, scoped, tag = 'scratch operand']
  %s0 = inlined_call_operand.vmem [shape: f32[4,16,128], index: 0, kind: input, shape index: {}, may-alias: {0,7}]
  %s1 = inlined_call_operand.vmem [shape: f32[16,128], index: 1, kind: input, shape index: {}]
  %s2 = inlined_call_operand.vmem [shape: f32[16,128], index: 2, kind: input, shape index: {}]
  %s3 = inlined_call_operand.vmem [shape: bf16[4,256,128], index: 3, kind: input, shape index: {}]
  %s4 = inlined_call_operand.vmem [shape: bf16[4,2,128,128], index: 4, kind: input, shape index: {}]
  %s5 = inlined_call_operand.vmem [shape: bf16[32,16], index: 5, kind: input, shape index: {}]
  %s6 = inlined_call_operand.vmem [shape: bf16[32,16], index: 6, kind: input, shape index: {}]
  %s7 = inlined_call_operand.vmem [shape: f32[4,16,128], index: 7, kind: output, shape index: {}, may-alias: {0,7}]
  %s8 = sld [smem:[#allocation0]]
  $region46: #{graph_least_action_net_forward.2} parent=0
    _
  %s10 = ssub.s32 1, %s8
  %s11 = scalar_select 0, %s10, %s8
  // Predicated region
  $region2: #{graph_least_action_net_forward.2} parent=0 // pred_check
    _
  $region3: #{graph_least_action_net_forward.2} parent=0 // pred_check_branch
    %13 = sbr.rel (0) target = $region5
  $region4: #{graph_least_action_net_forward.2} parent=0 // pred_region
    _
  $region5: #{graph_least_action_net_forward.2} parent=0 // pred_fallthru
    _
  // Predicated region
  $region6: #{graph_least_action_net_forward.2} parent=0 // pred_check
    _
  $region7: #{graph_least_action_net_forward.2} parent=0 // pred_check_branch
    %15 = sbr.rel (0) target = $region9
  $region8: #{graph_least_action_net_forward.2} parent=0 // pred_region
    _
  $region9: #{graph_least_action_net_forward.2} parent=0 // pred_fallthru
    _
  // Predicated region
  $region10: #{graph_least_action_net_forward.2} parent=0 // pred_check
    _
  $region11: #{graph_least_action_net_forward.2} parent=0 // pred_check_branch
    %17 = sbr.rel (0) target = $region13
  $region12: #{graph_least_action_net_forward.2} parent=0 // pred_region
    _
  $region13: #{graph_least_action_net_forward.2} parent=0 // pred_fallthru
    _
  // Predicated region
  $region14: #{graph_least_action_net_forward.2} parent=0 // pred_check
    _
  $region15: #{graph_least_action_net_forward.2} parent=0 // pred_check_branch
    %19 = sbr.rel (0) target = $region17
  $region16: #{graph_least_action_net_forward.2} parent=0 // pred_region
    _
  $region17: #{graph_least_action_net_forward.2} parent=0 // pred_fallthru
    _
  // Predicated region
  $region18: #{graph_least_action_net_forward.2} parent=0 // pred_check
    _
  $region19: #{graph_least_action_net_forward.2} parent=0 // pred_check_branch
    %21 = sbr.rel (0) target = $region21
  $region20: #{graph_least_action_net_forward.2} parent=0 // pred_region
    _
  $region21: #{graph_least_action_net_forward.2} parent=0 // pred_fallthru
    _
  // Predicated region
  $region22: #{graph_least_action_net_forward.2} parent=0 // pred_check
    _
  $region23: #{graph_least_action_net_forward.2} parent=0 // pred_check_branch
    %23 = sbr.rel (0) target = $region25
  $region24: #{graph_least_action_net_forward.2} parent=0 // pred_region
    _
  $region25: #{graph_least_action_net_forward.2} parent=0 // pred_fallthru
    _
  // Predicated region
  $region26: #{graph_least_action_net_forward.2} parent=0 // pred_check
    _
  $region27: #{graph_least_action_net_forward.2} parent=0 // pred_check_branch
    %25 = sbr.rel (0) target = $region29
  $region28: #{graph_least_action_net_forward.2} parent=0 // pred_region
    _
  $region29: #{graph_least_action_net_forward.2} parent=0 // pred_fallthru
    _
  %p27 = scmp.eq.s32.totalorder 0, 0
  // Predicated region
  $region30: #{graph_least_action_net_forward.2} parent=0 // pred_check
    %p28 = pneg %p27
  $region31: #{graph_least_action_net_forward.2} parent=0 // pred_check_branch
    %30 = sbr.rel (%p28) target = $region33
  $region32: #{graph_least_action_net_forward.2} parent=0 // pred_region
    %31 = vst [vmem:[#allocation3] sm:$0xff] 0.0
    %32 = vst [vmem:[#allocation3 + $0x8] sm:$0xff] 0.0
    %33 = vst [vmem:[#allocation3 + $0x10] sm:$0xff] 0.0
    %34 = vst [vmem:[#allocation3 + $0x18] sm:$0xff] 0.0
    %35 = vst [vmem:[#allocation3 + $0x20] sm:$0xff] 0.0
    %36 = vst [vmem:[#allocation3 + $0x28] sm:$0xff] 0.0
    %37 = vst [vmem:[#allocation3 + $0x30] sm:$0xff] 0.0
    %38 = vst [vmem:[#allocation3 + $0x38] sm:$0xff] 0.0
    %v39 = vld [vmem:[%s1] sm:$0xff]
    %v40 = vld [vmem:[%s1 + $0x8] sm:$0xff]
    %v41 = vpack.c.bf16 %v40, %v39
    %v43 = vunpack.c.l.b16 %v41
    %v44 = vunpack.c.h.b16 %v41
    %v45 = vpack.c.b16 %v43, %v43
    %v46 = vpack.c.b16 %v44, %v44
    %49 = vst [vmem:[#allocation4 + $0x4] sm:$0xf] %v45
    %50 = vst [vmem:[#allocation4 + $0xc] sm:$0xf] %v46
    %v51 = vld [vmem:[%s0] sm:$0xff]
    %v52 = vld [vmem:[%s0 + $0x8] sm:$0xff]
    %v53 = vpack.c.bf16 %v52, %v51
    %v55 = vunpack.c.l.b16 %v53
    %v56 = vunpack.c.h.b16 %v53
    %v57 = vpack.c.b16 %v55, %v55
    %v58 = vpack.c.b16 %v56, %v56
    %61 = vst [vmem:[#allocation4] sm:$0xf] %v57
    %62 = vst [vmem:[#allocation4 + $0x8] sm:$0xf] %v58
    %v63 = vld [vmem:[#allocation4] sm:$0xff]
    %v64 = vld [vmem:[#allocation4 + $0x8] sm:$0xff]
    %v65 = vld [vmem:[%s3] sm:$0xf]
    %v66 = vld [vmem:[%s3 + $0x4] sm:$0xf]
    %v67 = vld [vmem:[%s3 + $0x8] sm:$0xf]
    %v68 = vld [vmem:[%s3 + $0xc] sm:$0xf]
    %v69 = vld [vmem:[%s3 + $0x10] sm:$0xf]
    %v70 = vld [vmem:[%s3 + $0x14] sm:$0xf]
    %v71 = vld [vmem:[%s3 + $0x18] sm:$0xf]
    %v72 = vld [vmem:[%s3 + $0x1c] sm:$0xf]
    %v73 = vld [vmem:[%s3 + $0x20] sm:$0xf]
    %v74 = vld [vmem:[%s3 + $0x24] sm:$0xf]
    %v75 = vld [vmem:[%s3 + $0x28] sm:$0xf]
    %v76 = vld [vmem:[%s3 + $0x2c] sm:$0xf]
    %v77 = vld [vmem:[%s3 + $0x30] sm:$0xf]
    %v78 = vld [vmem:[%s3 + $0x34] sm:$0xf]
    %v79 = vld [vmem:[%s3 + $0x38] sm:$0xf]
    %v80 = vld [vmem:[%s3 + $0x3c] sm:$0xf]
    %v81 = vld [vmem:[%s3 + $0x40] sm:$0xf]
    %v82 = vld [vmem:[%s3 + $0x44] sm:$0xf]
    %v83 = vld [vmem:[%s3 + $0x48] sm:$0xf]
    %v84 = vld [vmem:[%s3 + $0x4c] sm:$0xf]
    %v85 = vld [vmem:[%s3 + $0x50] sm:$0xf]
    %v86 = vld [vmem:[%s3 + $0x54] sm:$0xf]
    %v87 = vld [vmem:[%s3 + $0x58] sm:$0xf]
    %v88 = vld [vmem:[%s3 + $0x5c] sm:$0xf]
    %v89 = vld [vmem:[%s3 + $0x60] sm:$0xf]
    %v90 = vld [vmem:[%s3 + $0x64] sm:$0xf]
    %v91 = vld [vmem:[%s3 + $0x68] sm:$0xf]
    %v92 = vld [vmem:[%s3 + $0x6c] sm:$0xf]
    %v93 = vld [vmem:[%s3 + $0x70] sm:$0xf]
    %v94 = vld [vmem:[%s3 + $0x74] sm:$0xf]
    %v95 = vld [vmem:[%s3 + $0x78] sm:$0xf]
    %v96 = vld [vmem:[%s3 + $0x7c] sm:$0xf]
    %v99 = vunpack.c.l.b16 %v63
    %v100 = vunpack.c.h.b16 %v63
    %v101 = vunpack.c.l.b16 %v64
    %v102 = vunpack.c.h.b16 %v64
    %v103 = vpack.c.b16 %v101, %v99
    %v104 = vpack.c.b16 %v102, %v100
    %v139 = vunpack.c.l.b16 %v65
    %v140 = vunpack.c.l.b16 %v66
    %v141 = vunpack.c.l.b16 %v67
    %v142 = vunpack.c.l.b16 %v68
    %v143 = vunpack.c.l.b16 %v69
    %v144 = vunpack.c.l.b16 %v70
    %v145 = vunpack.c.l.b16 %v71
    %v146 = vunpack.c.l.b16 %v72
    %v147 = vunpack.c.l.b16 %v73
    %v148 = vunpack.c.l.b16 %v74
    %v149 = vunpack.c.l.b16 %v75
    %v150 = vunpack.c.l.b16 %v76
    %v151 = vunpack.c.l.b16 %v77
    %v152 = vunpack.c.l.b16 %v78
    %v153 = vunpack.c.l.b16 %v79
    %v154 = vunpack.c.l.b16 %v80
    %v155 = vunpack.c.l.b16 %v81
    %v156 = vunpack.c.l.b16 %v82
    %v157 = vunpack.c.l.b16 %v83
    %v158 = vunpack.c.l.b16 %v84
    %v159 = vunpack.c.l.b16 %v85
    %v160 = vunpack.c.l.b16 %v86
    %v161 = vunpack.c.l.b16 %v87
    %v162 = vunpack.c.l.b16 %v88
    %v163 = vunpack.c.l.b16 %v89
    %v164 = vunpack.c.l.b16 %v90
    %v165 = vunpack.c.l.b16 %v91
    %v166 = vunpack.c.l.b16 %v92
    %v167 = vunpack.c.l.b16 %v93
    %v168 = vunpack.c.l.b16 %v94
    %v169 = vunpack.c.l.b16 %v95
    %v170 = vunpack.c.l.b16 %v96
    %v171 = vpack.c.b16 %v140, %v139
    %v172 = vpack.c.b16 %v142, %v141
    %v173 = vpack.c.b16 %v144, %v143
    %v174 = vpack.c.b16 %v146, %v145
    %v175 = vpack.c.b16 %v148, %v147
    %v176 = vpack.c.b16 %v150, %v149
    %v177 = vpack.c.b16 %v152, %v151
    %v178 = vpack.c.b16 %v154, %v153
    %v179 = vpack.c.b16 %v156, %v155
    %v180 = vpack.c.b16 %v158, %v157
    %v181 = vpack.c.b16 %v160, %v159
    %v182 = vpack.c.b16 %v162, %v161
    %v183 = vpack.c.b16 %v164, %v163
    %v184 = vpack.c.b16 %v166, %v165
    %v185 = vpack.c.b16 %v168, %v167
    %v186 = vpack.c.b16 %v170, %v169
    %203 = vmatprep.subr.bf16.mxu0 0
    %204 = vmatpush1.bf16.msra.mxu0 %v178
    %205 = vmatprep.subr.bf16.mxu0 0
    %206 = vmatpush1.bf16.msra.mxu0 %v177
    %207 = vmatprep.subr.bf16.mxu0 0
    %208 = vmatpush1.bf16.msra.mxu0 %v176
    %209 = vmatprep.subr.bf16.mxu0 0
    %210 = vmatpush1.bf16.msra.mxu0 %v175
    %211 = vmatprep.subr.bf16.mxu0 0
    %212 = vmatpush1.bf16.msra.mxu0 %v174
    %213 = vmatprep.subr.bf16.mxu0 0
    %214 = vmatpush1.bf16.msra.mxu0 %v173
    %215 = vmatprep.subr.bf16.mxu0 0
    %216 = vmatpush1.bf16.msra.mxu0 %v172
    %217 = vmatprep.subr.bf16.mxu0 0
    %218 = vmatpush1.bf16.msra.mxu0 %v171
    %219 = vmatprep.subr.bf16.mxu0 0
    %220 = vmatpush2.bf16.msra.mxu0 %v186
    %221 = vmatprep.subr.bf16.mxu0 0
    %222 = vmatpush2.bf16.msra.mxu0 %v185
    %223 = vmatprep.subr.bf16.mxu0 0
    %224 = vmatpush2.bf16.msra.mxu0 %v184
    %225 = vmatprep.subr.bf16.mxu0 0
    %226 = vmatpush2.bf16.msra.mxu0 %v183
    %227 = vmatprep.subr.bf16.mxu0 0
    %228 = vmatpush2.bf16.msra.mxu0 %v182
    %229 = vmatprep.subr.bf16.mxu0 0
    %230 = vmatpush2.bf16.msra.mxu0 %v181
    %231 = vmatprep.subr.bf16.mxu0 0
    %232 = vmatpush2.bf16.msra.mxu0 %v180
    %233 = vmatprep.subr.bf16.mxu0 0
    %234 = vmatpush2.bf16.msra.mxu0 %v179
    %235 = vmatprep.mubr.bf16.mxu0 %v104
    %236 = vmatmul.mubr.bf16.gmra.mxu0 %v103
    %v237 = vpop.f32.mrf.mxu0
    %v238 = vadd.f32 0.0, %v237
    %v239 = vpop.f32.mrf.mxu0
    %v240 = vpop.f32.mrf.mxu0
    %v241 = vadd.f32 0.0, %v240
    %v242 = vpop.f32.mrf.mxu0
    %243 = vdwg.mxu0
    %v244 = vxor.u32 %v238, 2147483648
    %v245 = vxor.u32 %v241, 2147483648
    %v246 = vmul.f32 %v244, 1.442695
    %v247 = vpow.pop %v246
    %v248 = vmul.f32 %v245, 1.442695
    %v249 = vpow.pop %v248
    %v250 = vadd.f32 %v247, 1.0
    %v251 = vadd.f32 %v249, 1.0
    %v252 = vrcp.pop %v250
    %v253 = vmul.f32 1.0, %v252
    %v254 = vrcp.pop %v251
    %v255 = vmul.f32 1.0, %v254
    %v256 = vmul.f32 %v238, %v253
    %v257 = vmul.f32 %v241, %v255
    %v258 = vpack.c.bf16 %v257, %v256
    %v259 = vld [vmem:[%s4] sm:$0xf]
    %v260 = vld [vmem:[%s4 + $0x4] sm:$0xf]
    %v261 = vld [vmem:[%s4 + $0x8] sm:$0xf]
    %v262 = vld [vmem:[%s4 + $0xc] sm:$0xf]
    %v263 = vld [vmem:[%s4 + $0x10] sm:$0xf]
    %v264 = vld [vmem:[%s4 + $0x14] sm:$0xf]
    %v265 = vld [vmem:[%s4 + $0x18] sm:$0xf]
    %v266 = vld [vmem:[%s4 + $0x1c] sm:$0xf]
    %v267 = vld [vmem:[%s4 + $0x20] sm:$0xf]
    %v268 = vld [vmem:[%s4 + $0x24] sm:$0xf]
    %v269 = vld [vmem:[%s4 + $0x28] sm:$0xf]
    %v270 = vld [vmem:[%s4 + $0x2c] sm:$0xf]
    %v271 = vld [vmem:[%s4 + $0x30] sm:$0xf]
    %v272 = vld [vmem:[%s4 + $0x34] sm:$0xf]
    %v273 = vld [vmem:[%s4 + $0x38] sm:$0xf]
    %v274 = vld [vmem:[%s4 + $0x3c] sm:$0xf]
    %v291 = vunpack.c.l.b16 %v259
    %v292 = vunpack.c.l.b16 %v260
    %v293 = vunpack.c.l.b16 %v261
    %v294 = vunpack.c.l.b16 %v262
    %v295 = vunpack.c.l.b16 %v263
    %v296 = vunpack.c.l.b16 %v264
    %v297 = vunpack.c.l.b16 %v265
    %v298 = vunpack.c.l.b16 %v266
    %v299 = vunpack.c.l.b16 %v267
    %v300 = vunpack.c.l.b16 %v268
    %v301 = vunpack.c.l.b16 %v269
    %v302 = vunpack.c.l.b16 %v270
    %v303 = vunpack.c.l.b16 %v271
    %v304 = vunpack.c.l.b16 %v272
    %v305 = vunpack.c.l.b16 %v273
    %v306 = vunpack.c.l.b16 %v274
    %v307 = vpack.c.b16 %v292, %v291
    %v308 = vpack.c.b16 %v294, %v293
    %v309 = vpack.c.b16 %v296, %v295
    %v310 = vpack.c.b16 %v298, %v297
    %v311 = vpack.c.b16 %v300, %v299
    %v312 = vpack.c.b16 %v302, %v301
    %v313 = vpack.c.b16 %v304, %v303
    %v314 = vpack.c.b16 %v306, %v305
    %323 = vmatprep.subr.bf16.mxu0 0
    %324 = vmatpush1.bf16.msra.mxu0 %v314
    %325 = vmatprep.subr.bf16.mxu0 0
    %326 = vmatpush1.bf16.msra.mxu0 %v313
    %327 = vmatprep.subr.bf16.mxu0 0
    %328 = vmatpush1.bf16.msra.mxu0 %v312
    %329 = vmatprep.subr.bf16.mxu0 0
    %330 = vmatpush1.bf16.msra.mxu0 %v311
    %331 = vmatprep.subr.bf16.mxu0 0
    %332 = vmatpush1.bf16.msra.mxu0 %v310
    %333 = vmatprep.subr.bf16.mxu0 0
    %334 = vmatpush1.bf16.msra.mxu0 %v309
    %335 = vmatprep.subr.bf16.mxu0 0
    %336 = vmatpush1.bf16.msra.mxu0 %v308
    %337 = vmatprep.subr.bf16.mxu0 0
    %338 = vmatpush1.bf16.msra.mxu0 %v307
    %339 = vmatprep.subr.bf16.mxu0 0
    %340 = vmatpush2.bf16.msra.mxu0 0
    %341 = vmatprep.subr.bf16.mxu0 0
    %342 = vmatpush2.bf16.msra.mxu0 0
    %343 = vmatprep.subr.bf16.mxu0 0
    %344 = vmatpush2.bf16.msra.mxu0 0
    %345 = vmatprep.subr.bf16.mxu0 0
    %346 = vmatpush2.bf16.msra.mxu0 0
    %347 = vmatprep.subr.bf16.mxu0 0
    %348 = vmatpush2.bf16.msra.mxu0 0
    %349 = vmatprep.subr.bf16.mxu0 0
    %350 = vmatpush2.bf16.msra.mxu0 0
    %351 = vmatprep.subr.bf16.mxu0 0
    %352 = vmatpush2.bf16.msra.mxu0 0
    %353 = vmatprep.subr.bf16.mxu0 0
    %354 = vmatpush2.bf16.msra.mxu0 0
    %355 = vmatprep.mubr.bf16.mxu0 0
    %356 = vmatmul.mubr.bf16.gmra.mxu0 %v258
    %v357 = vpop.f32.mrf.mxu0
    %v358 = vadd.f32 0.0, %v357
    %v359 = vpop.f32.mrf.mxu0
    %v360 = vpop.f32.mrf.mxu0
    %v361 = vadd.f32 0.0, %v360
    %v362 = vpop.f32.mrf.mxu0
    %363 = vdwg.mxu0
    %v364 = vpack.c.bf16 %v361, %v358
    %v366 = vunpack.c.l.b16 %v364
    %v367 = vunpack.c.h.b16 %v364
    %v368 = vpack.c.b16 %v366, %v366
    %v369 = vpack.c.b16 %v367, %v367
    %372 = vst [vmem:[#allocation2] sm:$0xf] %v368
    %373 = vst [vmem:[#allocation2 + $0x4] sm:$0xf] %v369
    %s374 = scalar_lea.vmem %s0, 16
    %v375 = vld [vmem:[%s374] sm:$0xff]
    %v376 = vld [vmem:[%s374 + $0x8] sm:$0xff]
    %v377 = vpack.c.bf16 %v376, %v375
    %v379 = vunpack.c.l.b16 %v377
    %v380 = vunpack.c.h.b16 %v377
    %v381 = vpack.c.b16 %v379, %v379
    %v382 = vpack.c.b16 %v380, %v380
    %385 = vst [vmem:[#allocation4] sm:$0xf] %v381
    %386 = vst [vmem:[#allocation4 + $0x8] sm:$0xf] %v382
    %v387 = vld [vmem:[#allocation4] sm:$0xff]
    %v388 = vld [vmem:[#allocation4 + $0x8] sm:$0xff]
    %s389 = scalar_lea.vmem %s3, 128
    %v390 = vld [vmem:[%s389] sm:$0xf]
    %v391 = vld [vmem:[%s389 + $0x4] sm:$0xf]
    %v392 = vld [vmem:[%s389 + $0x8] sm:$0xf]
    %v393 = vld [vmem:[%s389 + $0xc] sm:$0xf]
    %v394 = vld [vmem:[%s389 + $0x10] sm:$0xf]
    %v395 = vld [vmem:[%s389 + $0x14] sm:$0xf]
    %v396 = vld [vmem:[%s389 + $0x18] sm:$0xf]
    %v397 = vld [vmem:[%s389 + $0x1c] sm:$0xf]
    %v398 = vld [vmem:[%s389 + $0x20] sm:$0xf]
    %v399 = vld [vmem:[%s389 + $0x24] sm:$0xf]
    %v400 = vld [vmem:[%s389 + $0x28] sm:$0xf]
    %v401 = vld [vmem:[%s389 + $0x2c] sm:$0xf]
    %v402 = vld [vmem:[%s389 + $0x30] sm:$0xf]
    %v403 = vld [vmem:[%s389 + $0x34] sm:$0xf]
    %v404 = vld [vmem:[%s389 + $0x38] sm:$0xf]
    %v405 = vld [vmem:[%s389 + $0x3c] sm:$0xf]
    %v406 = vld [vmem:[%s389 + $0x40] sm:$0xf]
    %v407 = vld [vmem:[%s389 + $0x44] sm:$0xf]
    %v408 = vld [vmem:[%s389 + $0x48] sm:$0xf]
    %v409 = vld [vmem:[%s389 + $0x4c] sm:$0xf]
    %v410 = vld [vmem:[%s389 + $0x50] sm:$0xf]
    %v411 = vld [vmem:[%s389 + $0x54] sm:$0xf]
    %v412 = vld [vmem:[%s389 + $0x58] sm:$0xf]
    %v413 = vld [vmem:[%s389 + $0x5c] sm:$0xf]
    %v414 = vld [vmem:[%s389 + $0x60] sm:$0xf]
    %v415 = vld [vmem:[%s389 + $0x64] sm:$0xf]
    %v416 = vld [vmem:[%s389 + $0x68] sm:$0xf]
    %v417 = vld [vmem:[%s389 + $0x6c] sm:$0xf]
    %v418 = vld [vmem:[%s389 + $0x70] sm:$0xf]
    %v419 = vld [vmem:[%s389 + $0x74] sm:$0xf]
    %v420 = vld [vmem:[%s389 + $0x78] sm:$0xf]
    %v421 = vld [vmem:[%s389 + $0x7c] sm:$0xf]
    %v424 = vunpack.c.l.b16 %v387
    %v425 = vunpack.c.h.b16 %v387
    %v426 = vunpack.c.l.b16 %v388
    %v427 = vunpack.c.h.b16 %v388
    %v428 = vpack.c.b16 %v426, %v424
    %v429 = vpack.c.b16 %v427, %v425
    %v464 = vunpack.c.l.b16 %v390
    %v465 = vunpack.c.l.b16 %v391
    %v466 = vunpack.c.l.b16 %v392
    %v467 = vunpack.c.l.b16 %v393
    %v468 = vunpack.c.l.b16 %v394
    %v469 = vunpack.c.l.b16 %v395
    %v470 = vunpack.c.l.b16 %v396
    %v471 = vunpack.c.l.b16 %v397
    %v472 = vunpack.c.l.b16 %v398
    %v473 = vunpack.c.l.b16 %v399
    %v474 = vunpack.c.l.b16 %v400
    %v475 = vunpack.c.l.b16 %v401
    %v476 = vunpack.c.l.b16 %v402
    %v477 = vunpack.c.l.b16 %v403
    %v478 = vunpack.c.l.b16 %v404
    %v479 = vunpack.c.l.b16 %v405
    %v480 = vunpack.c.l.b16 %v406
    %v481 = vunpack.c.l.b16 %v407
    %v482 = vunpack.c.l.b16 %v408
    %v483 = vunpack.c.l.b16 %v409
    %v484 = vunpack.c.l.b16 %v410
    %v485 = vunpack.c.l.b16 %v411
    %v486 = vunpack.c.l.b16 %v412
    %v487 = vunpack.c.l.b16 %v413
    %v488 = vunpack.c.l.b16 %v414
    %v489 = vunpack.c.l.b16 %v415
    %v490 = vunpack.c.l.b16 %v416
    %v491 = vunpack.c.l.b16 %v417
    %v492 = vunpack.c.l.b16 %v418
    %v493 = vunpack.c.l.b16 %v419
    %v494 = vunpack.c.l.b16 %v420
    %v495 = vunpack.c.l.b16 %v421
    %v496 = vpack.c.b16 %v465, %v464
    %v497 = vpack.c.b16 %v467, %v466
    %v498 = vpack.c.b16 %v469, %v468
    %v499 = vpack.c.b16 %v471, %v470
    %v500 = vpack.c.b16 %v473, %v472
    %v501 = vpack.c.b16 %v475, %v474
    %v502 = vpack.c.b16 %v477, %v476
    %v503 = vpack.c.b16 %v479, %v478
    %v504 = vpack.c.b16 %v481, %v480
    %v505 = vpack.c.b16 %v483, %v482
    %v506 = vpack.c.b16 %v485, %v484
    %v507 = vpack.c.b16 %v487, %v486
    %v508 = vpack.c.b16 %v489, %v488
    %v509 = vpack.c.b16 %v491, %v490
    %v510 = vpack.c.b16 %v493, %v492
    %v511 = vpack.c.b16 %v495, %v494
    %528 = vmatprep.subr.bf16.mxu0 0
    %529 = vmatpush1.bf16.msra.mxu0 %v503
    %530 = vmatprep.subr.bf16.mxu0 0
    %531 = vmatpush1.bf16.msra.mxu0 %v502
    %532 = vmatprep.subr.bf16.mxu0 0
    %533 = vmatpush1.bf16.msra.mxu0 %v501
    %534 = vmatprep.subr.bf16.mxu0 0
    %535 = vmatpush1.bf16.msra.mxu0 %v500
    %536 = vmatprep.subr.bf16.mxu0 0
    %537 = vmatpush1.bf16.msra.mxu0 %v499
    %538 = vmatprep.subr.bf16.mxu0 0
    %539 = vmatpush1.bf16.msra.mxu0 %v498
    %540 = vmatprep.subr.bf16.mxu0 0
    %541 = vmatpush1.bf16.msra.mxu0 %v497
    %542 = vmatprep.subr.bf16.mxu0 0
    %543 = vmatpush1.bf16.msra.mxu0 %v496
    %544 = vmatprep.subr.bf16.mxu0 0
    %545 = vmatpush2.bf16.msra.mxu0 %v511
    %546 = vmatprep.subr.bf16.mxu0 0
    %547 = vmatpush2.bf16.msra.mxu0 %v510
    %548 = vmatprep.subr.bf16.mxu0 0
    %549 = vmatpush2.bf16.msra.mxu0 %v509
    %550 = vmatprep.subr.bf16.mxu0 0
    %551 = vmatpush2.bf16.msra.mxu0 %v508
    %552 = vmatprep.subr.bf16.mxu0 0
    %553 = vmatpush2.bf16.msra.mxu0 %v507
    %554 = vmatprep.subr.bf16.mxu0 0
    %555 = vmatpush2.bf16.msra.mxu0 %v506
    %556 = vmatprep.subr.bf16.mxu0 0
    %557 = vmatpush2.bf16.msra.mxu0 %v505
    %558 = vmatprep.subr.bf16.mxu0 0
    %559 = vmatpush2.bf16.msra.mxu0 %v504
    %560 = vmatprep.mubr.bf16.mxu0 %v429
    %561 = vmatmul.mubr.bf16.gmra.mxu0 %v428
    %v562 = vpop.f32.mrf.mxu0
    %v563 = vadd.f32 0.0, %v562
    %v564 = vpop.f32.mrf.mxu0
    %v565 = vpop.f32.mrf.mxu0
    %v566 = vadd.f32 0.0, %v565
    %v567 = vpop.f32.mrf.mxu0
    %568 = vdwg.mxu0
    %v569 = vxor.u32 %v563, 2147483648
    %v570 = vxor.u32 %v566, 2147483648
    %v571 = vmul.f32 %v569, 1.442695
    %v572 = vpow.pop %v571
    %v573 = vmul.f32 %v570, 1.442695
    %v574 = vpow.pop %v573
    %v575 = vadd.f32 %v572, 1.0
    %v576 = vadd.f32 %v574, 1.0
    %v577 = vrcp.pop %v575
    %v578 = vmul.f32 1.0, %v577
    %v579 = vrcp.pop %v576
    %v580 = vmul.f32 1.0, %v579
    %v581 = vmul.f32 %v563, %v578
    %v582 = vmul.f32 %v566, %v580
    %v583 = vpack.c.bf16 %v582, %v581
    %s584 = scalar_lea.vmem %s4, 128
    %v585 = vld [vmem:[%s584] sm:$0xf]
    %v586 = vld [vmem:[%s584 + $0x4] sm:$0xf]
    %v587 = vld [vmem:[%s584 + $0x8] sm:$0xf]
    %v588 = vld [vmem:[%s584 + $0xc] sm:$0xf]
    %v589 = vld [vmem:[%s584 + $0x10] sm:$0xf]
    %v590 = vld [vmem:[%s584 + $0x14] sm:$0xf]
    %v591 = vld [vmem:[%s584 + $0x18] sm:$0xf]
    %v592 = vld [vmem:[%s584 + $0x1c] sm:$0xf]
    %v593 = vld [vmem:[%s584 + $0x20] sm:$0xf]
    %v594 = vld [vmem:[%s584 + $0x24] sm:$0xf]
    %v595 = vld [vmem:[%s584 + $0x28] sm:$0xf]
    %v596 = vld [vmem:[%s584 + $0x2c] sm:$0xf]
    %v597 = vld [vmem:[%s584 + $0x30] sm:$0xf]
    %v598 = vld [vmem:[%s584 + $0x34] sm:$0xf]
    %v599 = vld [vmem:[%s584 + $0x38] sm:$0xf]
    %v600 = vld [vmem:[%s584 + $0x3c] sm:$0xf]
    %v617 = vunpack.c.l.b16 %v585
    %v618 = vunpack.c.l.b16 %v586
    %v619 = vunpack.c.l.b16 %v587
    %v620 = vunpack.c.l.b16 %v588
    %v621 = vunpack.c.l.b16 %v589
    %v622 = vunpack.c.l.b16 %v590
    %v623 = vunpack.c.l.b16 %v591
    %v624 = vunpack.c.l.b16 %v592
    %v625 = vunpack.c.l.b16 %v593
    %v626 = vunpack.c.l.b16 %v594
    %v627 = vunpack.c.l.b16 %v595
    %v628 = vunpack.c.l.b16 %v596
    %v629 = vunpack.c.l.b16 %v597
    %v630 = vunpack.c.l.b16 %v598
    %v631 = vunpack.c.l.b16 %v599
    %v632 = vunpack.c.l.b16 %v600
    %v633 = vpack.c.b16 %v618, %v617
    %v634 = vpack.c.b16 %v620, %v619
    %v635 = vpack.c.b16 %v622, %v621
    %v636 = vpack.c.b16 %v624, %v623
    %v637 = vpack.c.b16 %v626, %v625
    %v638 = vpack.c.b16 %v628, %v627
    %v639 = vpack.c.b16 %v630, %v629
    %v640 = vpack.c.b16 %v632, %v631
    %649 = vmatprep.subr.bf16.mxu0 0
    %650 = vmatpush1.bf16.msra.mxu0 %v640
    %651 = vmatprep.subr.bf16.mxu0 0
    %652 = vmatpush1.bf16.msra.mxu0 %v639
    %653 = vmatprep.subr.bf16.mxu0 0
    %654 = vmatpush1.bf16.msra.mxu0 %v638
    %655 = vmatprep.subr.bf16.mxu0 0
    %656 = vmatpush1.bf16.msra.mxu0 %v637
    %657 = vmatprep.subr.bf16.mxu0 0
    %658 = vmatpush1.bf16.msra.mxu0 %v636
    %659 = vmatprep.subr.bf16.mxu0 0
    %660 = vmatpush1.bf16.msra.mxu0 %v635
    %661 = vmatprep.subr.bf16.mxu0 0
    %662 = vmatpush1.bf16.msra.mxu0 %v634
    %663 = vmatprep.subr.bf16.mxu0 0
    %664 = vmatpush1.bf16.msra.mxu0 %v633
    %665 = vmatprep.subr.bf16.mxu0 0
    %666 = vmatpush2.bf16.msra.mxu0 0
    %667 = vmatprep.subr.bf16.mxu0 0
    %668 = vmatpush2.bf16.msra.mxu0 0
    %669 = vmatprep.subr.bf16.mxu0 0
    %670 = vmatpush2.bf16.msra.mxu0 0
    %671 = vmatprep.subr.bf16.mxu0 0
    %672 = vmatpush2.bf16.msra.mxu0 0
    %673 = vmatprep.subr.bf16.mxu0 0
    %674 = vmatpush2.bf16.msra.mxu0 0
    %675 = vmatprep.subr.bf16.mxu0 0
    %676 = vmatpush2.bf16.msra.mxu0 0
    %677 = vmatprep.subr.bf16.mxu0 0
    %678 = vmatpush2.bf16.msra.mxu0 0
    %679 = vmatprep.subr.bf16.mxu0 0
    %680 = vmatpush2.bf16.msra.mxu0 0
    %681 = vmatprep.mubr.bf16.mxu0 0
    %682 = vmatmul.mubr.bf16.gmra.mxu0 %v583
    %v683 = vpop.f32.mrf.mxu0
    %v684 = vadd.f32 0.0, %v683
    %v685 = vpop.f32.mrf.mxu0
    %v686 = vpop.f32.mrf.mxu0
    %v687 = vadd.f32 0.0, %v686
    %v688 = vpop.f32.mrf.mxu0
    %689 = vdwg.mxu0
    %v690 = vpack.c.bf16 %v687, %v684
    %v692 = vunpack.c.l.b16 %v690
    %v693 = vunpack.c.h.b16 %v690
    %v694 = vpack.c.b16 %v692, %v692
    %v695 = vpack.c.b16 %v693, %v693
    %s698 = scalar_lea.vmem [#allocation2], 8
    %699 = vst [vmem:[%s698] sm:$0xf] %v694
    %700 = vst [vmem:[%s698 + $0x4] sm:$0xf] %v695
    %s701 = scalar_lea.vmem %s0, 32
    %v702 = vld [vmem:[%s701] sm:$0xff]
    %v703 = vld [vmem:[%s701 + $0x8] sm:$0xff]
    %v704 = vpack.c.bf16 %v703, %v702
    %v706 = vunpack.c.l.b16 %v704
    %v707 = vunpack.c.h.b16 %v704
    %v708 = vpack.c.b16 %v706, %v706
    %v709 = vpack.c.b16 %v707, %v707
    %712 = vst [vmem:[#allocation4] sm:$0xf] %v708
    %713 = vst [vmem:[#allocation4 + $0x8] sm:$0xf] %v709
    %v714 = vld [vmem:[#allocation4] sm:$0xff]
    %v715 = vld [vmem:[#allocation4 + $0x8] sm:$0xff]
    %s716 = scalar_lea.vmem %s3, 256
    %v717 = vld [vmem:[%s716] sm:$0xf]
    %v718 = vld [vmem:[%s716 + $0x4] sm:$0xf]
    %v719 = vld [vmem:[%s716 + $0x8] sm:$0xf]
    %v720 = vld [vmem:[%s716 + $0xc] sm:$0xf]
    %v721 = vld [vmem:[%s716 + $0x10] sm:$0xf]
    %v722 = vld [vmem:[%s716 + $0x14] sm:$0xf]
    %v723 = vld [vmem:[%s716 + $0x18] sm:$0xf]
    %v724 = vld [vmem:[%s716 + $0x1c] sm:$0xf]
    %v725 = vld [vmem:[%s716 + $0x20] sm:$0xf]
    %v726 = vld [vmem:[%s716 + $0x24] sm:$0xf]
    %v727 = vld [vmem:[%s716 + $0x28] sm:$0xf]
    %v728 = vld [vmem:[%s716 + $0x2c] sm:$0xf]
    %v729 = vld [vmem:[%s716 + $0x30] sm:$0xf]
    %v730 = vld [vmem:[%s716 + $0x34] sm:$0xf]
    %v731 = vld [vmem:[%s716 + $0x38] sm:$0xf]
    %v732 = vld [vmem:[%s716 + $0x3c] sm:$0xf]
    %v733 = vld [vmem:[%s716 + $0x40] sm:$0xf]
    %v734 = vld [vmem:[%s716 + $0x44] sm:$0xf]
    %v735 = vld [vmem:[%s716 + $0x48] sm:$0xf]
    %v736 = vld [vmem:[%s716 + $0x4c] sm:$0xf]
    %v737 = vld [vmem:[%s716 + $0x50] sm:$0xf]
    %v738 = vld [vmem:[%s716 + $0x54] sm:$0xf]
    %v739 = vld [vmem:[%s716 + $0x58] sm:$0xf]
    %v740 = vld [vmem:[%s716 + $0x5c] sm:$0xf]
    %v741 = vld [vmem:[%s716 + $0x60] sm:$0xf]
    %v742 = vld [vmem:[%s716 + $0x64] sm:$0xf]
    %v743 = vld [vmem:[%s716 + $0x68] sm:$0xf]
    %v744 = vld [vmem:[%s716 + $0x6c] sm:$0xf]
    %v745 = vld [vmem:[%s716 + $0x70] sm:$0xf]
    %v746 = vld [vmem:[%s716 + $0x74] sm:$0xf]
    %v747 = vld [vmem:[%s716 + $0x78] sm:$0xf]
    %v748 = vld [vmem:[%s716 + $0x7c] sm:$0xf]
    %v751 = vunpack.c.l.b16 %v714
    %v752 = vunpack.c.h.b16 %v714
    %v753 = vunpack.c.l.b16 %v715
    %v754 = vunpack.c.h.b16 %v715
    %v755 = vpack.c.b16 %v753, %v751
    %v756 = vpack.c.b16 %v754, %v752
    %v791 = vunpack.c.l.b16 %v717
    %v792 = vunpack.c.l.b16 %v718
    %v793 = vunpack.c.l.b16 %v719
    %v794 = vunpack.c.l.b16 %v720
    %v795 = vunpack.c.l.b16 %v721
    %v796 = vunpack.c.l.b16 %v722
    %v797 = vunpack.c.l.b16 %v723
    %v798 = vunpack.c.l.b16 %v724
    %v799 = vunpack.c.l.b16 %v725
    %v800 = vunpack.c.l.b16 %v726
    %v801 = vunpack.c.l.b16 %v727
    %v802 = vunpack.c.l.b16 %v728
    %v803 = vunpack.c.l.b16 %v729
    %v804 = vunpack.c.l.b16 %v730
    %v805 = vunpack.c.l.b16 %v731
    %v806 = vunpack.c.l.b16 %v732
    %v807 = vunpack.c.l.b16 %v733
    %v808 = vunpack.c.l.b16 %v734
    %v809 = vunpack.c.l.b16 %v735
    %v810 = vunpack.c.l.b16 %v736
    %v811 = vunpack.c.l.b16 %v737
    %v812 = vunpack.c.l.b16 %v738
    %v813 = vunpack.c.l.b16 %v739
    %v814 = vunpack.c.l.b16 %v740
    %v815 = vunpack.c.l.b16 %v741
    %v816 = vunpack.c.l.b16 %v742
    %v817 = vunpack.c.l.b16 %v743
    %v818 = vunpack.c.l.b16 %v744
    %v819 = vunpack.c.l.b16 %v745
    %v820 = vunpack.c.l.b16 %v746
    %v821 = vunpack.c.l.b16 %v747
    %v822 = vunpack.c.l.b16 %v748
    %v823 = vpack.c.b16 %v792, %v791
    %v824 = vpack.c.b16 %v794, %v793
    %v825 = vpack.c.b16 %v796, %v795
    %v826 = vpack.c.b16 %v798, %v797
    %v827 = vpack.c.b16 %v800, %v799
    %v828 = vpack.c.b16 %v802, %v801
    %v829 = vpack.c.b16 %v804, %v803
    %v830 = vpack.c.b16 %v806, %v805
    %v831 = vpack.c.b16 %v808, %v807
    %v832 = vpack.c.b16 %v810, %v809
    %v833 = vpack.c.b16 %v812, %v811
    %v834 = vpack.c.b16 %v814, %v813
    %v835 = vpack.c.b16 %v816, %v815
    %v836 = vpack.c.b16 %v818, %v817
    %v837 = vpack.c.b16 %v820, %v819
    %v838 = vpack.c.b16 %v822, %v821
    %855 = vmatprep.subr.bf16.mxu0 0
    %856 = vmatpush1.bf16.msra.mxu0 %v830
    %857 = vmatprep.subr.bf16.mxu0 0
    %858 = vmatpush1.bf16.msra.mxu0 %v829
    %859 = vmatprep.subr.bf16.mxu0 0
    %860 = vmatpush1.bf16.msra.mxu0 %v828
    %861 = vmatprep.subr.bf16.mxu0 0
    %862 = vmatpush1.bf16.msra.mxu0 %v827
    %863 = vmatprep.subr.bf16.mxu0 0
    %864 = vmatpush1.bf16.msra.mxu0 %v826
    %865 = vmatprep.subr.bf16.mxu0 0
    %866 = vmatpush1.bf16.msra.mxu0 %v825
    %867 = vmatprep.subr.bf16.mxu0 0
    %868 = vmatpush1.bf16.msra.mxu0 %v824
    %869 = vmatprep.subr.bf16.mxu0 0
    %870 = vmatpush1.bf16.msra.mxu0 %v823
    %871 = vmatprep.subr.bf16.mxu0 0
    %872 = vmatpush2.bf16.msra.mxu0 %v838
    %873 = vmatprep.subr.bf16.mxu0 0
    %874 = vmatpush2.bf16.msra.mxu0 %v837
    %875 = vmatprep.subr.bf16.mxu0 0
    %876 = vmatpush2.bf16.msra.mxu0 %v836
    %877 = vmatprep.subr.bf16.mxu0 0
    %878 = vmatpush2.bf16.msra.mxu0 %v835
    %879 = vmatprep.subr.bf16.mxu0 0
    %880 = vmatpush2.bf16.msra.mxu0 %v834
    %881 = vmatprep.subr.bf16.mxu0 0
    %882 = vmatpush2.bf16.msra.mxu0 %v833
    %883 = vmatprep.subr.bf16.mxu0 0
    %884 = vmatpush2.bf16.msra.mxu0 %v832
    %885 = vmatprep.subr.bf16.mxu0 0
    %886 = vmatpush2.bf16.msra.mxu0 %v831
    %887 = vmatprep.mubr.bf16.mxu0 %v756
    %888 = vmatmul.mubr.bf16.gmra.mxu0 %v755
    %v889 = vpop.f32.mrf.mxu0
    %v890 = vadd.f32 0.0, %v889
    %v891 = vpop.f32.mrf.mxu0
    %v892 = vpop.f32.mrf.mxu0
    %v893 = vadd.f32 0.0, %v892
    %v894 = vpop.f32.mrf.mxu0
    %895 = vdwg.mxu0
    %v896 = vxor.u32 %v890, 2147483648
    %v897 = vxor.u32 %v893, 2147483648
    %v898 = vmul.f32 %v896, 1.442695
    %v899 = vpow.pop %v898
    %v900 = vmul.f32 %v897, 1.442695
    %v901 = vpow.pop %v900
    %v902 = vadd.f32 %v899, 1.0
    %v903 = vadd.f32 %v901, 1.0
    %v904 = vrcp.pop %v902
    %v905 = vmul.f32 1.0, %v904
    %v906 = vrcp.pop %v903
    %v907 = vmul.f32 1.0, %v906
    %v908 = vmul.f32 %v890, %v905
    %v909 = vmul.f32 %v893, %v907
    %v910 = vpack.c.bf16 %v909, %v908
    %s911 = scalar_lea.vmem %s4, 256
    %v912 = vld [vmem:[%s911] sm:$0xf]
    %v913 = vld [vmem:[%s911 + $0x4] sm:$0xf]
    %v914 = vld [vmem:[%s911 + $0x8] sm:$0xf]
    %v915 = vld [vmem:[%s911 + $0xc] sm:$0xf]
    %v916 = vld [vmem:[%s911 + $0x10] sm:$0xf]
    %v917 = vld [vmem:[%s911 + $0x14] sm:$0xf]
    %v918 = vld [vmem:[%s911 + $0x18] sm:$0xf]
    %v919 = vld [vmem:[%s911 + $0x1c] sm:$0xf]
    %v920 = vld [vmem:[%s911 + $0x20] sm:$0xf]
    %v921 = vld [vmem:[%s911 + $0x24] sm:$0xf]
    %v922 = vld [vmem:[%s911 + $0x28] sm:$0xf]
    %v923 = vld [vmem:[%s911 + $0x2c] sm:$0xf]
    %v924 = vld [vmem:[%s911 + $0x30] sm:$0xf]
    %v925 = vld [vmem:[%s911 + $0x34] sm:$0xf]
    %v926 = vld [vmem:[%s911 + $0x38] sm:$0xf]
    %v927 = vld [vmem:[%s911 + $0x3c] sm:$0xf]
    %v944 = vunpack.c.l.b16 %v912
    %v945 = vunpack.c.l.b16 %v913
    %v946 = vunpack.c.l.b16 %v914
    %v947 = vunpack.c.l.b16 %v915
    %v948 = vunpack.c.l.b16 %v916
    %v949 = vunpack.c.l.b16 %v917
    %v950 = vunpack.c.l.b16 %v918
    %v951 = vunpack.c.l.b16 %v919
    %v952 = vunpack.c.l.b16 %v920
    %v953 = vunpack.c.l.b16 %v921
    %v954 = vunpack.c.l.b16 %v922
    %v955 = vunpack.c.l.b16 %v923
    %v956 = vunpack.c.l.b16 %v924
    %v957 = vunpack.c.l.b16 %v925
    %v958 = vunpack.c.l.b16 %v926
    %v959 = vunpack.c.l.b16 %v927
    %v960 = vpack.c.b16 %v945, %v944
    %v961 = vpack.c.b16 %v947, %v946
    %v962 = vpack.c.b16 %v949, %v948
    %v963 = vpack.c.b16 %v951, %v950
    %v964 = vpack.c.b16 %v953, %v952
    %v965 = vpack.c.b16 %v955, %v954
    %v966 = vpack.c.b16 %v957, %v956
    %v967 = vpack.c.b16 %v959, %v958
    %976 = vmatprep.subr.bf16.mxu0 0
    %977 = vmatpush1.bf16.msra.mxu0 %v967
    %978 = vmatprep.subr.bf16.mxu0 0
    %979 = vmatpush1.bf16.msra.mxu0 %v966
    %980 = vmatprep.subr.bf16.mxu0 0
    %981 = vmatpush1.bf16.msra.mxu0 %v965
    %982 = vmatprep.subr.bf16.mxu0 0
    %983 = vmatpush1.bf16.msra.mxu0 %v964
    %984 = vmatprep.subr.bf16.mxu0 0
    %985 = vmatpush1.bf16.msra.mxu0 %v963
    %986 = vmatprep.subr.bf16.mxu0 0
    %987 = vmatpush1.bf16.msra.mxu0 %v962
    %988 = vmatprep.subr.bf16.mxu0 0
    %989 = vmatpush1.bf16.msra.mxu0 %v961
    %990 = vmatprep.subr.bf16.mxu0 0
    %991 = vmatpush1.bf16.msra.mxu0 %v960
    %992 = vmatprep.subr.bf16.mxu0 0
    %993 = vmatpush2.bf16.msra.mxu0 0
    %994 = vmatprep.subr.bf16.mxu0 0
    %995 = vmatpush2.bf16.msra.mxu0 0
    %996 = vmatprep.subr.bf16.mxu0 0
    %997 = vmatpush2.bf16.msra.mxu0 0
    %998 = vmatprep.subr.bf16.mxu0 0
    %999 = vmatpush2.bf16.msra.mxu0 0
    %1000 = vmatprep.subr.bf16.mxu0 0
    %1001 = vmatpush2.bf16.msra.mxu0 0
    %1002 = vmatprep.subr.bf16.mxu0 0
    %1003 = vmatpush2.bf16.msra.mxu0 0
    %1004 = vmatprep.subr.bf16.mxu0 0
    %1005 = vmatpush2.bf16.msra.mxu0 0
    %1006 = vmatprep.subr.bf16.mxu0 0
    %1007 = vmatpush2.bf16.msra.mxu0 0
    %1008 = vmatprep.mubr.bf16.mxu0 0
    %1009 = vmatmul.mubr.bf16.gmra.mxu0 %v910
    %v1010 = vpop.f32.mrf.mxu0
    %v1011 = vadd.f32 0.0, %v1010
    %v1012 = vpop.f32.mrf.mxu0
    %v1013 = vpop.f32.mrf.mxu0
    %v1014 = vadd.f32 0.0, %v1013
    %v1015 = vpop.f32.mrf.mxu0
    %1016 = vdwg.mxu0
    %v1017 = vpack.c.bf16 %v1014, %v1011
    %v1019 = vunpack.c.l.b16 %v1017
    %v1020 = vunpack.c.h.b16 %v1017
    %v1021 = vpack.c.b16 %v1019, %v1019
    %v1022 = vpack.c.b16 %v1020, %v1020
    %s1025 = scalar_lea.vmem [#allocation2], 16
    %1026 = vst [vmem:[%s1025] sm:$0xf] %v1021
    %1027 = vst [vmem:[%s1025 + $0x4] sm:$0xf] %v1022
    %s1028 = scalar_lea.vmem %s0, 48
    %v1029 = vld [vmem:[%s1028] sm:$0xff]
    %v1030 = vld [vmem:[%s1028 + $0x8] sm:$0xff]
    %v1031 = vpack.c.bf16 %v1030, %v1029
    %v1033 = vunpack.c.l.b16 %v1031
    %v1034 = vunpack.c.h.b16 %v1031
    %v1035 = vpack.c.b16 %v1033, %v1033
    %v1036 = vpack.c.b16 %v1034, %v1034
    %1039 = vst [vmem:[#allocation4] sm:$0xf] %v1035
    %1040 = vst [vmem:[#allocation4 + $0x8] sm:$0xf] %v1036
    %v1041 = vld [vmem:[#allocation4] sm:$0xff]
    %v1042 = vld [vmem:[#allocation4 + $0x8] sm:$0xff]
    %s1043 = scalar_lea.vmem %s3, 384
    %v1044 = vld [vmem:[%s1043] sm:$0xf]
    %v1045 = vld [vmem:[%s1043 + $0x4] sm:$0xf]
    %v1046 = vld [vmem:[%s1043 + $0x8] sm:$0xf]
    %v1047 = vld [vmem:[%s1043 + $0xc] sm:$0xf]
    %v1048 = vld [vmem:[%s1043 + $0x10] sm:$0xf]
    %v1049 = vld [vmem:[%s1043 + $0x14] sm:$0xf]
    %v1050 = vld [vmem:[%s1043 + $0x18] sm:$0xf]
    %v1051 = vld [vmem:[%s1043 + $0x1c] sm:$0xf]
    %v1052 = vld [vmem:[%s1043 + $0x20] sm:$0xf]
    %v1053 = vld [vmem:[%s1043 + $0x24] sm:$0xf]
    %v1054 = vld [vmem:[%s1043 + $0x28] sm:$0xf]
    %v1055 = vld [vmem:[%s1043 + $0x2c] sm:$0xf]
    %v1056 = vld [vmem:[%s1043 + $0x30] sm:$0xf]
    %v1057 = vld [vmem:[%s1043 + $0x34] sm:$0xf]
    %v1058 = vld [vmem:[%s1043 + $0x38] sm:$0xf]
    %v1059 = vld [vmem:[%s1043 + $0x3c] sm:$0xf]
    %v1060 = vld [vmem:[%s1043 + $0x40] sm:$0xf]
    %v1061 = vld [vmem:[%s1043 + $0x44] sm:$0xf]
    %v1062 = vld [vmem:[%s1043 + $0x48] sm:$0xf]
    %v1063 = vld [vmem:[%s1043 + $0x4c] sm:$0xf]
    %v1064 = vld [vmem:[%s1043 + $0x50] sm:$0xf]
    %v1065 = vld [vmem:[%s1043 + $0x54] sm:$0xf]
    %v1066 = vld [vmem:[%s1043 + $0x58] sm:$0xf]
    %v1067 = vld [vmem:[%s1043 + $0x5c] sm:$0xf]
    %v1068 = vld [vmem:[%s1043 + $0x60] sm:$0xf]
    %v1069 = vld [vmem:[%s1043 + $0x64] sm:$0xf]
    %v1070 = vld [vmem:[%s1043 + $0x68] sm:$0xf]
    %v1071 = vld [vmem:[%s1043 + $0x6c] sm:$0xf]
    %v1072 = vld [vmem:[%s1043 + $0x70] sm:$0xf]
    %v1073 = vld [vmem:[%s1043 + $0x74] sm:$0xf]
    %v1074 = vld [vmem:[%s1043 + $0x78] sm:$0xf]
    %v1075 = vld [vmem:[%s1043 + $0x7c] sm:$0xf]
    %v1078 = vunpack.c.l.b16 %v1041
    %v1079 = vunpack.c.h.b16 %v1041
    %v1080 = vunpack.c.l.b16 %v1042
    %v1081 = vunpack.c.h.b16 %v1042
    %v1082 = vpack.c.b16 %v1080, %v1078
    %v1083 = vpack.c.b16 %v1081, %v1079
    %v1118 = vunpack.c.l.b16 %v1044
    %v1119 = vunpack.c.l.b16 %v1045
    %v1120 = vunpack.c.l.b16 %v1046
    %v1121 = vunpack.c.l.b16 %v1047
    %v1122 = vunpack.c.l.b16 %v1048
    %v1123 = vunpack.c.l.b16 %v1049
    %v1124 = vunpack.c.l.b16 %v1050
    %v1125 = vunpack.c.l.b16 %v1051
    %v1126 = vunpack.c.l.b16 %v1052
    %v1127 = vunpack.c.l.b16 %v1053
    %v1128 = vunpack.c.l.b16 %v1054
    %v1129 = vunpack.c.l.b16 %v1055
    %v1130 = vunpack.c.l.b16 %v1056
    %v1131 = vunpack.c.l.b16 %v1057
    %v1132 = vunpack.c.l.b16 %v1058
    %v1133 = vunpack.c.l.b16 %v1059
    %v1134 = vunpack.c.l.b16 %v1060
    %v1135 = vunpack.c.l.b16 %v1061
    %v1136 = vunpack.c.l.b16 %v1062
    %v1137 = vunpack.c.l.b16 %v1063
    %v1138 = vunpack.c.l.b16 %v1064
    %v1139 = vunpack.c.l.b16 %v1065
    %v1140 = vunpack.c.l.b16 %v1066
    %v1141 = vunpack.c.l.b16 %v1067
    %v1142 = vunpack.c.l.b16 %v1068
    %v1143 = vunpack.c.l.b16 %v1069
    %v1144 = vunpack.c.l.b16 %v1070
    %v1145 = vunpack.c.l.b16 %v1071
    %v1146 = vunpack.c.l.b16 %v1072
    %v1147 = vunpack.c.l.b16 %v1073
    %v1148 = vunpack.c.l.b16 %v1074
    %v1149 = vunpack.c.l.b16 %v1075
    %v1150 = vpack.c.b16 %v1119, %v1118
    %v1151 = vpack.c.b16 %v1121, %v1120
    %v1152 = vpack.c.b16 %v1123, %v1122
    %v1153 = vpack.c.b16 %v1125, %v1124
    %v1154 = vpack.c.b16 %v1127, %v1126
    %v1155 = vpack.c.b16 %v1129, %v1128
    %v1156 = vpack.c.b16 %v1131, %v1130
    %v1157 = vpack.c.b16 %v1133, %v1132
    %v1158 = vpack.c.b16 %v1135, %v1134
    %v1159 = vpack.c.b16 %v1137, %v1136
    %v1160 = vpack.c.b16 %v1139, %v1138
    %v1161 = vpack.c.b16 %v1141, %v1140
    %v1162 = vpack.c.b16 %v1143, %v1142
    %v1163 = vpack.c.b16 %v1145, %v1144
    %v1164 = vpack.c.b16 %v1147, %v1146
    %v1165 = vpack.c.b16 %v1149, %v1148
    %1182 = vmatprep.subr.bf16.mxu0 0
    %1183 = vmatpush1.bf16.msra.mxu0 %v1157
    %1184 = vmatprep.subr.bf16.mxu0 0
    %1185 = vmatpush1.bf16.msra.mxu0 %v1156
    %1186 = vmatprep.subr.bf16.mxu0 0
    %1187 = vmatpush1.bf16.msra.mxu0 %v1155
    %1188 = vmatprep.subr.bf16.mxu0 0
    %1189 = vmatpush1.bf16.msra.mxu0 %v1154
    %1190 = vmatprep.subr.bf16.mxu0 0
    %1191 = vmatpush1.bf16.msra.mxu0 %v1153
    %1192 = vmatprep.subr.bf16.mxu0 0
    %1193 = vmatpush1.bf16.msra.mxu0 %v1152
    %1194 = vmatprep.subr.bf16.mxu0 0
    %1195 = vmatpush1.bf16.msra.mxu0 %v1151
    %1196 = vmatprep.subr.bf16.mxu0 0
    %1197 = vmatpush1.bf16.msra.mxu0 %v1150
    %1198 = vmatprep.subr.bf16.mxu0 0
    %1199 = vmatpush2.bf16.msra.mxu0 %v1165
    %1200 = vmatprep.subr.bf16.mxu0 0
    %1201 = vmatpush2.bf16.msra.mxu0 %v1164
    %1202 = vmatprep.subr.bf16.mxu0 0
    %1203 = vmatpush2.bf16.msra.mxu0 %v1163
    %1204 = vmatprep.subr.bf16.mxu0 0
    %1205 = vmatpush2.bf16.msra.mxu0 %v1162
    %1206 = vmatprep.subr.bf16.mxu0 0
    %1207 = vmatpush2.bf16.msra.mxu0 %v1161
    %1208 = vmatprep.subr.bf16.mxu0 0
    %1209 = vmatpush2.bf16.msra.mxu0 %v1160
    %1210 = vmatprep.subr.bf16.mxu0 0
    %1211 = vmatpush2.bf16.msra.mxu0 %v1159
    %1212 = vmatprep.subr.bf16.mxu0 0
    %1213 = vmatpush2.bf16.msra.mxu0 %v1158
    %1214 = vmatprep.mubr.bf16.mxu0 %v1083
    %1215 = vmatmul.mubr.bf16.gmra.mxu0 %v1082
    %v1216 = vpop.f32.mrf.mxu0
    %v1217 = vadd.f32 0.0, %v1216
    %v1218 = vpop.f32.mrf.mxu0
    %v1219 = vpop.f32.mrf.mxu0
    %v1220 = vadd.f32 0.0, %v1219
    %v1221 = vpop.f32.mrf.mxu0
    %1222 = vdwg.mxu0
    %v1223 = vxor.u32 %v1217, 2147483648
    %v1224 = vxor.u32 %v1220, 2147483648
    %v1225 = vmul.f32 %v1223, 1.442695
    %v1226 = vpow.pop %v1225
    %v1227 = vmul.f32 %v1224, 1.442695
    %v1228 = vpow.pop %v1227
    %v1229 = vadd.f32 %v1226, 1.0
    %v1230 = vadd.f32 %v1228, 1.0
    %v1231 = vrcp.pop %v1229
    %v1232 = vmul.f32 1.0, %v1231
    %v1233 = vrcp.pop %v1230
    %v1234 = vmul.f32 1.0, %v1233
    %v1235 = vmul.f32 %v1217, %v1232
    %v1236 = vmul.f32 %v1220, %v1234
    %v1237 = vpack.c.bf16 %v1236, %v1235
    %s1238 = scalar_lea.vmem %s4, 384
    %v1239 = vld [vmem:[%s1238] sm:$0xf]
    %v1240 = vld [vmem:[%s1238 + $0x4] sm:$0xf]
    %v1241 = vld [vmem:[%s1238 + $0x8] sm:$0xf]
    %v1242 = vld [vmem:[%s1238 + $0xc] sm:$0xf]
    %v1243 = vld [vmem:[%s1238 + $0x10] sm:$0xf]
    %v1244 = vld [vmem:[%s1238 + $0x14] sm:$0xf]
    %v1245 = vld [vmem:[%s1238 + $0x18] sm:$0xf]
    %v1246 = vld [vmem:[%s1238 + $0x1c] sm:$0xf]
    %v1247 = vld [vmem:[%s1238 + $0x20] sm:$0xf]
    %v1248 = vld [vmem:[%s1238 + $0x24] sm:$0xf]
    %v1249 = vld [vmem:[%s1238 + $0x28] sm:$0xf]
    %v1250 = vld [vmem:[%s1238 + $0x2c] sm:$0xf]
    %v1251 = vld [vmem:[%s1238 + $0x30] sm:$0xf]
    %v1252 = vld [vmem:[%s1238 + $0x34] sm:$0xf]
    %v1253 = vld [vmem:[%s1238 + $0x38] sm:$0xf]
    %v1254 = vld [vmem:[%s1238 + $0x3c] sm:$0xf]
    %v1271 = vunpack.c.l.b16 %v1239
    %v1272 = vunpack.c.l.b16 %v1240
    %v1273 = vunpack.c.l.b16 %v1241
    %v1274 = vunpack.c.l.b16 %v1242
    %v1275 = vunpack.c.l.b16 %v1243
    %v1276 = vunpack.c.l.b16 %v1244
    %v1277 = vunpack.c.l.b16 %v1245
    %v1278 = vunpack.c.l.b16 %v1246
    %v1279 = vunpack.c.l.b16 %v1247
    %v1280 = vunpack.c.l.b16 %v1248
    %v1281 = vunpack.c.l.b16 %v1249
    %v1282 = vunpack.c.l.b16 %v1250
    %v1283 = vunpack.c.l.b16 %v1251
    %v1284 = vunpack.c.l.b16 %v1252
    %v1285 = vunpack.c.l.b16 %v1253
    %v1286 = vunpack.c.l.b16 %v1254
    %v1287 = vpack.c.b16 %v1272, %v1271
    %v1288 = vpack.c.b16 %v1274, %v1273
    %v1289 = vpack.c.b16 %v1276, %v1275
    %v1290 = vpack.c.b16 %v1278, %v1277
    %v1291 = vpack.c.b16 %v1280, %v1279
    %v1292 = vpack.c.b16 %v1282, %v1281
    %v1293 = vpack.c.b16 %v1284, %v1283
    %v1294 = vpack.c.b16 %v1286, %v1285
    %1303 = vmatprep.subr.bf16.mxu0 0
    %1304 = vmatpush1.bf16.msra.mxu0 %v1294
    %1305 = vmatprep.subr.bf16.mxu0 0
    %1306 = vmatpush1.bf16.msra.mxu0 %v1293
    %1307 = vmatprep.subr.bf16.mxu0 0
    %1308 = vmatpush1.bf16.msra.mxu0 %v1292
    %1309 = vmatprep.subr.bf16.mxu0 0
    %1310 = vmatpush1.bf16.msra.mxu0 %v1291
    %1311 = vmatprep.subr.bf16.mxu0 0
    %1312 = vmatpush1.bf16.msra.mxu0 %v1290
    %1313 = vmatprep.subr.bf16.mxu0 0
    %1314 = vmatpush1.bf16.msra.mxu0 %v1289
    %1315 = vmatprep.subr.bf16.mxu0 0
    %1316 = vmatpush1.bf16.msra.mxu0 %v1288
    %1317 = vmatprep.subr.bf16.mxu0 0
    %1318 = vmatpush1.bf16.msra.mxu0 %v1287
    %1319 = vmatprep.subr.bf16.mxu0 0
    %1320 = vmatpush2.bf16.msra.mxu0 0
    %1321 = vmatprep.subr.bf16.mxu0 0
    %1322 = vmatpush2.bf16.msra.mxu0 0
    %1323 = vmatprep.subr.bf16.mxu0 0
    %1324 = vmatpush2.bf16.msra.mxu0 0
    %1325 = vmatprep.subr.bf16.mxu0 0
    %1326 = vmatpush2.bf16.msra.mxu0 0
    %1327 = vmatprep.subr.bf16.mxu0 0
    %1328 = vmatpush2.bf16.msra.mxu0 0
    %1329 = vmatprep.subr.bf16.mxu0 0
    %1330 = vmatpush2.bf16.msra.mxu0 0
    %1331 = vmatprep.subr.bf16.mxu0 0
    %1332 = vmatpush2.bf16.msra.mxu0 0
    %1333 = vmatprep.subr.bf16.mxu0 0
    %1334 = vmatpush2.bf16.msra.mxu0 0
    %1335 = vmatprep.mubr.bf16.mxu0 0
    %1336 = vmatmul.mubr.bf16.gmra.mxu0 %v1237
    %v1337 = vpop.f32.mrf.mxu0
    %v1338 = vadd.f32 0.0, %v1337
    %v1339 = vpop.f32.mrf.mxu0
    %v1340 = vpop.f32.mrf.mxu0
    %v1341 = vadd.f32 0.0, %v1340
    %v1342 = vpop.f32.mrf.mxu0
    %1343 = vdwg.mxu0
    %v1344 = vpack.c.bf16 %v1341, %v1338
    %v1346 = vunpack.c.l.b16 %v1344
    %v1347 = vunpack.c.h.b16 %v1344
    %v1348 = vpack.c.b16 %v1346, %v1346
    %v1349 = vpack.c.b16 %v1347, %v1347
    %s1352 = scalar_lea.vmem [#allocation2], 24
    %1353 = vst [vmem:[%s1352] sm:$0xf] %v1348
    %1354 = vst [vmem:[%s1352 + $0x4] sm:$0xf] %v1349
  $region33: #{graph_least_action_net_forward.2} parent=0 // pred_fallthru
    _
  %v1355 = vld [vmem:[%s5] sm:$0xf]
  %v1356 = vld [vmem:[%s5 + $0x4] sm:$0xf]
  %v1357 = vld [vmem:[%s5 + $0x8] sm:$0xf]
  %v1358 = vld [vmem:[%s5 + $0xc] sm:$0xf]
  %v1359 = vld [vmem:[#allocation2] sm:$0xf]
  %v1360 = vld [vmem:[#allocation2 + $0x4] sm:$0xf]
  %v1365 = vunpack.c.l.b16 %v1355
  %v1366 = vunpack.c.l.b16 %v1356
  %v1367 = vunpack.c.l.b16 %v1357
  %v1368 = vunpack.c.l.b16 %v1358
  %v1369 = vpack.c.b16 %v1366, %v1365
  %v1370 = vpack.c.b16 %v1368, %v1367
  %v1373 = vunpack.c.l.b16 %v1359
  %v1374 = vunpack.c.l.b16 %v1360
  %v1375 = vpack.c.b16 %v1374, %v1373
  %vm1377 = vcmask 130048
  %v1379 = vsel %vm1377, %v1369, 0
  %v1382 = vsel %vm1377, %v1370, 0
  %1384 = vmatprep.subr.bf16.mxu0 0
  %1385 = vmatpush1.bf16.msra.mxu0 0
  %1386 = vmatprep.subr.bf16.mxu0 0
  %1387 = vmatpush1.bf16.msra.mxu0 0
  %1388 = vmatprep.subr.bf16.mxu0 0
  %1389 = vmatpush1.bf16.msra.mxu0 0
  %1390 = vmatprep.subr.bf16.mxu0 0
  %1391 = vmatpush1.bf16.msra.mxu0 0
  %1392 = vmatprep.subr.bf16.mxu0 0
  %1393 = vmatpush1.bf16.msra.mxu0 0
  %1394 = vmatprep.subr.bf16.mxu0 0
  %1395 = vmatpush1.bf16.msra.mxu0 0
  %1396 = vmatprep.subr.bf16.mxu0 0
  %1397 = vmatpush1.bf16.msra.mxu0 0
  %1398 = vmatprep.subr.bf16.mxu0 0
  %1399 = vmatpush1.bf16.msra.mxu0 %v1375
  %1400 = vmatprep.subr.bf16.mxu0 0
  %1401 = vmatpush2.bf16.msra.mxu0 0
  %1402 = vmatprep.subr.bf16.mxu0 0
  %1403 = vmatpush2.bf16.msra.mxu0 0
  %1404 = vmatprep.subr.bf16.mxu0 0
  %1405 = vmatpush2.bf16.msra.mxu0 0
  %1406 = vmatprep.subr.bf16.mxu0 0
  %1407 = vmatpush2.bf16.msra.mxu0 0
  %1408 = vmatprep.subr.bf16.mxu0 0
  %1409 = vmatpush2.bf16.msra.mxu0 0
  %1410 = vmatprep.subr.bf16.mxu0 0
  %1411 = vmatpush2.bf16.msra.mxu0 0
  %1412 = vmatprep.subr.bf16.mxu0 0
  %1413 = vmatpush2.bf16.msra.mxu0 0
  %1414 = vmatprep.subr.bf16.mxu0 0
  %1415 = vmatpush2.bf16.msra.mxu0 0
  %1416 = vmatprep.mubr.bf16.mxu0 0
  %1417 = vmatmul.mubr.bf16.gmra.mxu0 %v1379
  %v1418 = vpop.f32.mrf.mxu0
  %v1419 = vadd.f32 0.0, %v1418
  %v1420 = vpop.f32.mrf.mxu0
  %v1421 = vpop.f32.mrf.mxu0
  %v1422 = vadd.f32 0.0, %v1421
  %v1423 = vpop.f32.mrf.mxu0
  %1424 = vmatprep.mubr.bf16.mxu0 0
  %1425 = vmatmul.mubr.bf16.gmra.mxu0 %v1382
  %v1426 = vpop.f32.mrf.mxu0
  %v1427 = vadd.f32 0.0, %v1426
  %v1428 = vpop.f32.mrf.mxu0
  %v1429 = vpop.f32.mrf.mxu0
  %v1430 = vadd.f32 0.0, %v1429
  %v1431 = vpop.f32.mrf.mxu0
  %1432 = vdwg.mxu0
  %v1433 = vxor.u32 %v1419, 2147483648
  %v1434 = vxor.u32 %v1422, 2147483648
  %v1435 = vxor.u32 %v1427, 2147483648
  %v1436 = vxor.u32 %v1430, 2147483648
  %v1437 = vmul.f32 %v1433, 1.442695
  %v1438 = vpow.pop %v1437
  %v1439 = vmul.f32 %v1434, 1.442695
  %v1440 = vpow.pop %v1439
  %v1441 = vmul.f32 %v1435, 1.442695
  %v1442 = vpow.pop %v1441
  %v1443 = vmul.f32 %v1436, 1.442695
  %v1444 = vpow.pop %v1443
  %v1445 = vadd.f32 %v1438, 1.0
  %v1446 = vadd.f32 %v1440, 1.0
  %v1447 = vadd.f32 %v1442, 1.0
  %v1448 = vadd.f32 %v1444, 1.0
  %v1449 = vrcp.pop %v1445
  %v1450 = vmul.f32 1.0, %v1449
  %v1451 = vrcp.pop %v1446
  %v1452 = vmul.f32 1.0, %v1451
  %v1453 = vrcp.pop %v1447
  %v1454 = vmul.f32 1.0, %v1453
  %v1455 = vrcp.pop %v1448
  %v1456 = vmul.f32 1.0, %v1455
  %v1457 = vmul.f32 %v1419, %v1450
  %v1458 = vmul.f32 %v1422, %v1452
  %v1459 = vmul.f32 %v1427, %v1454
  %v1460 = vmul.f32 %v1430, %v1456
  %v1461 = vld [vmem:[#allocation3] sm:$0xff]
  %v1462 = vld [vmem:[#allocation3 + $0x8] sm:$0xff]
  %v1463 = vld [vmem:[%s6] sm:$0xf]
  %v1464 = vld [vmem:[%s6 + $0x4] sm:$0xf]
  %v1465 = vld [vmem:[%s6 + $0x8] sm:$0xf]
  %v1466 = vld [vmem:[%s6 + $0xc] sm:$0xf]
  %v1467 = vpack.c.bf16 %v1458, %v1457
  %v1468 = vpack.c.bf16 %v1460, %v1459
  %v1473 = vunpack.c.l.b16 %v1463
  %v1474 = vunpack.c.l.b16 %v1464
  %v1475 = vunpack.c.l.b16 %v1465
  %v1476 = vunpack.c.l.b16 %v1466
  %v1477 = vpack.c.b16 %v1474, %v1473
  %v1478 = vpack.c.b16 %v1476, %v1475
  %1481 = vxpose.xlu0.c.b16.start [1/8] %v1477, 128
  %1482 = vxpose.xlu0.c.b16.cont [2/8] %v1478, 128
  %1483 = vxpose.xlu0.c.b16.cont [3/8] 0, 128
  %1484 = vxpose.xlu0.c.b16.cont [4/8] 0, 128
  %1485 = vxpose.xlu0.c.b16.cont [5/8] 0, 128
  %1486 = vxpose.xlu0.c.b16.cont [6/8] 0, 128
  %1487 = vxpose.xlu0.c.b16.cont [7/8] 0, 128
  %1488 = vxpose.xlu0.c.b16.end [8/8] 0, 128
  %v1489 = vpop.trf.xlu0
  %v1490 = vpop.trf.xlu0
  %v1491 = vpop.trf.xlu0
  %v1492 = vpop.trf.xlu0
  %v1493 = vpop.trf.xlu0
  %v1494 = vpop.trf.xlu0
  %v1495 = vpop.trf.xlu0
  %v1496 = vpop.trf.xlu0
  %vm1497 = vcmask 261120
  %v1499 = vsel %vm1497, %v1489, 0
  %1501 = vmatprep.subr.bf16.mxu0 0
  %1502 = vmatpush1.bf16.msra.mxu0 0
  %1503 = vmatprep.subr.bf16.mxu0 0
  %1504 = vmatpush1.bf16.msra.mxu0 0
  %1505 = vmatprep.subr.bf16.mxu0 0
  %1506 = vmatpush1.bf16.msra.mxu0 0
  %1507 = vmatprep.subr.bf16.mxu0 0
  %1508 = vmatpush1.bf16.msra.mxu0 0
  %1509 = vmatprep.subr.bf16.mxu0 0
  %1510 = vmatpush1.bf16.msra.mxu0 0
  %1511 = vmatprep.subr.bf16.mxu0 0
  %1512 = vmatpush1.bf16.msra.mxu0 0
  %1513 = vmatprep.subr.bf16.mxu0 0
  %1514 = vmatpush1.bf16.msra.mxu0 %v1468
  %1515 = vmatprep.subr.bf16.mxu0 0
  %1516 = vmatpush1.bf16.msra.mxu0 %v1467
  %1517 = vmatprep.subr.bf16.mxu0 0
  %1518 = vmatpush2.bf16.msra.mxu0 0
  %1519 = vmatprep.subr.bf16.mxu0 0
  %1520 = vmatpush2.bf16.msra.mxu0 0
  %1521 = vmatprep.subr.bf16.mxu0 0
  %1522 = vmatpush2.bf16.msra.mxu0 0
  %1523 = vmatprep.subr.bf16.mxu0 0
  %1524 = vmatpush2.bf16.msra.mxu0 0
  %1525 = vmatprep.subr.bf16.mxu0 0
  %1526 = vmatpush2.bf16.msra.mxu0 0
  %1527 = vmatprep.subr.bf16.mxu0 0
  %1528 = vmatpush2.bf16.msra.mxu0 0
  %1529 = vmatprep.subr.bf16.mxu0 0
  %1530 = vmatpush2.bf16.msra.mxu0 0
  %1531 = vmatprep.subr.bf16.mxu0 0
  %1532 = vmatpush2.bf16.msra.mxu0 0
  %1533 = vmatprep.mubr.bf16.mxu0 0
  %1534 = vmatmul.mubr.bf16.gmra.mxu0 %v1499
  %v1535 = vpop.f32.mrf.mxu0
  %v1536 = vadd.f32 0.0, %v1535
  %v1537 = vpop.f32.mrf.mxu0
  %v1538 = vpop.f32.mrf.mxu0
  %v1539 = vadd.f32 0.0, %v1538
  %v1540 = vpop.f32.mrf.mxu0
  %1541 = vdwg.mxu0
  %v1542 = vadd.f32 %v1461, %v1536
  %v1543 = vadd.f32 %v1462, %v1539
  %1544 = vst [vmem:[#allocation3] sm:$0xff] %v1542
  %1545 = vst [vmem:[#allocation3 + $0x8] sm:$0xff] %v1543
  %v1546 = vld [vmem:[%s5] sm:$0xf]
  %v1547 = vld [vmem:[%s5 + $0x4] sm:$0xf]
  %v1548 = vld [vmem:[%s5 + $0x8] sm:$0xf]
  %v1549 = vld [vmem:[%s5 + $0xc] sm:$0xf]
  %s1550 = scalar_lea.vmem [#allocation2], 8
  %v1551 = vld [vmem:[%s1550] sm:$0xf]
  %v1552 = vld [vmem:[%s1550 + $0x4] sm:$0xf]
  %v1557 = vunpack.c.l.b16 %v1546
  %v1558 = vunpack.c.l.b16 %v1547
  %v1559 = vunpack.c.l.b16 %v1548
  %v1560 = vunpack.c.l.b16 %v1549
  %v1561 = vpack.c.b16 %v1558, %v1557
  %v1562 = vpack.c.b16 %v1560, %v1559
  %v1565 = vunpack.c.l.b16 %v1551
  %v1566 = vunpack.c.l.b16 %v1552
  %v1567 = vpack.c.b16 %v1566, %v1565
  %v1570 = vsel %vm1377, %v1561, 0
  %v1573 = vsel %vm1377, %v1562, 0
  %1575 = vmatprep.subr.bf16.mxu0 0
  %1576 = vmatpush1.bf16.msra.mxu0 0
  %1577 = vmatprep.subr.bf16.mxu0 0
  %1578 = vmatpush1.bf16.msra.mxu0 0
  %1579 = vmatprep.subr.bf16.mxu0 0
  %1580 = vmatpush1.bf16.msra.mxu0 0
  %1581 = vmatprep.subr.bf16.mxu0 0
  %1582 = vmatpush1.bf16.msra.mxu0 0
  %1583 = vmatprep.subr.bf16.mxu0 0
  %1584 = vmatpush1.bf16.msra.mxu0 0
  %1585 = vmatprep.subr.bf16.mxu0 0
  %1586 = vmatpush1.bf16.msra.mxu0 0
  %1587 = vmatprep.subr.bf16.mxu0 0
  %1588 = vmatpush1.bf16.msra.mxu0 0
  %1589 = vmatprep.subr.bf16.mxu0 0
  %1590 = vmatpush1.bf16.msra.mxu0 %v1567
  %1591 = vmatprep.subr.bf16.mxu0 0
  %1592 = vmatpush2.bf16.msra.mxu0 0
  %1593 = vmatprep.subr.bf16.mxu0 0
  %1594 = vmatpush2.bf16.msra.mxu0 0
  %1595 = vmatprep.subr.bf16.mxu0 0
  %1596 = vmatpush2.bf16.msra.mxu0 0
  %1597 = vmatprep.subr.bf16.mxu0 0
  %1598 = vmatpush2.bf16.msra.mxu0 0
  %1599 = vmatprep.subr.bf16.mxu0 0
  %1600 = vmatpush2.bf16.msra.mxu0 0
  %1601 = vmatprep.subr.bf16.mxu0 0
  %1602 = vmatpush2.bf16.msra.mxu0 0
  %1603 = vmatprep.subr.bf16.mxu0 0
  %1604 = vmatpush2.bf16.msra.mxu0 0
  %1605 = vmatprep.subr.bf16.mxu0 0
  %1606 = vmatpush2.bf16.msra.mxu0 0
  %1607 = vmatprep.mubr.bf16.mxu0 0
  %1608 = vmatmul.mubr.bf16.gmra.mxu0 %v1570
  %v1609 = vpop.f32.mrf.mxu0
  %v1610 = vadd.f32 0.0, %v1609
  %v1611 = vpop.f32.mrf.mxu0
  %v1612 = vpop.f32.mrf.mxu0
  %v1613 = vadd.f32 0.0, %v1612
  %v1614 = vpop.f32.mrf.mxu0
  %1615 = vmatprep.mubr.bf16.mxu0 0
  %1616 = vmatmul.mubr.bf16.gmra.mxu0 %v1573
  %v1617 = vpop.f32.mrf.mxu0
  %v1618 = vadd.f32 0.0, %v1617
  %v1619 = vpop.f32.mrf.mxu0
  %v1620 = vpop.f32.mrf.mxu0
  %v1621 = vadd.f32 0.0, %v1620
  %v1622 = vpop.f32.mrf.mxu0
  %1623 = vdwg.mxu0
  %v1624 = vxor.u32 %v1610, 2147483648
  %v1625 = vxor.u32 %v1613, 2147483648
  %v1626 = vxor.u32 %v1618, 2147483648
  %v1627 = vxor.u32 %v1621, 2147483648
  %v1628 = vmul.f32 %v1624, 1.442695
  %v1629 = vpow.pop %v1628
  %v1630 = vmul.f32 %v1625, 1.442695
  %v1631 = vpow.pop %v1630
  %v1632 = vmul.f32 %v1626, 1.442695
  %v1633 = vpow.pop %v1632
  %v1634 = vmul.f32 %v1627, 1.442695
  %v1635 = vpow.pop %v1634
  %v1636 = vadd.f32 %v1629, 1.0
  %v1637 = vadd.f32 %v1631, 1.0
  %v1638 = vadd.f32 %v1633, 1.0
  %v1639 = vadd.f32 %v1635, 1.0
  %v1640 = vrcp.pop %v1636
  %v1641 = vmul.f32 1.0, %v1640
  %v1642 = vrcp.pop %v1637
  %v1643 = vmul.f32 1.0, %v1642
  %v1644 = vrcp.pop %v1638
  %v1645 = vmul.f32 1.0, %v1644
  %v1646 = vrcp.pop %v1639
  %v1647 = vmul.f32 1.0, %v1646
  %v1648 = vmul.f32 %v1610, %v1641
  %v1649 = vmul.f32 %v1613, %v1643
  %v1650 = vmul.f32 %v1618, %v1645
  %v1651 = vmul.f32 %v1621, %v1647
  %s1652 = scalar_lea.vmem [#allocation3], 16
  %v1653 = vld [vmem:[%s1652] sm:$0xff]
  %v1654 = vld [vmem:[%s1652 + $0x8] sm:$0xff]
  %v1655 = vld [vmem:[%s6] sm:$0xf]
  %v1656 = vld [vmem:[%s6 + $0x4] sm:$0xf]
  %v1657 = vld [vmem:[%s6 + $0x8] sm:$0xf]
  %v1658 = vld [vmem:[%s6 + $0xc] sm:$0xf]
  %v1659 = vpack.c.bf16 %v1649, %v1648
  %v1660 = vpack.c.bf16 %v1651, %v1650
  %v1665 = vunpack.c.l.b16 %v1655
  %v1666 = vunpack.c.l.b16 %v1656
  %v1667 = vunpack.c.l.b16 %v1657
  %v1668 = vunpack.c.l.b16 %v1658
  %v1669 = vpack.c.b16 %v1666, %v1665
  %v1670 = vpack.c.b16 %v1668, %v1667
  %1673 = vxpose.xlu0.c.b16.start [1/8] %v1669, 128
  %1674 = vxpose.xlu0.c.b16.cont [2/8] %v1670, 128
  %1675 = vxpose.xlu0.c.b16.cont [3/8] 0, 128
  %1676 = vxpose.xlu0.c.b16.cont [4/8] 0, 128
  %1677 = vxpose.xlu0.c.b16.cont [5/8] 0, 128
  %1678 = vxpose.xlu0.c.b16.cont [6/8] 0, 128
  %1679 = vxpose.xlu0.c.b16.cont [7/8] 0, 128
  %1680 = vxpose.xlu0.c.b16.end [8/8] 0, 128
  %v1681 = vpop.trf.xlu0
  %v1682 = vpop.trf.xlu0
  %v1683 = vpop.trf.xlu0
  %v1684 = vpop.trf.xlu0
  %v1685 = vpop.trf.xlu0
  %v1686 = vpop.trf.xlu0
  %v1687 = vpop.trf.xlu0
  %v1688 = vpop.trf.xlu0
  %v1690 = vsel %vm1497, %v1681, 0
  %1692 = vmatprep.subr.bf16.mxu0 0
  %1693 = vmatpush1.bf16.msra.mxu0 0
  %1694 = vmatprep.subr.bf16.mxu0 0
  %1695 = vmatpush1.bf16.msra.mxu0 0
  %1696 = vmatprep.subr.bf16.mxu0 0
  %1697 = vmatpush1.bf16.msra.mxu0 0
  %1698 = vmatprep.subr.bf16.mxu0 0
  %1699 = vmatpush1.bf16.msra.mxu0 0
  %1700 = vmatprep.subr.bf16.mxu0 0
  %1701 = vmatpush1.bf16.msra.mxu0 0
  %1702 = vmatprep.subr.bf16.mxu0 0
  %1703 = vmatpush1.bf16.msra.mxu0 0
  %1704 = vmatprep.subr.bf16.mxu0 0
  %1705 = vmatpush1.bf16.msra.mxu0 %v1660
  %1706 = vmatprep.subr.bf16.mxu0 0
  %1707 = vmatpush1.bf16.msra.mxu0 %v1659
  %1708 = vmatprep.subr.bf16.mxu0 0
  %1709 = vmatpush2.bf16.msra.mxu0 0
  %1710 = vmatprep.subr.bf16.mxu0 0
  %1711 = vmatpush2.bf16.msra.mxu0 0
  %1712 = vmatprep.subr.bf16.mxu0 0
  %1713 = vmatpush2.bf16.msra.mxu0 0
  %1714 = vmatprep.subr.bf16.mxu0 0
  %1715 = vmatpush2.bf16.msra.mxu0 0
  %1716 = vmatprep.subr.bf16.mxu0 0
  %1717 = vmatpush2.bf16.msra.mxu0 0
  %1718 = vmatprep.subr.bf16.mxu0 0
  %1719 = vmatpush2.bf16.msra.mxu0 0
  %1720 = vmatprep.subr.bf16.mxu0 0
  %1721 = vmatpush2.bf16.msra.mxu0 0
  %1722 = vmatprep.subr.bf16.mxu0 0
  %1723 = vmatpush2.bf16.msra.mxu0 0
  %1724 = vmatprep.mubr.bf16.mxu0 0
  %1725 = vmatmul.mubr.bf16.gmra.mxu0 %v1690
  %v1726 = vpop.f32.mrf.mxu0
  %v1727 = vadd.f32 0.0, %v1726
  %v1728 = vpop.f32.mrf.mxu0
  %v1729 = vpop.f32.mrf.mxu0
  %v1730 = vadd.f32 0.0, %v1729
  %v1731 = vpop.f32.mrf.mxu0
  %1732 = vdwg.mxu0
  %v1733 = vadd.f32 %v1653, %v1727
  %v1734 = vadd.f32 %v1654, %v1730
  %1735 = vst [vmem:[%s1652] sm:$0xff] %v1733
  %1736 = vst [vmem:[%s1652 + $0x8] sm:$0xff] %v1734
  %v1737 = vld [vmem:[%s5] sm:$0xf]
  %v1738 = vld [vmem:[%s5 + $0x4] sm:$0xf]
  %v1739 = vld [vmem:[%s5 + $0x8] sm:$0xf]
  %v1740 = vld [vmem:[%s5 + $0xc] sm:$0xf]
  %s1741 = scalar_lea.vmem [#allocation2], 16
  %v1742 = vld [vmem:[%s1741] sm:$0xf]
  %v1743 = vld [vmem:[%s1741 + $0x4] sm:$0xf]
  %v1748 = vunpack.c.l.b16 %v1737
  %v1749 = vunpack.c.l.b16 %v1738
  %v1750 = vunpack.c.l.b16 %v1739
  %v1751 = vunpack.c.l.b16 %v1740
  %v1752 = vpack.c.b16 %v1749, %v1748
  %v1753 = vpack.c.b16 %v1751, %v1750
  %v1756 = vunpack.c.l.b16 %v1742
  %v1757 = vunpack.c.l.b16 %v1743
  %v1758 = vpack.c.b16 %v1757, %v1756
  %v1761 = vsel %vm1377, %v1752, 0
  %v1764 = vsel %vm1377, %v1753, 0
  %1766 = vmatprep.subr.bf16.mxu0 0
  %1767 = vmatpush1.bf16.msra.mxu0 0
  %1768 = vmatprep.subr.bf16.mxu0 0
  %1769 = vmatpush1.bf16.msra.mxu0 0
  %1770 = vmatprep.subr.bf16.mxu0 0
  %1771 = vmatpush1.bf16.msra.mxu0 0
  %1772 = vmatprep.subr.bf16.mxu0 0
  %1773 = vmatpush1.bf16.msra.mxu0 0
  %1774 = vmatprep.subr.bf16.mxu0 0
  %1775 = vmatpush1.bf16.msra.mxu0 0
  %1776 = vmatprep.subr.bf16.mxu0 0
  %1777 = vmatpush1.bf16.msra.mxu0 0
  %1778 = vmatprep.subr.bf16.mxu0 0
  %1779 = vmatpush1.bf16.msra.mxu0 0
  %1780 = vmatprep.subr.bf16.mxu0 0
  %1781 = vmatpush1.bf16.msra.mxu0 %v1758
  %1782 = vmatprep.subr.bf16.mxu0 0
  %1783 = vmatpush2.bf16.msra.mxu0 0
  %1784 = vmatprep.subr.bf16.mxu0 0
  %1785 = vmatpush2.bf16.msra.mxu0 0
  %1786 = vmatprep.subr.bf16.mxu0 0
  %1787 = vmatpush2.bf16.msra.mxu0 0
  %1788 = vmatprep.subr.bf16.mxu0 0
  %1789 = vmatpush2.bf16.msra.mxu0 0
  %1790 = vmatprep.subr.bf16.mxu0 0
  %1791 = vmatpush2.bf16.msra.mxu0 0
  %1792 = vmatprep.subr.bf16.mxu0 0
  %1793 = vmatpush2.bf16.msra.mxu0 0
  %1794 = vmatprep.subr.bf16.mxu0 0
  %1795 = vmatpush2.bf16.msra.mxu0 0
  %1796 = vmatprep.subr.bf16.mxu0 0
  %1797 = vmatpush2.bf16.msra.mxu0 0
  %1798 = vmatprep.mubr.bf16.mxu0 0
  %1799 = vmatmul.mubr.bf16.gmra.mxu0 %v1761
  %v1800 = vpop.f32.mrf.mxu0
  %v1801 = vadd.f32 0.0, %v1800
  %v1802 = vpop.f32.mrf.mxu0
  %v1803 = vpop.f32.mrf.mxu0
  %v1804 = vadd.f32 0.0, %v1803
  %v1805 = vpop.f32.mrf.mxu0
  %1806 = vmatprep.mubr.bf16.mxu0 0
  %1807 = vmatmul.mubr.bf16.gmra.mxu0 %v1764
  %v1808 = vpop.f32.mrf.mxu0
  %v1809 = vadd.f32 0.0, %v1808
  %v1810 = vpop.f32.mrf.mxu0
  %v1811 = vpop.f32.mrf.mxu0
  %v1812 = vadd.f32 0.0, %v1811
  %v1813 = vpop.f32.mrf.mxu0
  %1814 = vdwg.mxu0
  %v1815 = vxor.u32 %v1801, 2147483648
  %v1816 = vxor.u32 %v1804, 2147483648
  %v1817 = vxor.u32 %v1809, 2147483648
  %v1818 = vxor.u32 %v1812, 2147483648
  %v1819 = vmul.f32 %v1815, 1.442695
  %v1820 = vpow.pop %v1819
  %v1821 = vmul.f32 %v1816, 1.442695
  %v1822 = vpow.pop %v1821
  %v1823 = vmul.f32 %v1817, 1.442695
  %v1824 = vpow.pop %v1823
  %v1825 = vmul.f32 %v1818, 1.442695
  %v1826 = vpow.pop %v1825
  %v1827 = vadd.f32 %v1820, 1.0
  %v1828 = vadd.f32 %v1822, 1.0
  %v1829 = vadd.f32 %v1824, 1.0
  %v1830 = vadd.f32 %v1826, 1.0
  %v1831 = vrcp.pop %v1827
  %v1832 = vmul.f32 1.0, %v1831
  %v1833 = vrcp.pop %v1828
  %v1834 = vmul.f32 1.0, %v1833
  %v1835 = vrcp.pop %v1829
  %v1836 = vmul.f32 1.0, %v1835
  %v1837 = vrcp.pop %v1830
  %v1838 = vmul.f32 1.0, %v1837
  %v1839 = vmul.f32 %v1801, %v1832
  %v1840 = vmul.f32 %v1804, %v1834
  %v1841 = vmul.f32 %v1809, %v1836
  %v1842 = vmul.f32 %v1812, %v1838
  %s1843 = scalar_lea.vmem [#allocation3], 32
  %v1844 = vld [vmem:[%s1843] sm:$0xff]
  %v1845 = vld [vmem:[%s1843 + $0x8] sm:$0xff]
  %v1846 = vld [vmem:[%s6] sm:$0xf]
  %v1847 = vld [vmem:[%s6 + $0x4] sm:$0xf]
  %v1848 = vld [vmem:[%s6 + $0x8] sm:$0xf]
  %v1849 = vld [vmem:[%s6 + $0xc] sm:$0xf]
  %v1850 = vpack.c.bf16 %v1840, %v1839
  %v1851 = vpack.c.bf16 %v1842, %v1841
  %v1856 = vunpack.c.l.b16 %v1846
  %v1857 = vunpack.c.l.b16 %v1847
  %v1858 = vunpack.c.l.b16 %v1848
  %v1859 = vunpack.c.l.b16 %v1849
  %v1860 = vpack.c.b16 %v1857, %v1856
  %v1861 = vpack.c.b16 %v1859, %v1858
  %1864 = vxpose.xlu0.c.b16.start [1/8] %v1860, 128
  %1865 = vxpose.xlu0.c.b16.cont [2/8] %v1861, 128
  %1866 = vxpose.xlu0.c.b16.cont [3/8] 0, 128
  %1867 = vxpose.xlu0.c.b16.cont [4/8] 0, 128
  %1868 = vxpose.xlu0.c.b16.cont [5/8] 0, 128
  %1869 = vxpose.xlu0.c.b16.cont [6/8] 0, 128
  %1870 = vxpose.xlu0.c.b16.cont [7/8] 0, 128
  %1871 = vxpose.xlu0.c.b16.end [8/8] 0, 128
  %v1872 = vpop.trf.xlu0
  %v1873 = vpop.trf.xlu0
  %v1874 = vpop.trf.xlu0
  %v1875 = vpop.trf.xlu0
  %v1876 = vpop.trf.xlu0
  %v1877 = vpop.trf.xlu0
  %v1878 = vpop.trf.xlu0
  %v1879 = vpop.trf.xlu0
  %v1881 = vsel %vm1497, %v1872, 0
  %1883 = vmatprep.subr.bf16.mxu0 0
  %1884 = vmatpush1.bf16.msra.mxu0 0
  %1885 = vmatprep.subr.bf16.mxu0 0
  %1886 = vmatpush1.bf16.msra.mxu0 0
  %1887 = vmatprep.subr.bf16.mxu0 0
  %1888 = vmatpush1.bf16.msra.mxu0 0
  %1889 = vmatprep.subr.bf16.mxu0 0
  %1890 = vmatpush1.bf16.msra.mxu0 0
  %1891 = vmatprep.subr.bf16.mxu0 0
  %1892 = vmatpush1.bf16.msra.mxu0 0
  %1893 = vmatprep.subr.bf16.mxu0 0
  %1894 = vmatpush1.bf16.msra.mxu0 0
  %1895 = vmatprep.subr.bf16.mxu0 0
  %1896 = vmatpush1.bf16.msra.mxu0 %v1851
  %1897 = vmatprep.subr.bf16.mxu0 0
  %1898 = vmatpush1.bf16.msra.mxu0 %v1850
  %1899 = vmatprep.subr.bf16.mxu0 0
  %1900 = vmatpush2.bf16.msra.mxu0 0
  %1901 = vmatprep.subr.bf16.mxu0 0
  %1902 = vmatpush2.bf16.msra.mxu0 0
  %1903 = vmatprep.subr.bf16.mxu0 0
  %1904 = vmatpush2.bf16.msra.mxu0 0
  %1905 = vmatprep.subr.bf16.mxu0 0
  %1906 = vmatpush2.bf16.msra.mxu0 0
  %1907 = vmatprep.subr.bf16.mxu0 0
  %1908 = vmatpush2.bf16.msra.mxu0 0
  %1909 = vmatprep.subr.bf16.mxu0 0
  %1910 = vmatpush2.bf16.msra.mxu0 0
  %1911 = vmatprep.subr.bf16.mxu0 0
  %1912 = vmatpush2.bf16.msra.mxu0 0
  %1913 = vmatprep.subr.bf16.mxu0 0
  %1914 = vmatpush2.bf16.msra.mxu0 0
  %1915 = vmatprep.mubr.bf16.mxu0 0
  %1916 = vmatmul.mubr.bf16.gmra.mxu0 %v1881
  %v1917 = vpop.f32.mrf.mxu0
  %v1918 = vadd.f32 0.0, %v1917
  %v1919 = vpop.f32.mrf.mxu0
  %v1920 = vpop.f32.mrf.mxu0
  %v1921 = vadd.f32 0.0, %v1920
  %v1922 = vpop.f32.mrf.mxu0
  %1923 = vdwg.mxu0
  %v1924 = vadd.f32 %v1844, %v1918
  %v1925 = vadd.f32 %v1845, %v1921
  %1926 = vst [vmem:[%s1843] sm:$0xff] %v1924
  %1927 = vst [vmem:[%s1843 + $0x8] sm:$0xff] %v1925
  %v1928 = vld [vmem:[%s5] sm:$0xf]
  %v1929 = vld [vmem:[%s5 + $0x4] sm:$0xf]
  %v1930 = vld [vmem:[%s5 + $0x8] sm:$0xf]
  %v1931 = vld [vmem:[%s5 + $0xc] sm:$0xf]
  %s1932 = scalar_lea.vmem [#allocation2], 24
  %v1933 = vld [vmem:[%s1932] sm:$0xf]
  %v1934 = vld [vmem:[%s1932 + $0x4] sm:$0xf]
  %v1939 = vunpack.c.l.b16 %v1928
  %v1940 = vunpack.c.l.b16 %v1929
  %v1941 = vunpack.c.l.b16 %v1930
  %v1942 = vunpack.c.l.b16 %v1931
  %v1943 = vpack.c.b16 %v1940, %v1939
  %v1944 = vpack.c.b16 %v1942, %v1941
  %v1947 = vunpack.c.l.b16 %v1933
  %v1948 = vunpack.c.l.b16 %v1934
  %v1949 = vpack.c.b16 %v1948, %v1947
  %v1952 = vsel %vm1377, %v1943, 0
  %v1955 = vsel %vm1377, %v1944, 0
  %1957 = vmatprep.subr.bf16.mxu0 0
  %1958 = vmatpush1.bf16.msra.mxu0 0
  %1959 = vmatprep.subr.bf16.mxu0 0
  %1960 = vmatpush1.bf16.msra.mxu0 0
  %1961 = vmatprep.subr.bf16.mxu0 0
  %1962 = vmatpush1.bf16.msra.mxu0 0
  %1963 = vmatprep.subr.bf16.mxu0 0
  %1964 = vmatpush1.bf16.msra.mxu0 0
  %1965 = vmatprep.subr.bf16.mxu0 0
  %1966 = vmatpush1.bf16.msra.mxu0 0
  %1967 = vmatprep.subr.bf16.mxu0 0
  %1968 = vmatpush1.bf16.msra.mxu0 0
  %1969 = vmatprep.subr.bf16.mxu0 0
  %1970 = vmatpush1.bf16.msra.mxu0 0
  %1971 = vmatprep.subr.bf16.mxu0 0
  %1972 = vmatpush1.bf16.msra.mxu0 %v1949
  %1973 = vmatprep.subr.bf16.mxu0 0
  %1974 = vmatpush2.bf16.msra.mxu0 0
  %1975 = vmatprep.subr.bf16.mxu0 0
  %1976 = vmatpush2.bf16.msra.mxu0 0
  %1977 = vmatprep.subr.bf16.mxu0 0
  %1978 = vmatpush2.bf16.msra.mxu0 0
  %1979 = vmatprep.subr.bf16.mxu0 0
  %1980 = vmatpush2.bf16.msra.mxu0 0
  %1981 = vmatprep.subr.bf16.mxu0 0
  %1982 = vmatpush2.bf16.msra.mxu0 0
  %1983 = vmatprep.subr.bf16.mxu0 0
  %1984 = vmatpush2.bf16.msra.mxu0 0
  %1985 = vmatprep.subr.bf16.mxu0 0
  %1986 = vmatpush2.bf16.msra.mxu0 0
  %1987 = vmatprep.subr.bf16.mxu0 0
  %1988 = vmatpush2.bf16.msra.mxu0 0
  %1989 = vmatprep.mubr.bf16.mxu0 0
  %1990 = vmatmul.mubr.bf16.gmra.mxu0 %v1952
  %v1991 = vpop.f32.mrf.mxu0
  %v1992 = vadd.f32 0.0, %v1991
  %v1993 = vpop.f32.mrf.mxu0
  %v1994 = vpop.f32.mrf.mxu0
  %v1995 = vadd.f32 0.0, %v1994
  %v1996 = vpop.f32.mrf.mxu0
  %1997 = vmatprep.mubr.bf16.mxu0 0
  %1998 = vmatmul.mubr.bf16.gmra.mxu0 %v1955
  %v1999 = vpop.f32.mrf.mxu0
  %v2000 = vadd.f32 0.0, %v1999
  %v2001 = vpop.f32.mrf.mxu0
  %v2002 = vpop.f32.mrf.mxu0
  %v2003 = vadd.f32 0.0, %v2002
  %v2004 = vpop.f32.mrf.mxu0
  %2005 = vdwg.mxu0
  %v2006 = vxor.u32 %v1992, 2147483648
  %v2007 = vxor.u32 %v1995, 2147483648
  %v2008 = vxor.u32 %v2000, 2147483648
  %v2009 = vxor.u32 %v2003, 2147483648
  %v2010 = vmul.f32 %v2006, 1.442695
  %v2011 = vpow.pop %v2010
  %v2012 = vmul.f32 %v2007, 1.442695
  %v2013 = vpow.pop %v2012
  %v2014 = vmul.f32 %v2008, 1.442695
  %v2015 = vpow.pop %v2014
  %v2016 = vmul.f32 %v2009, 1.442695
  %v2017 = vpow.pop %v2016
  %v2018 = vadd.f32 %v2011, 1.0
  %v2019 = vadd.f32 %v2013, 1.0
  %v2020 = vadd.f32 %v2015, 1.0
  %v2021 = vadd.f32 %v2017, 1.0
  %v2022 = vrcp.pop %v2018
  %v2023 = vmul.f32 1.0, %v2022
  %v2024 = vrcp.pop %v2019
  %v2025 = vmul.f32 1.0, %v2024
  %v2026 = vrcp.pop %v2020
  %v2027 = vmul.f32 1.0, %v2026
  %v2028 = vrcp.pop %v2021
  %v2029 = vmul.f32 1.0, %v2028
  %v2030 = vmul.f32 %v1992, %v2023
  %v2031 = vmul.f32 %v1995, %v2025
  %v2032 = vmul.f32 %v2000, %v2027
  %v2033 = vmul.f32 %v2003, %v2029
  %s2034 = scalar_lea.vmem [#allocation3], 48
  %v2035 = vld [vmem:[%s2034] sm:$0xff]
  %v2036 = vld [vmem:[%s2034 + $0x8] sm:$0xff]
  %v2037 = vld [vmem:[%s6] sm:$0xf]
  %v2038 = vld [vmem:[%s6 + $0x4] sm:$0xf]
  %v2039 = vld [vmem:[%s6 + $0x8] sm:$0xf]
  %v2040 = vld [vmem:[%s6 + $0xc] sm:$0xf]
  %v2041 = vpack.c.bf16 %v2031, %v2030
  %v2042 = vpack.c.bf16 %v2033, %v2032
  %v2047 = vunpack.c.l.b16 %v2037
  %v2048 = vunpack.c.l.b16 %v2038
  %v2049 = vunpack.c.l.b16 %v2039
  %v2050 = vunpack.c.l.b16 %v2040
  %v2051 = vpack.c.b16 %v2048, %v2047
  %v2052 = vpack.c.b16 %v2050, %v2049
  %2055 = vxpose.xlu0.c.b16.start [1/8] %v2051, 128
  %2056 = vxpose.xlu0.c.b16.cont [2/8] %v2052, 128
  %2057 = vxpose.xlu0.c.b16.cont [3/8] 0, 128
  %2058 = vxpose.xlu0.c.b16.cont [4/8] 0, 128
  %2059 = vxpose.xlu0.c.b16.cont [5/8] 0, 128
  %2060 = vxpose.xlu0.c.b16.cont [6/8] 0, 128
  %2061 = vxpose.xlu0.c.b16.cont [7/8] 0, 128
  %2062 = vxpose.xlu0.c.b16.end [8/8] 0, 128
  %v2063 = vpop.trf.xlu0
  %v2064 = vpop.trf.xlu0
  %v2065 = vpop.trf.xlu0
  %v2066 = vpop.trf.xlu0
  %v2067 = vpop.trf.xlu0
  %v2068 = vpop.trf.xlu0
  %v2069 = vpop.trf.xlu0
  %v2070 = vpop.trf.xlu0
  %v2072 = vsel %vm1497, %v2063, 0
  %2074 = vmatprep.subr.bf16.mxu0 0
  %2075 = vmatpush1.bf16.msra.mxu0 0
  %2076 = vmatprep.subr.bf16.mxu0 0
  %2077 = vmatpush1.bf16.msra.mxu0 0
  %2078 = vmatprep.subr.bf16.mxu0 0
  %2079 = vmatpush1.bf16.msra.mxu0 0
  %2080 = vmatprep.subr.bf16.mxu0 0
  %2081 = vmatpush1.bf16.msra.mxu0 0
  %2082 = vmatprep.subr.bf16.mxu0 0
  %2083 = vmatpush1.bf16.msra.mxu0 0
  %2084 = vmatprep.subr.bf16.mxu0 0
  %2085 = vmatpush1.bf16.msra.mxu0 0
  %2086 = vmatprep.subr.bf16.mxu0 0
  %2087 = vmatpush1.bf16.msra.mxu0 %v2042
  %2088 = vmatprep.subr.bf16.mxu0 0
  %2089 = vmatpush1.bf16.msra.mxu0 %v2041
  %2090 = vmatprep.subr.bf16.mxu0 0
  %2091 = vmatpush2.bf16.msra.mxu0 0
  %2092 = vmatprep.subr.bf16.mxu0 0
  %2093 = vmatpush2.bf16.msra.mxu0 0
  %2094 = vmatprep.subr.bf16.mxu0 0
  %2095 = vmatpush2.bf16.msra.mxu0 0
  %2096 = vmatprep.subr.bf16.mxu0 0
  %2097 = vmatpush2.bf16.msra.mxu0 0
  %2098 = vmatprep.subr.bf16.mxu0 0
  %2099 = vmatpush2.bf16.msra.mxu0 0
  %2100 = vmatprep.subr.bf16.mxu0 0
  %2101 = vmatpush2.bf16.msra.mxu0 0
  %2102 = vmatprep.subr.bf16.mxu0 0
  %2103 = vmatpush2.bf16.msra.mxu0 0
  %2104 = vmatprep.subr.bf16.mxu0 0
  %2105 = vmatpush2.bf16.msra.mxu0 0
  %2106 = vmatprep.mubr.bf16.mxu0 0
  %2107 = vmatmul.mubr.bf16.gmra.mxu0 %v2072
  %v2108 = vpop.f32.mrf.mxu0
  %v2109 = vadd.f32 0.0, %v2108
  %v2110 = vpop.f32.mrf.mxu0
  %v2111 = vpop.f32.mrf.mxu0
  %v2112 = vadd.f32 0.0, %v2111
  %v2113 = vpop.f32.mrf.mxu0
  %2114 = vdwg.mxu0
  %v2115 = vadd.f32 %v2035, %v2109
  %v2116 = vadd.f32 %v2036, %v2112
  %2117 = vst [vmem:[%s2034] sm:$0xff] %v2115
  %2118 = vst [vmem:[%s2034 + $0x8] sm:$0xff] %v2116
  // Predicated region
  $region34: #{graph_least_action_net_forward.2} parent=0 // pred_check
    %p2119 = pneg %p27
  $region35: #{graph_least_action_net_forward.2} parent=0 // pred_check_branch
    %2121 = sbr.rel (%p2119) target = $region37
  $region36: #{graph_least_action_net_forward.2} parent=0 // pred_region
    %v2122 = vld [vmem:[#allocation3] sm:$0xff]
    %v2123 = vld [vmem:[#allocation3 + $0x8] sm:$0xff]
    %v2124 = vpack.c.bf16 %v2123, %v2122
    %s2125 = scalar_lea.vmem %s4, 64
    %v2126 = vld [vmem:[%s2125] sm:$0xf]
    %v2127 = vld [vmem:[%s2125 + $0x4] sm:$0xf]
    %v2128 = vld [vmem:[%s2125 + $0x8] sm:$0xf]
    %v2129 = vld [vmem:[%s2125 + $0xc] sm:$0xf]
    %v2130 = vld [vmem:[%s2125 + $0x10] sm:$0xf]
    %v2131 = vld [vmem:[%s2125 + $0x14] sm:$0xf]
    %v2132 = vld [vmem:[%s2125 + $0x18] sm:$0xf]
    %v2133 = vld [vmem:[%s2125 + $0x1c] sm:$0xf]
    %v2134 = vld [vmem:[%s2125 + $0x20] sm:$0xf]
    %v2135 = vld [vmem:[%s2125 + $0x24] sm:$0xf]
    %v2136 = vld [vmem:[%s2125 + $0x28] sm:$0xf]
    %v2137 = vld [vmem:[%s2125 + $0x2c] sm:$0xf]
    %v2138 = vld [vmem:[%s2125 + $0x30] sm:$0xf]
    %v2139 = vld [vmem:[%s2125 + $0x34] sm:$0xf]
    %v2140 = vld [vmem:[%s2125 + $0x38] sm:$0xf]
    %v2141 = vld [vmem:[%s2125 + $0x3c] sm:$0xf]
    %v2158 = vunpack.c.l.b16 %v2126
    %v2159 = vunpack.c.l.b16 %v2127
    %v2160 = vunpack.c.l.b16 %v2128
    %v2161 = vunpack.c.l.b16 %v2129
    %v2162 = vunpack.c.l.b16 %v2130
    %v2163 = vunpack.c.l.b16 %v2131
    %v2164 = vunpack.c.l.b16 %v2132
    %v2165 = vunpack.c.l.b16 %v2133
    %v2166 = vunpack.c.l.b16 %v2134
    %v2167 = vunpack.c.l.b16 %v2135
    %v2168 = vunpack.c.l.b16 %v2136
    %v2169 = vunpack.c.l.b16 %v2137
    %v2170 = vunpack.c.l.b16 %v2138
    %v2171 = vunpack.c.l.b16 %v2139
    %v2172 = vunpack.c.l.b16 %v2140
    %v2173 = vunpack.c.l.b16 %v2141
    %v2174 = vpack.c.b16 %v2159, %v2158
    %v2175 = vpack.c.b16 %v2161, %v2160
    %v2176 = vpack.c.b16 %v2163, %v2162
    %v2177 = vpack.c.b16 %v2165, %v2164
    %v2178 = vpack.c.b16 %v2167, %v2166
    %v2179 = vpack.c.b16 %v2169, %v2168
    %v2180 = vpack.c.b16 %v2171, %v2170
    %v2181 = vpack.c.b16 %v2173, %v2172
    %2190 = vmatprep.subr.bf16.mxu0 0
    %2191 = vmatpush1.bf16.msra.mxu0 %v2181
    %2192 = vmatprep.subr.bf16.mxu0 0
    %2193 = vmatpush1.bf16.msra.mxu0 %v2180
    %2194 = vmatprep.subr.bf16.mxu0 0
    %2195 = vmatpush1.bf16.msra.mxu0 %v2179
    %2196 = vmatprep.subr.bf16.mxu0 0
    %2197 = vmatpush1.bf16.msra.mxu0 %v2178
    %2198 = vmatprep.subr.bf16.mxu0 0
    %2199 = vmatpush1.bf16.msra.mxu0 %v2177
    %2200 = vmatprep.subr.bf16.mxu0 0
    %2201 = vmatpush1.bf16.msra.mxu0 %v2176
    %2202 = vmatprep.subr.bf16.mxu0 0
    %2203 = vmatpush1.bf16.msra.mxu0 %v2175
    %2204 = vmatprep.subr.bf16.mxu0 0
    %2205 = vmatpush1.bf16.msra.mxu0 %v2174
    %2206 = vmatprep.subr.bf16.mxu0 0
    %2207 = vmatpush2.bf16.msra.mxu0 0
    %2208 = vmatprep.subr.bf16.mxu0 0
    %2209 = vmatpush2.bf16.msra.mxu0 0
    %2210 = vmatprep.subr.bf16.mxu0 0
    %2211 = vmatpush2.bf16.msra.mxu0 0
    %2212 = vmatprep.subr.bf16.mxu0 0
    %2213 = vmatpush2.bf16.msra.mxu0 0
    %2214 = vmatprep.subr.bf16.mxu0 0
    %2215 = vmatpush2.bf16.msra.mxu0 0
    %2216 = vmatprep.subr.bf16.mxu0 0
    %2217 = vmatpush2.bf16.msra.mxu0 0
    %2218 = vmatprep.subr.bf16.mxu0 0
    %2219 = vmatpush2.bf16.msra.mxu0 0
    %2220 = vmatprep.subr.bf16.mxu0 0
    %2221 = vmatpush2.bf16.msra.mxu0 0
    %2222 = vmatprep.mubr.bf16.mxu0 0
    %2223 = vmatmul.mubr.bf16.gmra.mxu0 %v2124
    %v2224 = vpop.f32.mrf.mxu0
    %v2225 = vadd.f32 0.0, %v2224
    %v2226 = vpop.f32.mrf.mxu0
    %v2227 = vpop.f32.mrf.mxu0
    %v2228 = vadd.f32 0.0, %v2227
    %v2229 = vpop.f32.mrf.mxu0
    %2230 = vdwg.mxu0
    %v2231 = vsub.f32 0.0, %v2225
    %v2232 = vsub.f32 0.0, %v2228
    %v2233 = vmul.f32 %v2231, 0.70710677
    %v2234 = vmul.f32 %v2232, 0.70710677
    %2235 = vst [vmem:[%s7] sm:$0xff] %v2233
    %2236 = vst [vmem:[%s7 + $0x8] sm:$0xff] %v2234
    %v2237 = vld [vmem:[%s1652] sm:$0xff]
    %v2238 = vld [vmem:[%s1652 + $0x8] sm:$0xff]
    %v2239 = vpack.c.bf16 %v2238, %v2237
    %s2240 = scalar_lea.vmem %s4, 192
    %v2241 = vld [vmem:[%s2240] sm:$0xf]
    %v2242 = vld [vmem:[%s2240 + $0x4] sm:$0xf]
    %v2243 = vld [vmem:[%s2240 + $0x8] sm:$0xf]
    %v2244 = vld [vmem:[%s2240 + $0xc] sm:$0xf]
    %v2245 = vld [vmem:[%s2240 + $0x10] sm:$0xf]
    %v2246 = vld [vmem:[%s2240 + $0x14] sm:$0xf]
    %v2247 = vld [vmem:[%s2240 + $0x18] sm:$0xf]
    %v2248 = vld [vmem:[%s2240 + $0x1c] sm:$0xf]
    %v2249 = vld [vmem:[%s2240 + $0x20] sm:$0xf]
    %v2250 = vld [vmem:[%s2240 + $0x24] sm:$0xf]
    %v2251 = vld [vmem:[%s2240 + $0x28] sm:$0xf]
    %v2252 = vld [vmem:[%s2240 + $0x2c] sm:$0xf]
    %v2253 = vld [vmem:[%s2240 + $0x30] sm:$0xf]
    %v2254 = vld [vmem:[%s2240 + $0x34] sm:$0xf]
    %v2255 = vld [vmem:[%s2240 + $0x38] sm:$0xf]
    %v2256 = vld [vmem:[%s2240 + $0x3c] sm:$0xf]
    %v2273 = vunpack.c.l.b16 %v2241
    %v2274 = vunpack.c.l.b16 %v2242
    %v2275 = vunpack.c.l.b16 %v2243
    %v2276 = vunpack.c.l.b16 %v2244
    %v2277 = vunpack.c.l.b16 %v2245
    %v2278 = vunpack.c.l.b16 %v2246
    %v2279 = vunpack.c.l.b16 %v2247
    %v2280 = vunpack.c.l.b16 %v2248
    %v2281 = vunpack.c.l.b16 %v2249
    %v2282 = vunpack.c.l.b16 %v2250
    %v2283 = vunpack.c.l.b16 %v2251
    %v2284 = vunpack.c.l.b16 %v2252
    %v2285 = vunpack.c.l.b16 %v2253
    %v2286 = vunpack.c.l.b16 %v2254
    %v2287 = vunpack.c.l.b16 %v2255
    %v2288 = vunpack.c.l.b16 %v2256
    %v2289 = vpack.c.b16 %v2274, %v2273
    %v2290 = vpack.c.b16 %v2276, %v2275
    %v2291 = vpack.c.b16 %v2278, %v2277
    %v2292 = vpack.c.b16 %v2280, %v2279
    %v2293 = vpack.c.b16 %v2282, %v2281
    %v2294 = vpack.c.b16 %v2284, %v2283
    %v2295 = vpack.c.b16 %v2286, %v2285
    %v2296 = vpack.c.b16 %v2288, %v2287
    %2305 = vmatprep.subr.bf16.mxu0 0
    %2306 = vmatpush1.bf16.msra.mxu0 %v2296
    %2307 = vmatprep.subr.bf16.mxu0 0
    %2308 = vmatpush1.bf16.msra.mxu0 %v2295
    %2309 = vmatprep.subr.bf16.mxu0 0
    %2310 = vmatpush1.bf16.msra.mxu0 %v2294
    %2311 = vmatprep.subr.bf16.mxu0 0
    %2312 = vmatpush1.bf16.msra.mxu0 %v2293
    %2313 = vmatprep.subr.bf16.mxu0 0
    %2314 = vmatpush1.bf16.msra.mxu0 %v2292
    %2315 = vmatprep.subr.bf16.mxu0 0
    %2316 = vmatpush1.bf16.msra.mxu0 %v2291
    %2317 = vmatprep.subr.bf16.mxu0 0
    %2318 = vmatpush1.bf16.msra.mxu0 %v2290
    %2319 = vmatprep.subr.bf16.mxu0 0
    %2320 = vmatpush1.bf16.msra.mxu0 %v2289
    %2321 = vmatprep.subr.bf16.mxu0 0
    %2322 = vmatpush2.bf16.msra.mxu0 0
    %2323 = vmatprep.subr.bf16.mxu0 0
    %2324 = vmatpush2.bf16.msra.mxu0 0
    %2325 = vmatprep.subr.bf16.mxu0 0
    %2326 = vmatpush2.bf16.msra.mxu0 0
    %2327 = vmatprep.subr.bf16.mxu0 0
    %2328 = vmatpush2.bf16.msra.mxu0 0
    %2329 = vmatprep.subr.bf16.mxu0 0
    %2330 = vmatpush2.bf16.msra.mxu0 0
    %2331 = vmatprep.subr.bf16.mxu0 0
    %2332 = vmatpush2.bf16.msra.mxu0 0
    %2333 = vmatprep.subr.bf16.mxu0 0
    %2334 = vmatpush2.bf16.msra.mxu0 0
    %2335 = vmatprep.subr.bf16.mxu0 0
    %2336 = vmatpush2.bf16.msra.mxu0 0
    %2337 = vmatprep.mubr.bf16.mxu0 0
    %2338 = vmatmul.mubr.bf16.gmra.mxu0 %v2239
    %v2339 = vpop.f32.mrf.mxu0
    %v2340 = vadd.f32 0.0, %v2339
    %v2341 = vpop.f32.mrf.mxu0
    %v2342 = vpop.f32.mrf.mxu0
    %v2343 = vadd.f32 0.0, %v2342
    %v2344 = vpop.f32.mrf.mxu0
    %2345 = vdwg.mxu0
    %v2346 = vsub.f32 0.0, %v2340
    %v2347 = vsub.f32 0.0, %v2343
    %v2348 = vld [vmem:[%s7] sm:$0xff]
    %v2349 = vld [vmem:[%s7 + $0x8] sm:$0xff]
    %v2350 = vmul.f32 %v2348, 0.70710677
    %v2351 = vmul.f32 %v2349, 0.70710677
    %v2352 = vadd.f32 %v2350, %v2346
    %v2353 = vadd.f32 %v2351, %v2347
    %v2354 = vmul.f32 %v2352, 0.8164966
    %v2355 = vmul.f32 %v2353, 0.8164966
    %s2356 = scalar_lea.vmem %s7, 16
    %2357 = vst [vmem:[%s2356] sm:$0xff] %v2354
    %2358 = vst [vmem:[%s2356 + $0x8] sm:$0xff] %v2355
    %v2359 = vld [vmem:[%s1843] sm:$0xff]
    %v2360 = vld [vmem:[%s1843 + $0x8] sm:$0xff]
    %v2361 = vpack.c.bf16 %v2360, %v2359
    %s2362 = scalar_lea.vmem %s4, 320
    %v2363 = vld [vmem:[%s2362] sm:$0xf]
    %v2364 = vld [vmem:[%s2362 + $0x4] sm:$0xf]
    %v2365 = vld [vmem:[%s2362 + $0x8] sm:$0xf]
    %v2366 = vld [vmem:[%s2362 + $0xc] sm:$0xf]
    %v2367 = vld [vmem:[%s2362 + $0x10] sm:$0xf]
    %v2368 = vld [vmem:[%s2362 + $0x14] sm:$0xf]
    %v2369 = vld [vmem:[%s2362 + $0x18] sm:$0xf]
    %v2370 = vld [vmem:[%s2362 + $0x1c] sm:$0xf]
    %v2371 = vld [vmem:[%s2362 + $0x20] sm:$0xf]
    %v2372 = vld [vmem:[%s2362 + $0x24] sm:$0xf]
    %v2373 = vld [vmem:[%s2362 + $0x28] sm:$0xf]
    %v2374 = vld [vmem:[%s2362 + $0x2c] sm:$0xf]
    %v2375 = vld [vmem:[%s2362 + $0x30] sm:$0xf]
    %v2376 = vld [vmem:[%s2362 + $0x34] sm:$0xf]
    %v2377 = vld [vmem:[%s2362 + $0x38] sm:$0xf]
    %v2378 = vld [vmem:[%s2362 + $0x3c] sm:$0xf]
    %v2395 = vunpack.c.l.b16 %v2363
    %v2396 = vunpack.c.l.b16 %v2364
    %v2397 = vunpack.c.l.b16 %v2365
    %v2398 = vunpack.c.l.b16 %v2366
    %v2399 = vunpack.c.l.b16 %v2367
    %v2400 = vunpack.c.l.b16 %v2368
    %v2401 = vunpack.c.l.b16 %v2369
    %v2402 = vunpack.c.l.b16 %v2370
    %v2403 = vunpack.c.l.b16 %v2371
    %v2404 = vunpack.c.l.b16 %v2372
    %v2405 = vunpack.c.l.b16 %v2373
    %v2406 = vunpack.c.l.b16 %v2374
    %v2407 = vunpack.c.l.b16 %v2375
    %v2408 = vunpack.c.l.b16 %v2376
    %v2409 = vunpack.c.l.b16 %v2377
    %v2410 = vunpack.c.l.b16 %v2378
    %v2411 = vpack.c.b16 %v2396, %v2395
    %v2412 = vpack.c.b16 %v2398, %v2397
    %v2413 = vpack.c.b16 %v2400, %v2399
    %v2414 = vpack.c.b16 %v2402, %v2401
    %v2415 = vpack.c.b16 %v2404, %v2403
    %v2416 = vpack.c.b16 %v2406, %v2405
    %v2417 = vpack.c.b16 %v2408, %v2407
    %v2418 = vpack.c.b16 %v2410, %v2409
    %2427 = vmatprep.subr.bf16.mxu0 0
    %2428 = vmatpush1.bf16.msra.mxu0 %v2418
    %2429 = vmatprep.subr.bf16.mxu0 0
    %2430 = vmatpush1.bf16.msra.mxu0 %v2417
    %2431 = vmatprep.subr.bf16.mxu0 0
    %2432 = vmatpush1.bf16.msra.mxu0 %v2416
    %2433 = vmatprep.subr.bf16.mxu0 0
    %2434 = vmatpush1.bf16.msra.mxu0 %v2415
    %2435 = vmatprep.subr.bf16.mxu0 0
    %2436 = vmatpush1.bf16.msra.mxu0 %v2414
    %2437 = vmatprep.subr.bf16.mxu0 0
    %2438 = vmatpush1.bf16.msra.mxu0 %v2413
    %2439 = vmatprep.subr.bf16.mxu0 0
    %2440 = vmatpush1.bf16.msra.mxu0 %v2412
    %2441 = vmatprep.subr.bf16.mxu0 0
    %2442 = vmatpush1.bf16.msra.mxu0 %v2411
    %2443 = vmatprep.subr.bf16.mxu0 0
    %2444 = vmatpush2.bf16.msra.mxu0 0
    %2445 = vmatprep.subr.bf16.mxu0 0
    %2446 = vmatpush2.bf16.msra.mxu0 0
    %2447 = vmatprep.subr.bf16.mxu0 0
    %2448 = vmatpush2.bf16.msra.mxu0 0
    %2449 = vmatprep.subr.bf16.mxu0 0
    %2450 = vmatpush2.bf16.msra.mxu0 0
    %2451 = vmatprep.subr.bf16.mxu0 0
    %2452 = vmatpush2.bf16.msra.mxu0 0
    %2453 = vmatprep.subr.bf16.mxu0 0
    %2454 = vmatpush2.bf16.msra.mxu0 0
    %2455 = vmatprep.subr.bf16.mxu0 0
    %2456 = vmatpush2.bf16.msra.mxu0 0
    %2457 = vmatprep.subr.bf16.mxu0 0
    %2458 = vmatpush2.bf16.msra.mxu0 0
    %2459 = vmatprep.mubr.bf16.mxu0 0
    %2460 = vmatmul.mubr.bf16.gmra.mxu0 %v2361
    %v2461 = vpop.f32.mrf.mxu0
    %v2462 = vadd.f32 0.0, %v2461
    %v2463 = vpop.f32.mrf.mxu0
    %v2464 = vpop.f32.mrf.mxu0
    %v2465 = vadd.f32 0.0, %v2464
    %v2466 = vpop.f32.mrf.mxu0
    %2467 = vdwg.mxu0
    %v2468 = vsub.f32 0.0, %v2462
    %v2469 = vsub.f32 0.0, %v2465
    %v2470 = vld [vmem:[%s2356] sm:$0xff]
    %v2471 = vld [vmem:[%s2356 + $0x8] sm:$0xff]
    %v2472 = vmul.f32 %v2470, 0.8164966
    %v2473 = vmul.f32 %v2471, 0.8164966
    %v2474 = vadd.f32 %v2472, %v2468
    %v2475 = vadd.f32 %v2473, %v2469
    %v2476 = vmul.f32 %v2474, 0.8660254
    %v2477 = vmul.f32 %v2475, 0.8660254
    %s2478 = scalar_lea.vmem %s7, 32
    %2479 = vst [vmem:[%s2478] sm:$0xff] %v2476
    %2480 = vst [vmem:[%s2478 + $0x8] sm:$0xff] %v2477
    %v2481 = vld [vmem:[%s2034] sm:$0xff]
    %v2482 = vld [vmem:[%s2034 + $0x8] sm:$0xff]
    %v2483 = vpack.c.bf16 %v2482, %v2481
    %s2484 = scalar_lea.vmem %s4, 448
    %v2485 = vld [vmem:[%s2484] sm:$0xf]
    %v2486 = vld [vmem:[%s2484 + $0x4] sm:$0xf]
    %v2487 = vld [vmem:[%s2484 + $0x8] sm:$0xf]
    %v2488 = vld [vmem:[%s2484 + $0xc] sm:$0xf]
    %v2489 = vld [vmem:[%s2484 + $0x10] sm:$0xf]
    %v2490 = vld [vmem:[%s2484 + $0x14] sm:$0xf]
    %v2491 = vld [vmem:[%s2484 + $0x18] sm:$0xf]
    %v2492 = vld [vmem:[%s2484 + $0x1c] sm:$0xf]
    %v2493 = vld [vmem:[%s2484 + $0x20] sm:$0xf]
    %v2494 = vld [vmem:[%s2484 + $0x24] sm:$0xf]
    %v2495 = vld [vmem:[%s2484 + $0x28] sm:$0xf]
    %v2496 = vld [vmem:[%s2484 + $0x2c] sm:$0xf]
    %v2497 = vld [vmem:[%s2484 + $0x30] sm:$0xf]
    %v2498 = vld [vmem:[%s2484 + $0x34] sm:$0xf]
    %v2499 = vld [vmem:[%s2484 + $0x38] sm:$0xf]
    %v2500 = vld [vmem:[%s2484 + $0x3c] sm:$0xf]
    %v2517 = vunpack.c.l.b16 %v2485
    %v2518 = vunpack.c.l.b16 %v2486
    %v2519 = vunpack.c.l.b16 %v2487
    %v2520 = vunpack.c.l.b16 %v2488
    %v2521 = vunpack.c.l.b16 %v2489
    %v2522 = vunpack.c.l.b16 %v2490
    %v2523 = vunpack.c.l.b16 %v2491
    %v2524 = vunpack.c.l.b16 %v2492
    %v2525 = vunpack.c.l.b16 %v2493
    %v2526 = vunpack.c.l.b16 %v2494
    %v2527 = vunpack.c.l.b16 %v2495
    %v2528 = vunpack.c.l.b16 %v2496
    %v2529 = vunpack.c.l.b16 %v2497
    %v2530 = vunpack.c.l.b16 %v2498
    %v2531 = vunpack.c.l.b16 %v2499
    %v2532 = vunpack.c.l.b16 %v2500
    %v2533 = vpack.c.b16 %v2518, %v2517
    %v2534 = vpack.c.b16 %v2520, %v2519
    %v2535 = vpack.c.b16 %v2522, %v2521
    %v2536 = vpack.c.b16 %v2524, %v2523
    %v2537 = vpack.c.b16 %v2526, %v2525
    %v2538 = vpack.c.b16 %v2528, %v2527
    %v2539 = vpack.c.b16 %v2530, %v2529
    %v2540 = vpack.c.b16 %v2532, %v2531
    %2549 = vmatprep.subr.bf16.mxu0 0
    %2550 = vmatpush1.bf16.msra.mxu0 %v2540
    %2551 = vmatprep.subr.bf16.mxu0 0
    %2552 = vmatpush1.bf16.msra.mxu0 %v2539
    %2553 = vmatprep.subr.bf16.mxu0 0
    %2554 = vmatpush1.bf16.msra.mxu0 %v2538
    %2555 = vmatprep.subr.bf16.mxu0 0
    %2556 = vmatpush1.bf16.msra.mxu0 %v2537
    %2557 = vmatprep.subr.bf16.mxu0 0
    %2558 = vmatpush1.bf16.msra.mxu0 %v2536
    %2559 = vmatprep.subr.bf16.mxu0 0
    %2560 = vmatpush1.bf16.msra.mxu0 %v2535
    %2561 = vmatprep.subr.bf16.mxu0 0
    %2562 = vmatpush1.bf16.msra.mxu0 %v2534
    %2563 = vmatprep.subr.bf16.mxu0 0
    %2564 = vmatpush1.bf16.msra.mxu0 %v2533
    %2565 = vmatprep.subr.bf16.mxu0 0
    %2566 = vmatpush2.bf16.msra.mxu0 0
    %2567 = vmatprep.subr.bf16.mxu0 0
    %2568 = vmatpush2.bf16.msra.mxu0 0
    %2569 = vmatprep.subr.bf16.mxu0 0
    %2570 = vmatpush2.bf16.msra.mxu0 0
    %2571 = vmatprep.subr.bf16.mxu0 0
    %2572 = vmatpush2.bf16.msra.mxu0 0
    %2573 = vmatprep.subr.bf16.mxu0 0
    %2574 = vmatpush2.bf16.msra.mxu0 0
    %2575 = vmatprep.subr.bf16.mxu0 0
    %2576 = vmatpush2.bf16.msra.mxu0 0
    %2577 = vmatprep.subr.bf16.mxu0 0
    %2578 = vmatpush2.bf16.msra.mxu0 0
    %2579 = vmatprep.subr.bf16.mxu0 0
    %2580 = vmatpush2.bf16.msra.mxu0 0
    %2581 = vmatprep.mubr.bf16.mxu0 0
    %2582 = vmatmul.mubr.bf16.gmra.mxu0 %v2483
    %v2583 = vpop.f32.mrf.mxu0
    %v2584 = vadd.f32 0.0, %v2583
    %v2585 = vpop.f32.mrf.mxu0
    %v2586 = vpop.f32.mrf.mxu0
    %v2587 = vadd.f32 0.0, %v2586
    %v2588 = vpop.f32.mrf.mxu0
    %2589 = vdwg.mxu0
    %v2590 = vsub.f32 0.0, %v2584
    %v2591 = vsub.f32 0.0, %v2587
    %v2592 = vld [vmem:[%s2] sm:$0xff]
    %v2593 = vld [vmem:[%s2 + $0x8] sm:$0xff]
    %v2594 = vadd.f32 %v2590, %v2592
    %v2595 = vadd.f32 %v2591, %v2593
    %v2596 = vld [vmem:[%s2478] sm:$0xff]
    %v2597 = vld [vmem:[%s2478 + $0x8] sm:$0xff]
    %v2598 = vmul.f32 %v2596, 0.8660254
    %v2599 = vmul.f32 %v2597, 0.8660254
    %v2600 = vadd.f32 %v2598, %v2594
    %v2601 = vadd.f32 %v2599, %v2595
    %v2602 = vmul.f32 %v2600, 0.8944272
    %v2603 = vmul.f32 %v2601, 0.8944272
    %s2604 = scalar_lea.vmem %s7, 48
    %2605 = vst [vmem:[%s2604] sm:$0xff] %v2602
    %2606 = vst [vmem:[%s2604 + $0x8] sm:$0xff] %v2603
    %v2607 = vld [vmem:[%s2604] sm:$0xff]
    %v2608 = vld [vmem:[%s2604 + $0x8] sm:$0xff]
    %v2609 = vmul.f32 %v2607, 0.8944272
    %v2610 = vmul.f32 %v2608, 0.8944272
    %2611 = vst [vmem:[%s2604] sm:$0xff] %v2609
    %2612 = vst [vmem:[%s2604 + $0x8] sm:$0xff] %v2610
    %v2613 = vld [vmem:[%s2604] sm:$0xff]
    %v2614 = vld [vmem:[%s2604 + $0x8] sm:$0xff]
    %v2615 = vmul.f32 %v2613, 0.8660254
    %v2616 = vmul.f32 %v2614, 0.8660254
    %v2617 = vld [vmem:[%s2478] sm:$0xff]
    %v2618 = vld [vmem:[%s2478 + $0x8] sm:$0xff]
    %v2619 = vadd.f32 %v2615, %v2617
    %v2620 = vadd.f32 %v2616, %v2618
    %v2621 = vmul.f32 %v2619, 0.8660254
    %v2622 = vmul.f32 %v2620, 0.8660254
    %2623 = vst [vmem:[%s2478] sm:$0xff] %v2621
    %2624 = vst [vmem:[%s2478 + $0x8] sm:$0xff] %v2622
    %v2625 = vld [vmem:[%s2478] sm:$0xff]
    %v2626 = vld [vmem:[%s2478 + $0x8] sm:$0xff]
    %v2627 = vmul.f32 %v2625, 0.8164966
    %v2628 = vmul.f32 %v2626, 0.8164966
    %v2629 = vld [vmem:[%s2356] sm:$0xff]
    %v2630 = vld [vmem:[%s2356 + $0x8] sm:$0xff]
    %v2631 = vadd.f32 %v2627, %v2629
    %v2632 = vadd.f32 %v2628, %v2630
    %v2633 = vmul.f32 %v2631, 0.8164966
    %v2634 = vmul.f32 %v2632, 0.8164966
    %2635 = vst [vmem:[%s2356] sm:$0xff] %v2633
    %2636 = vst [vmem:[%s2356 + $0x8] sm:$0xff] %v2634
    %v2637 = vld [vmem:[%s2356] sm:$0xff]
    %v2638 = vld [vmem:[%s2356 + $0x8] sm:$0xff]
    %v2639 = vmul.f32 %v2637, 0.70710677
    %v2640 = vmul.f32 %v2638, 0.70710677
    %v2641 = vld [vmem:[%s7] sm:$0xff]
    %v2642 = vld [vmem:[%s7 + $0x8] sm:$0xff]
    %v2643 = vadd.f32 %v2639, %v2641
    %v2644 = vadd.f32 %v2640, %v2642
    %v2645 = vmul.f32 %v2643, 0.70710677
    %v2646 = vmul.f32 %v2644, 0.70710677
    %2647 = vst [vmem:[%s7] sm:$0xff] %v2645
    %2648 = vst [vmem:[%s7 + $0x8] sm:$0xff] %v2646
  $region37: #{graph_least_action_net_forward.2} parent=0 // pred_fallthru
    _
  // Predicated region
  $region38: #{graph_least_action_net_forward.2} parent=0 // pred_check
    _
  $region39: #{graph_least_action_net_forward.2} parent=0 // pred_check_branch
    %2650 = sbr.rel (0) target = $region41
  $region40: #{graph_least_action_net_forward.2} parent=0 // pred_region
    _
  $region41: #{graph_least_action_net_forward.2} parent=0 // pred_fallthru
    _
  // Predicated region
  $region42: #{graph_least_action_net_forward.2} parent=0 // pred_check
    _
  $region43: #{graph_least_action_net_forward.2} parent=0 // pred_check_branch
    %2652 = sbr.rel (0) target = $region45
  $region44: #{graph_least_action_net_forward.2} parent=0 // pred_region
    _
  $region45: #{graph_least_action_net_forward.2} parent=0 // pred_fallthru
    _

</llo_original>
